<compile_context>
chip_gen: v5e
topology: v5e:2x2
jax: 0.10.0
libtpu: 0.0.40
codegen_flags: <defaults>
</compile_context>

<pallas_src>
import jax
import jax.numpy as jnp
from jax.experimental import pallas as pl
from jax.experimental.pallas import tpu as pltpu

EPS = 1e-5
LANE = 128


def _round_up(x, m):
    return (x + m - 1) // m * m


def _predictor_kernel(x_ref, w1_ref, shift_ref, w2_ref, b2_ref, o_ref):
    # x_ref:     (TM, K)        bf16 im2col rows (K = 9*Cin), batch fused into M
    # w1_ref:    (K, Cmid)      bf16 3x3-conv weights with BN scale folded in
    # shift_ref: (1, Cmid)      f32  folded BN shift  (beta - mean*scale)
    # w2_ref:    (Cmid, CoutP)  f32  1x1-conv weights, zero-padded to 128 lanes
    # b2_ref:    (1, CoutP)     f32  1x1-conv bias, zero-padded
    # o_ref:     (TM, CoutP)    f32  lane-dense output slab
    h = jnp.dot(x_ref[...], w1_ref[...], preferred_element_type=jnp.float32)
    h = jnp.maximum(h + shift_ref[...], 0.0)          # BN shift + ReLU (scale folded into w1)
    o_ref[...] = jnp.dot(h, w2_ref[...], preferred_element_type=jnp.float32) + b2_ref[...]


def predictor_forward(x_nchw, params):
    """x_nchw: (N, Cin, H, W) float32 -> (N, Cout, H, W) float32."""
    w1, gamma, beta, r_mean, r_var, w2, b2 = (
        params["w1"], params["gamma"], params["beta"],
        params["running_mean"], params["running_var"],
        params["w2"], params["b2"],
    )
    N, Cin, H, W = x_nchw.shape
    Cmid = w1.shape[0]
    Cout = w2.shape[0]
    K = 9 * Cin
    M = N * H * W
    Cout_p = _round_up(Cout, LANE)                     # lane-dense output width

    # ---- glue (plain JAX): layout, im2col, parameter folding ----
    x_nhwc = jnp.transpose(x_nchw, (0, 2, 3, 1))                   # NCHW -> NHWC
    x_pad = jnp.pad(x_nhwc, ((0, 0), (1, 1), (1, 1), (0, 0)))      # SAME pad for the 3x3
    # im2col, tap-major then Cin (must match w1 row layout below)
    taps = [x_pad[:, kh:kh + H, kw:kw + W, :] for kh in range(3) for kw in range(3)]
    x_im2col = jnp.concatenate(taps, axis=-1).reshape(M, K)

    # batch fused into M; tile M in big chunks (256 rows fills a v6e/v7x MXU)
    if M >= 256:
        TM = 256
    else:
        TM = max(8, _round_up(M, 8))                   # single tile for tiny M
    M_p = _round_up(M, TM)
    if M_p != M:
        x_im2col = jnp.pad(x_im2col, ((0, M_p - M), (0, 0)))
    x_im2col = x_im2col.astype(jnp.bfloat16)           # halve activation DMA; f32 accumulate

    # w1: OIHW -> (kh, kw, Cin, Cmid) -> (9*Cin, Cmid); fold BN scale (exact: conv1 has no bias)
    scale = gamma / jnp.sqrt(r_var + EPS)                                       # (Cmid,)
    shift = (beta - r_mean * scale).reshape(1, Cmid).astype(jnp.float32)
    w1_k = jnp.transpose(w1, (2, 3, 1, 0)).reshape(K, Cmid)
    w1_k = (w1_k * scale[None, :]).astype(jnp.bfloat16)                         # bf16 weights

    # 1x1 conv as (Cmid, Cout) matmul; zero-pad Cout to a lane-dense 128 multiple
    w2_k = jnp.transpose(w2.reshape(Cout, Cmid), (1, 0)).astype(jnp.float32)
    w2_k = jnp.pad(w2_k, ((0, 0), (0, Cout_p - Cout)))
    b2_k = jnp.pad(b2.reshape(1, Cout).astype(jnp.float32), ((0, 0), (0, Cout_p - Cout)))

    # NOTE: the weight operands have constant index maps; at these sizes the extra
    # pipeline buffer is negligible (grid is 1 for the test shapes). If Cmid/spatial
    # dims scale up, add pipeline_mode=pl.Buffered(1) on the weight BlockSpecs.
    out_slab = pl.pallas_call(
        _predictor_kernel,
        out_shape=jax.ShapeDtypeStruct((M_p, Cout_p), jnp.float32),
        grid_spec=pltpu.PrefetchScalarGridSpec(
            num_scalar_prefetch=0,
            grid=(M_p // TM,),
            in_specs=[
                pl.BlockSpec((TM, K), lambda i: (i, 0)),          # im2col rows (tiled M)
                pl.BlockSpec((K, Cmid), lambda i: (0, 0)),        # folded conv1 weights
                pl.BlockSpec((1, Cmid), lambda i: (0, 0)),        # BN shift
                pl.BlockSpec((Cmid, Cout_p), lambda i: (0, 0)),   # conv2 weights (lane-padded)
                pl.BlockSpec((1, Cout_p), lambda i: (0, 0)),      # conv2 bias (lane-padded)
            ],
            out_specs=pl.BlockSpec((TM, Cout_p), lambda i: (i, 0)),
        ),
        compiler_params=pltpu.CompilerParams(
            dimension_semantics=("parallel",),
            vmem_limit_bytes=32 * 1024 * 1024,
        ),
    )(x_im2col, w1_k, shift, w2_k, b2_k)

    out_nhwc = out_slab[:M, :Cout].reshape(N, H, W, Cout)
    return jnp.transpose(out_nhwc, (0, 3, 1, 2))       # NHWC -> NCHW


def predictor_reference(x_nchw, params):
    """Pure-JAX f32 reference (lax conv) for correctness checking."""
    w1, gamma, beta, r_mean, r_var, w2, b2 = (
        params["w1"], params["gamma"], params["beta"],
        params["running_mean"], params["running_var"],
        params["w2"], params["b2"],
    )
    dn = ("NCHW", "OIHW", "NCHW")
    y = jax.lax.conv_general_dilated(x_nchw, w1, (1, 1), "SAME", dimension_numbers=dn)
    y = (y - r_mean[None, :, None, None]) / jnp.sqrt(r_var[None, :, None, None] + EPS)
    y = y * gamma[None, :, None, None] + beta[None, :, None, None]
    y = jnp.maximum(y, 0.0)
    y = jax.lax.conv_general_dilated(y, w2, (1, 1), "VALID", dimension_numbers=dn)
    y = y + b2[None, :, None, None]
    return y


def init_params(key, in_feat, out_feat, mid=256):
    ks = jax.random.split(key, 6)
    # deterministic synthetic init (kaiming-ish scale); not a checkpoint load
    w1 = jax.random.normal(ks[0], (mid, in_feat, 3, 3), jnp.float32) * (2.0 / (in_feat * 9)) ** 0.5
    gamma = 1.0 + 0.1 * jax.random.normal(ks[1], (mid,), jnp.float32)
    beta = 0.1 * jax.random.normal(ks[2], (mid,), jnp.float32)
    running_mean = 0.1 * jax.random.normal(ks[3], (mid,), jnp.float32)
    running_var = 0.5 + jax.random.uniform(ks[4], (mid,), jnp.float32)
    w2 = jax.random.normal(ks[5], (out_feat, mid, 1, 1), jnp.float32) * (1.0 / mid) ** 0.5
    b2 = jnp.linspace(-0.1, 0.1, out_feat, dtype=jnp.float32)
    return {
        "w1": w1, "gamma": gamma, "beta": beta,
        "running_mean": running_mean, "running_var": running_var,
        "w2": w2, "b2": b2,
    }


if __name__ == "__main__":
    # small shapes consistent with Predictor(in_feat=304, out_feat=21)
    N, Cin, H, W = 2, 304, 8, 8
    Cout = 21

    key = jax.random.PRNGKey(0)
    k_x, k_p = jax.random.split(key)
    x = jax.random.normal(k_x, (N, Cin, H, W), jnp.float32)   # PyTorch-style NCHW input
    params = init_params(k_p, Cin, Cout)

    out = jax.block_until_ready(predictor_forward(x, params))
    ref = jax.block_until_ready(predictor_reference(x, params))

    assert out.shape == (N, Cout, H, W), out.shape
    # tolerance reflects bf16 conv1 operands (K = 9*304 accumulation in f32);
    # measured error is well below this bound vs the pure-f32 lax reference.
    err = float(jnp.max(jnp.abs(out - ref)))
    assert jnp.allclose(out, ref, atol=3e-2, rtol=3e-2), err

    print("KERNEL_OK")
</pallas_src>

<mosaic_0001>
module attributes {stable_mosaic.version = 11 : i64} {
  func.func @_predictor_kernel(%arg0: i32, %arg1: memref<128x2736xbf16, #tpu.memory_space<vmem>>, %arg2: memref<2736x256xbf16, #tpu.memory_space<vmem>>, %arg3: memref<1x256xf32, #tpu.memory_space<vmem>>, %arg4: memref<256x128xf32, #tpu.memory_space<vmem>>, %arg5: memref<1x128xf32, #tpu.memory_space<vmem>>, %arg6: memref<128x128xf32, #tpu.memory_space<vmem>>) attributes {dimension_semantics = [#tpu.dimension_semantics<parallel>], iteration_bounds = array<i64: 1>, scalar_prefetch = 0 : i64, scratch_operands = 0 : i64, tpu.core_type = #tpu.core_type<tc>, window_params = [{transform_indices = @transform_0, window_bounds = array<i64: 128, 2736>}, {pipeline_mode = #tpu.pipeline_mode<synchronous>, transform_indices = @transform_1, window_bounds = array<i64: 2736, 256>}, {pipeline_mode = #tpu.pipeline_mode<synchronous>, transform_indices = @transform_2, window_bounds = array<i64: 1, 256>}, {pipeline_mode = #tpu.pipeline_mode<synchronous>, transform_indices = @transform_3, window_bounds = array<i64: 256, 128>}, {pipeline_mode = #tpu.pipeline_mode<synchronous>, transform_indices = @transform_4, window_bounds = array<i64: 1, 128>}, {transform_indices = @transform_5, window_bounds = array<i64: 128, 128>}]} {
    %c0 = arith.constant 0 : index
    %c0_0 = arith.constant 0 : index
    %0 = vector.load %arg1[%c0, %c0_0] : memref<128x2736xbf16, #tpu.memory_space<vmem>>, vector<128x2736xbf16>
    %c0_1 = arith.constant 0 : index
    %c0_2 = arith.constant 0 : index
    %1 = vector.load %arg2[%c0_1, %c0_2] : memref<2736x256xbf16, #tpu.memory_space<vmem>>, vector<2736x256xbf16>
    %cst = arith.constant dense<0.000000e+00> : vector<128x256xf32>
    %2 = tpu.matmul %0, %1, %cst {dimension_numbers = #tpu.dot_dimension_numbers<[1], [0], [0], [1], [0, 0, 1, 1], [], []>} : vector<128x2736xbf16>, vector<2736x256xbf16>, vector<128x256xf32> -> vector<128x256xf32>
    %c0_3 = arith.constant 0 : index
    %c0_4 = arith.constant 0 : index
    %3 = vector.load %arg3[%c0_3, %c0_4] : memref<1x256xf32, #tpu.memory_space<vmem>>, vector<1x256xf32>
    %4 = vector.broadcast %3 : vector<1x256xf32> to vector<128x256xf32>
    %5 = arith.addf %2, %4 : vector<128x256xf32>
    %cst_5 = arith.constant 0.000000e+00 : f32
    %6 = vector.broadcast %cst_5 : f32 to vector<128x256xf32>
    %7 = arith.maximumf %5, %6 : vector<128x256xf32>
    %c0_6 = arith.constant 0 : index
    %c0_7 = arith.constant 0 : index
    %8 = vector.load %arg4[%c0_6, %c0_7] : memref<256x128xf32, #tpu.memory_space<vmem>>, vector<256x128xf32>
    %cst_8 = arith.constant dense<0.000000e+00> : vector<128x128xf32>
    %9 = tpu.matmul %7, %8, %cst_8 {dimension_numbers = #tpu.dot_dimension_numbers<[1], [0], [0], [1], [0, 0, 1, 1], [], []>} : vector<128x256xf32>, vector<256x128xf32>, vector<128x128xf32> -> vector<128x128xf32>
    %c0_9 = arith.constant 0 : index
    %c0_10 = arith.constant 0 : index
    %10 = vector.load %arg5[%c0_9, %c0_10] : memref<1x128xf32, #tpu.memory_space<vmem>>, vector<1x128xf32>
    %11 = vector.broadcast %10 : vector<1x128xf32> to vector<128x128xf32>
    %12 = arith.addf %9, %11 : vector<128x128xf32>
    %c0_11 = arith.constant 0 : index
    %c0_12 = arith.constant 0 : index
    %13 = vector.load %arg6[%c0_11, %c0_12] : memref<128x128xf32, #tpu.memory_space<vmem>>, vector<128x128xf32>
    tpu.vector_store %arg6[%c0_11, %c0_12], %12 {strides = array<i32>} : memref<128x128xf32, #tpu.memory_space<vmem>>, vector<128x128xf32>,
    return
  }
  func.func @transform_0(%arg0: i32) -> (i32, i32) {
    %c0_i32 = arith.constant 0 : i32
    %c0_i32_0 = arith.constant 0 : i32
    return %arg0, %c0_i32 : i32, i32
  }
  func.func @transform_1(%arg0: i32) -> (i32, i32) {
    %c0_i32 = arith.constant 0 : i32
    %c0_i32_0 = arith.constant 0 : i32
    %c0_i32_1 = arith.constant 0 : i32
    return %c0_i32, %c0_i32_0 : i32, i32
  }
  func.func @transform_2(%arg0: i32) -> (i32, i32) {
    %c0_i32 = arith.constant 0 : i32
    %c0_i32_0 = arith.constant 0 : i32
    %c0_i32_1 = arith.constant 0 : i32
    return %c0_i32, %c0_i32_0 : i32, i32
  }
  func.func @transform_3(%arg0: i32) -> (i32, i32) {
    %c0_i32 = arith.constant 0 : i32
    %c0_i32_0 = arith.constant 0 : i32
    %c0_i32_1 = arith.constant 0 : i32
    return %c0_i32, %c0_i32_0 : i32, i32
  }
  func.func @transform_4(%arg0: i32) -> (i32, i32) {
    %c0_i32 = arith.constant 0 : i32
    %c0_i32_0 = arith.constant 0 : i32
    %c0_i32_1 = arith.constant 0 : i32
    return %c0_i32, %c0_i32_0 : i32, i32
  }
  func.func @transform_5(%arg0: i32) -> (i32, i32) {
    %c0_i32 = arith.constant 0 : i32
    %c0_i32_0 = arith.constant 0 : i32
    return %arg0, %c0_i32 : i32, i32
  }
}

</mosaic_0001>

<llo_original>
// kernel: tpu_custom_call.1
$region0: #{tpu_custom_call.1}
  #allocation0 [shape = 'u32[]', space=smem, size = 0x4, offset = 0x4, fixed_abs, tag = 'smem constant byte address 0x4 - core index']
  #allocation1 [shape = 'u32[72,128]{1,0:T(1,128)}', space=vmem, size = 0x9000, scoped, tag = 'internal scratch']
  %s0 = inlined_call_operand.vmem [shape: bf16[128,2736], index: 0, kind: input, shape index: {}]
  %s1 = inlined_call_operand.vmem [shape: bf16[2736,256], index: 1, kind: input, shape index: {}]
  %s2 = inlined_call_operand.vmem [shape: f32[1,256], index: 2, kind: input, shape index: {}]
  %s3 = inlined_call_operand.hbm [shape: f32[256,128], index: 3, kind: input, shape index: {}]
  %s4 = inlined_call_operand.vmem [shape: f32[1,128], index: 4, kind: input, shape index: {}]
  %s5 = inlined_call_operand.hbm [shape: f32[128,128], index: 5, kind: output, shape index: {}]
  %s6 = sld [smem:[#allocation0]]
  $region34: #{tpu_custom_call.1} parent=0
    _
  %s8 = ssub.s32 1, %s6
  %s9 = scalar_select 0, %s8, %s6
  $region1: #{tpu_custom_call.1} parent=0
    #allocation2 [shape = 'u8[131072]{0}', space=vmem, size = 0x20000, scoped, tag = 'input window, operand 3, single buffered']
    #allocation3 [shape = 's32[1]{0}', space=sflag, size = 0x4, scoped, tag = 'scoped memory for tpu_custom_call.1']
    #allocation4 [shape = 's32[1]{0}', space=sflag, size = 0x4, scoped, tag = 'scoped memory for tpu_custom_call.1']
    #allocation5 [shape = 'u8[65536]{0}', space=vmem, size = 0x10000, scoped, tag = 'output window, operand 0, single buffered']
    %10 = vsyncpa [#allocation3], 0
    %11 = vsyncpa [#allocation4], 0
    // Predicated region
    $region2: #{tpu_custom_call.1} parent=1 // pred_check
      _
    $region3: #{tpu_custom_call.1} parent=1 // pred_check_branch
      %13 = sbr.rel (0) target = $region5
    $region4: #{tpu_custom_call.1} parent=1 // pred_region
      _
    $region5: #{tpu_custom_call.1} parent=1 // pred_fallthru
      _
    // Predicated region
    $region6: #{tpu_custom_call.1} parent=1 // pred_check
      _
    $region7: #{tpu_custom_call.1} parent=1 // pred_check_branch
      %15 = sbr.rel (0) target = $region9
    $region8: #{tpu_custom_call.1} parent=1 // pred_region
      _
    $region9: #{tpu_custom_call.1} parent=1 // pred_fallthru
      _
    // Predicated region
    $region10: #{tpu_custom_call.1} parent=1 // pred_check
      _
    $region11: #{tpu_custom_call.1} parent=1 // pred_check_branch
      %17 = sbr.rel (0) target = $region13
    $region12: #{tpu_custom_call.1} parent=1 // pred_region
      _
    $region13: #{tpu_custom_call.1} parent=1 // pred_fallthru
      _
    // Predicated region
    $region14: #{tpu_custom_call.1} parent=1 // pred_check
      _
    $region15: #{tpu_custom_call.1} parent=1 // pred_check_branch
      %19 = sbr.rel (0) target = $region17
    $region16: #{tpu_custom_call.1} parent=1 // pred_region
      %21 = vsyncadd [#allocation3], 0
      %s22 = sshll.u32 %s3, 4
      %s23 = int_to_ptr.hbm [resolvable:$true] %s22
      %s24 = sshll.u32 [#allocation2], 4
      %s25 = int_to_ptr.vmem [resolvable:$true] %s24
      %30 = dma.hbm_to_vmem [thread:$0]  %s23, 4096, %s25, [#allocation3], 128, 128, 8
    $region17: #{tpu_custom_call.1} parent=1 // pred_fallthru
      _
    // Predicated region
    $region18: #{tpu_custom_call.1} parent=1 // pred_check
      _
    $region19: #{tpu_custom_call.1} parent=1 // pred_check_branch
      %32 = sbr.rel (0) target = $region21
    $region20: #{tpu_custom_call.1} parent=1 // pred_region
      _
    $region21: #{tpu_custom_call.1} parent=1 // pred_fallthru
      _
    // Predicated region
    $region22: #{tpu_custom_call.1} parent=1 // pred_check
      _
    $region23: #{tpu_custom_call.1} parent=1 // pred_check_branch
      %34 = sbr.rel (0) target = $region25
    $region24: #{tpu_custom_call.1} parent=1 // pred_region
      %36 = dma.done [#allocation3], 4096
    $region25: #{tpu_custom_call.1} parent=1 // pred_fallthru
      _
    %v38 = vld [vmem:[%s0] sm:$0xff]
    %v39 = vld [vmem:[%s0 + $0x8] sm:$0xff]
    %v40 = vld [vmem:[%s0 + $0x10] sm:$0xff]
    %v41 = vld [vmem:[%s0 + $0x18] sm:$0xff]
    %v42 = vld [vmem:[%s0 + $0x20] sm:$0xff]
    %v43 = vld [vmem:[%s0 + $0x28] sm:$0xff]
    %v44 = vld [vmem:[%s0 + $0x30] sm:$0xff]
    %v45 = vld [vmem:[%s0 + $0x38] sm:$0xff]
    %v46 = vld [vmem:[%s0 + $0x40] sm:$0xff]
    %v47 = vld [vmem:[%s0 + $0x48] sm:$0xff]
    %v48 = vld [vmem:[%s0 + $0x50] sm:$0xff]
    %v49 = vld [vmem:[%s0 + $0x58] sm:$0xff]
    %v50 = vld [vmem:[%s0 + $0x60] sm:$0xff]
    %v51 = vld [vmem:[%s0 + $0x68] sm:$0xff]
    %v52 = vld [vmem:[%s0 + $0x70] sm:$0xff]
    %v53 = vld [vmem:[%s0 + $0x78] sm:$0xff]
    %v54 = vld [vmem:[%s0 + $0x80] sm:$0xff]
    %v55 = vld [vmem:[%s0 + $0x88] sm:$0xff]
    %v56 = vld [vmem:[%s0 + $0x90] sm:$0xff]
    %v57 = vld [vmem:[%s0 + $0x98] sm:$0xff]
    %v58 = vld [vmem:[%s0 + $0xa0] sm:$0xff]
    %v59 = vld [vmem:[%s0 + $0xa8] sm:$0xff]
    %v60 = vld [vmem:[%s0 + $0xb0] sm:$0xff]
    %v61 = vld [vmem:[%s0 + $0xb8] sm:$0xff]
    %v62 = vld [vmem:[%s0 + $0xc0] sm:$0xff]
    %v63 = vld [vmem:[%s0 + $0xc8] sm:$0xff]
    %v64 = vld [vmem:[%s0 + $0xd0] sm:$0xff]
    %v65 = vld [vmem:[%s0 + $0xd8] sm:$0xff]
    %v66 = vld [vmem:[%s0 + $0xe0] sm:$0xff]
    %v67 = vld [vmem:[%s0 + $0xe8] sm:$0xff]
    %v68 = vld [vmem:[%s0 + $0xf0] sm:$0xff]
    %v69 = vld [vmem:[%s0 + $0xf8] sm:$0xff]
    %v70 = vld [vmem:[%s0 + $0x100] sm:$0xff]
    %v71 = vld [vmem:[%s0 + $0x108] sm:$0xff]
    %v72 = vld [vmem:[%s0 + $0x110] sm:$0xff]
    %v73 = vld [vmem:[%s0 + $0x118] sm:$0xff]
    %v74 = vld [vmem:[%s0 + $0x120] sm:$0xff]
    %v75 = vld [vmem:[%s0 + $0x128] sm:$0xff]
    %v76 = vld [vmem:[%s0 + $0x130] sm:$0xff]
    %v77 = vld [vmem:[%s0 + $0x138] sm:$0xff]
    %v78 = vld [vmem:[%s0 + $0x140] sm:$0xff]
    %v79 = vld [vmem:[%s0 + $0x148] sm:$0xff]
    %v80 = vld [vmem:[%s0 + $0x150] sm:$0xff]
    %v81 = vld [vmem:[%s0 + $0x158] sm:$0xff]
    %v82 = vld [vmem:[%s0 + $0x160] sm:$0xff]
    %v83 = vld [vmem:[%s0 + $0x168] sm:$0xff]
    %v84 = vld [vmem:[%s0 + $0x170] sm:$0xff]
    %v85 = vld [vmem:[%s0 + $0x178] sm:$0xff]
    %v86 = vld [vmem:[%s0 + $0x180] sm:$0xff]
    %v87 = vld [vmem:[%s0 + $0x188] sm:$0xff]
    %v88 = vld [vmem:[%s0 + $0x190] sm:$0xff]
    %v89 = vld [vmem:[%s0 + $0x198] sm:$0xff]
    %v90 = vld [vmem:[%s0 + $0x1a0] sm:$0xff]
    %v91 = vld [vmem:[%s0 + $0x1a8] sm:$0xff]
    %v92 = vld [vmem:[%s0 + $0x1b0] sm:$0xff]
    %v93 = vld [vmem:[%s0 + $0x1b8] sm:$0xff]
    %v94 = vld [vmem:[%s0 + $0x1c0] sm:$0xff]
    %v95 = vld [vmem:[%s0 + $0x1c8] sm:$0xff]
    %v96 = vld [vmem:[%s0 + $0x1d0] sm:$0xff]
    %v97 = vld [vmem:[%s0 + $0x1d8] sm:$0xff]
    %v98 = vld [vmem:[%s0 + $0x1e0] sm:$0xff]
    %v99 = vld [vmem:[%s0 + $0x1e8] sm:$0xff]
    %v100 = vld [vmem:[%s0 + $0x1f0] sm:$0xff]
    %v101 = vld [vmem:[%s0 + $0x1f8] sm:$0xff]
    %v102 = vld [vmem:[%s0 + $0x200] sm:$0xff]
    %v103 = vld [vmem:[%s0 + $0x208] sm:$0xff]
    %v104 = vld [vmem:[%s0 + $0x210] sm:$0xff]
    %v105 = vld [vmem:[%s0 + $0x218] sm:$0xff]
    %v106 = vld [vmem:[%s0 + $0x220] sm:$0xff]
    %v107 = vld [vmem:[%s0 + $0x228] sm:$0xff]
    %v108 = vld [vmem:[%s0 + $0x230] sm:$0xff]
    %v109 = vld [vmem:[%s0 + $0x238] sm:$0xff]
    %v110 = vld [vmem:[%s0 + $0x240] sm:$0xff]
    %v111 = vld [vmem:[%s0 + $0x248] sm:$0xff]
    %v112 = vld [vmem:[%s0 + $0x250] sm:$0xff]
    %v113 = vld [vmem:[%s0 + $0x258] sm:$0xff]
    %v114 = vld [vmem:[%s0 + $0x260] sm:$0xff]
    %v115 = vld [vmem:[%s0 + $0x268] sm:$0xff]
    %v116 = vld [vmem:[%s0 + $0x270] sm:$0xff]
    %v117 = vld [vmem:[%s0 + $0x278] sm:$0xff]
    %v118 = vld [vmem:[%s0 + $0x280] sm:$0xff]
    %v119 = vld [vmem:[%s0 + $0x288] sm:$0xff]
    %v120 = vld [vmem:[%s0 + $0x290] sm:$0xff]
    %v121 = vld [vmem:[%s0 + $0x298] sm:$0xff]
    %v122 = vld [vmem:[%s0 + $0x2a0] sm:$0xff]
    %v123 = vld [vmem:[%s0 + $0x2a8] sm:$0xff]
    %v124 = vld [vmem:[%s0 + $0x2b0] sm:$0xff]
    %v125 = vld [vmem:[%s0 + $0x2b8] sm:$0xff]
    %v126 = vld [vmem:[%s0 + $0x2c0] sm:$0xff]
    %v127 = vld [vmem:[%s0 + $0x2c8] sm:$0xff]
    %v128 = vld [vmem:[%s0 + $0x2d0] sm:$0xff]
    %v129 = vld [vmem:[%s0 + $0x2d8] sm:$0xff]
    %v130 = vld [vmem:[%s0 + $0x2e0] sm:$0xff]
    %v131 = vld [vmem:[%s0 + $0x2e8] sm:$0xff]
    %v132 = vld [vmem:[%s0 + $0x2f0] sm:$0xff]
    %v133 = vld [vmem:[%s0 + $0x2f8] sm:$0xff]
    %v134 = vld [vmem:[%s0 + $0x300] sm:$0xff]
    %v135 = vld [vmem:[%s0 + $0x308] sm:$0xff]
    %v136 = vld [vmem:[%s0 + $0x310] sm:$0xff]
    %v137 = vld [vmem:[%s0 + $0x318] sm:$0xff]
    %v138 = vld [vmem:[%s0 + $0x320] sm:$0xff]
    %v139 = vld [vmem:[%s0 + $0x328] sm:$0xff]
    %v140 = vld [vmem:[%s0 + $0x330] sm:$0xff]
    %v141 = vld [vmem:[%s0 + $0x338] sm:$0xff]
    %v142 = vld [vmem:[%s0 + $0x340] sm:$0xff]
    %v143 = vld [vmem:[%s0 + $0x348] sm:$0xff]
    %v144 = vld [vmem:[%s0 + $0x350] sm:$0xff]
    %v145 = vld [vmem:[%s0 + $0x358] sm:$0xff]
    %v146 = vld [vmem:[%s0 + $0x360] sm:$0xff]
    %v147 = vld [vmem:[%s0 + $0x368] sm:$0xff]
    %v148 = vld [vmem:[%s0 + $0x370] sm:$0xff]
    %v149 = vld [vmem:[%s0 + $0x378] sm:$0xff]
    %v150 = vld [vmem:[%s0 + $0x380] sm:$0xff]
    %v151 = vld [vmem:[%s0 + $0x388] sm:$0xff]
    %v152 = vld [vmem:[%s0 + $0x390] sm:$0xff]
    %v153 = vld [vmem:[%s0 + $0x398] sm:$0xff]
    %v154 = vld [vmem:[%s0 + $0x3a0] sm:$0xff]
    %v155 = vld [vmem:[%s0 + $0x3a8] sm:$0xff]
    %v156 = vld [vmem:[%s0 + $0x3b0] sm:$0xff]
    %v157 = vld [vmem:[%s0 + $0x3b8] sm:$0xff]
    %v158 = vld [vmem:[%s0 + $0x3c0] sm:$0xff]
    %v159 = vld [vmem:[%s0 + $0x3c8] sm:$0xff]
    %v160 = vld [vmem:[%s0 + $0x3d0] sm:$0xff]
    %v161 = vld [vmem:[%s0 + $0x3d8] sm:$0xff]
    %v162 = vld [vmem:[%s0 + $0x3e0] sm:$0xff]
    %v163 = vld [vmem:[%s0 + $0x3e8] sm:$0xff]
    %v164 = vld [vmem:[%s0 + $0x3f0] sm:$0xff]
    %v165 = vld [vmem:[%s0 + $0x3f8] sm:$0xff]
    %v166 = vld [vmem:[%s0 + $0x400] sm:$0xff]
    %v167 = vld [vmem:[%s0 + $0x408] sm:$0xff]
    %v168 = vld [vmem:[%s0 + $0x410] sm:$0xff]
    %v169 = vld [vmem:[%s0 + $0x418] sm:$0xff]
    %v170 = vld [vmem:[%s0 + $0x420] sm:$0xff]
    %v171 = vld [vmem:[%s0 + $0x428] sm:$0xff]
    %v172 = vld [vmem:[%s0 + $0x430] sm:$0xff]
    %v173 = vld [vmem:[%s0 + $0x438] sm:$0xff]
    %v174 = vld [vmem:[%s0 + $0x440] sm:$0xff]
    %v175 = vld [vmem:[%s0 + $0x448] sm:$0xff]
    %v176 = vld [vmem:[%s0 + $0x450] sm:$0xff]
    %v177 = vld [vmem:[%s0 + $0x458] sm:$0xff]
    %v178 = vld [vmem:[%s0 + $0x460] sm:$0xff]
    %v179 = vld [vmem:[%s0 + $0x468] sm:$0xff]
    %v180 = vld [vmem:[%s0 + $0x470] sm:$0xff]
    %v181 = vld [vmem:[%s0 + $0x478] sm:$0xff]
    %v182 = vld [vmem:[%s0 + $0x480] sm:$0xff]
    %v183 = vld [vmem:[%s0 + $0x488] sm:$0xff]
    %v184 = vld [vmem:[%s0 + $0x490] sm:$0xff]
    %v185 = vld [vmem:[%s0 + $0x498] sm:$0xff]
    %v186 = vld [vmem:[%s0 + $0x4a0] sm:$0xff]
    %v187 = vld [vmem:[%s0 + $0x4a8] sm:$0xff]
    %v188 = vld [vmem:[%s0 + $0x4b0] sm:$0xff]
    %v189 = vld [vmem:[%s0 + $0x4b8] sm:$0xff]
    %v190 = vld [vmem:[%s0 + $0x4c0] sm:$0xff]
    %v191 = vld [vmem:[%s0 + $0x4c8] sm:$0xff]
    %v192 = vld [vmem:[%s0 + $0x4d0] sm:$0xff]
    %v193 = vld [vmem:[%s0 + $0x4d8] sm:$0xff]
    %v194 = vld [vmem:[%s0 + $0x4e0] sm:$0xff]
    %v195 = vld [vmem:[%s0 + $0x4e8] sm:$0xff]
    %v196 = vld [vmem:[%s0 + $0x4f0] sm:$0xff]
    %v197 = vld [vmem:[%s0 + $0x4f8] sm:$0xff]
    %v198 = vld [vmem:[%s0 + $0x500] sm:$0xff]
    %v199 = vld [vmem:[%s0 + $0x508] sm:$0xff]
    %v200 = vld [vmem:[%s0 + $0x510] sm:$0xff]
    %v201 = vld [vmem:[%s0 + $0x518] sm:$0xff]
    %v202 = vld [vmem:[%s0 + $0x520] sm:$0xff]
    %v203 = vld [vmem:[%s0 + $0x528] sm:$0xff]
    %v204 = vld [vmem:[%s0 + $0x530] sm:$0xff]
    %v205 = vld [vmem:[%s0 + $0x538] sm:$0xff]
    %v206 = vld [vmem:[%s0 + $0x540] sm:$0xff]
    %v207 = vld [vmem:[%s0 + $0x548] sm:$0xff]
    %v208 = vld [vmem:[%s0 + $0x550] sm:$0xff]
    %v209 = vld [vmem:[%s0 + $0x558] sm:$0xff]
    %v210 = vld [vmem:[%s0 + $0x560] sm:$0xff]
    %v211 = vld [vmem:[%s0 + $0x568] sm:$0xff]
    %v212 = vld [vmem:[%s0 + $0x570] sm:$0xff]
    %v213 = vld [vmem:[%s0 + $0x578] sm:$0xff]
    %v214 = vld [vmem:[%s1] sm:$0xff]
    %v215 = vld [vmem:[%s1 + $0x8] sm:$0xff]
    %v216 = vld [vmem:[%s1 + $0x10] sm:$0xff]
    %v217 = vld [vmem:[%s1 + $0x18] sm:$0xff]
    %v218 = vld [vmem:[%s1 + $0x20] sm:$0xff]
    %v219 = vld [vmem:[%s1 + $0x28] sm:$0xff]
    %v220 = vld [vmem:[%s1 + $0x30] sm:$0xff]
    %v221 = vld [vmem:[%s1 + $0x38] sm:$0xff]
    %v222 = vld [vmem:[%s1 + $0x40] sm:$0xff]
    %v223 = vld [vmem:[%s1 + $0x48] sm:$0xff]
    %v224 = vld [vmem:[%s1 + $0x50] sm:$0xff]
    %v225 = vld [vmem:[%s1 + $0x58] sm:$0xff]
    %v226 = vld [vmem:[%s1 + $0x60] sm:$0xff]
    %v227 = vld [vmem:[%s1 + $0x68] sm:$0xff]
    %v228 = vld [vmem:[%s1 + $0x70] sm:$0xff]
    %v229 = vld [vmem:[%s1 + $0x78] sm:$0xff]
    %v230 = vld [vmem:[%s1 + $0x80] sm:$0xff]
    %v231 = vld [vmem:[%s1 + $0x88] sm:$0xff]
    %v232 = vld [vmem:[%s1 + $0x90] sm:$0xff]
    %v233 = vld [vmem:[%s1 + $0x98] sm:$0xff]
    %v234 = vld [vmem:[%s1 + $0xa0] sm:$0xff]
    %v235 = vld [vmem:[%s1 + $0xa8] sm:$0xff]
    %v236 = vld [vmem:[%s1 + $0xb0] sm:$0xff]
    %v237 = vld [vmem:[%s1 + $0xb8] sm:$0xff]
    %v238 = vld [vmem:[%s1 + $0xc0] sm:$0xff]
    %v239 = vld [vmem:[%s1 + $0xc8] sm:$0xff]
    %v240 = vld [vmem:[%s1 + $0xd0] sm:$0xff]
    %v241 = vld [vmem:[%s1 + $0xd8] sm:$0xff]
    %v242 = vld [vmem:[%s1 + $0xe0] sm:$0xff]
    %v243 = vld [vmem:[%s1 + $0xe8] sm:$0xff]
    %v244 = vld [vmem:[%s1 + $0xf0] sm:$0xff]
    %v245 = vld [vmem:[%s1 + $0xf8] sm:$0xff]
    %v246 = vld [vmem:[%s1 + $0x100] sm:$0xff]
    %v247 = vld [vmem:[%s1 + $0x108] sm:$0xff]
    %v248 = vld [vmem:[%s1 + $0x110] sm:$0xff]
    %v249 = vld [vmem:[%s1 + $0x118] sm:$0xff]
    %v250 = vld [vmem:[%s1 + $0x120] sm:$0xff]
    %v251 = vld [vmem:[%s1 + $0x128] sm:$0xff]
    %v252 = vld [vmem:[%s1 + $0x130] sm:$0xff]
    %v253 = vld [vmem:[%s1 + $0x138] sm:$0xff]
    %v254 = vld [vmem:[%s1 + $0x140] sm:$0xff]
    %v255 = vld [vmem:[%s1 + $0x148] sm:$0xff]
    %v256 = vld [vmem:[%s1 + $0x150] sm:$0xff]
    %v257 = vld [vmem:[%s1 + $0x158] sm:$0xff]
    %v258 = vld [vmem:[%s1 + $0x160] sm:$0xff]
    %v259 = vld [vmem:[%s1 + $0x168] sm:$0xff]
    %v260 = vld [vmem:[%s1 + $0x170] sm:$0xff]
    %v261 = vld [vmem:[%s1 + $0x178] sm:$0xff]
    %v262 = vld [vmem:[%s1 + $0x180] sm:$0xff]
    %v263 = vld [vmem:[%s1 + $0x188] sm:$0xff]
    %v264 = vld [vmem:[%s1 + $0x190] sm:$0xff]
    %v265 = vld [vmem:[%s1 + $0x198] sm:$0xff]
    %v266 = vld [vmem:[%s1 + $0x1a0] sm:$0xff]
    %v267 = vld [vmem:[%s1 + $0x1a8] sm:$0xff]
    %v268 = vld [vmem:[%s1 + $0x1b0] sm:$0xff]
    %v269 = vld [vmem:[%s1 + $0x1b8] sm:$0xff]
    %v270 = vld [vmem:[%s1 + $0x1c0] sm:$0xff]
    %v271 = vld [vmem:[%s1 + $0x1c8] sm:$0xff]
    %v272 = vld [vmem:[%s1 + $0x1d0] sm:$0xff]
    %v273 = vld [vmem:[%s1 + $0x1d8] sm:$0xff]
    %v274 = vld [vmem:[%s1 + $0x1e0] sm:$0xff]
    %v275 = vld [vmem:[%s1 + $0x1e8] sm:$0xff]
    %v276 = vld [vmem:[%s1 + $0x1f0] sm:$0xff]
    %v277 = vld [vmem:[%s1 + $0x1f8] sm:$0xff]
    %v278 = vld [vmem:[%s1 + $0x200] sm:$0xff]
    %v279 = vld [vmem:[%s1 + $0x208] sm:$0xff]
    %v280 = vld [vmem:[%s1 + $0x210] sm:$0xff]
    %v281 = vld [vmem:[%s1 + $0x218] sm:$0xff]
    %v282 = vld [vmem:[%s1 + $0x220] sm:$0xff]
    %v283 = vld [vmem:[%s1 + $0x228] sm:$0xff]
    %v284 = vld [vmem:[%s1 + $0x230] sm:$0xff]
    %v285 = vld [vmem:[%s1 + $0x238] sm:$0xff]
    %v286 = vld [vmem:[%s1 + $0x240] sm:$0xff]
    %v287 = vld [vmem:[%s1 + $0x248] sm:$0xff]
    %v288 = vld [vmem:[%s1 + $0x250] sm:$0xff]
    %v289 = vld [vmem:[%s1 + $0x258] sm:$0xff]
    %v290 = vld [vmem:[%s1 + $0x260] sm:$0xff]
    %v291 = vld [vmem:[%s1 + $0x268] sm:$0xff]
    %v292 = vld [vmem:[%s1 + $0x270] sm:$0xff]
    %v293 = vld [vmem:[%s1 + $0x278] sm:$0xff]
    %v294 = vld [vmem:[%s1 + $0x280] sm:$0xff]
    %v295 = vld [vmem:[%s1 + $0x288] sm:$0xff]
    %v296 = vld [vmem:[%s1 + $0x290] sm:$0xff]
    %v297 = vld [vmem:[%s1 + $0x298] sm:$0xff]
    %v298 = vld [vmem:[%s1 + $0x2a0] sm:$0xff]
    %v299 = vld [vmem:[%s1 + $0x2a8] sm:$0xff]
    %v300 = vld [vmem:[%s1 + $0x2b0] sm:$0xff]
    %v301 = vld [vmem:[%s1 + $0x2b8] sm:$0xff]
    %v302 = vld [vmem:[%s1 + $0x2c0] sm:$0xff]
    %v303 = vld [vmem:[%s1 + $0x2c8] sm:$0xff]
    %v304 = vld [vmem:[%s1 + $0x2d0] sm:$0xff]
    %v305 = vld [vmem:[%s1 + $0x2d8] sm:$0xff]
    %v306 = vld [vmem:[%s1 + $0x2e0] sm:$0xff]
    %v307 = vld [vmem:[%s1 + $0x2e8] sm:$0xff]
    %v308 = vld [vmem:[%s1 + $0x2f0] sm:$0xff]
    %v309 = vld [vmem:[%s1 + $0x2f8] sm:$0xff]
    %v310 = vld [vmem:[%s1 + $0x300] sm:$0xff]
    %v311 = vld [vmem:[%s1 + $0x308] sm:$0xff]
    %v312 = vld [vmem:[%s1 + $0x310] sm:$0xff]
    %v313 = vld [vmem:[%s1 + $0x318] sm:$0xff]
    %v314 = vld [vmem:[%s1 + $0x320] sm:$0xff]
    %v315 = vld [vmem:[%s1 + $0x328] sm:$0xff]
    %v316 = vld [vmem:[%s1 + $0x330] sm:$0xff]
    %v317 = vld [vmem:[%s1 + $0x338] sm:$0xff]
    %v318 = vld [vmem:[%s1 + $0x340] sm:$0xff]
    %v319 = vld [vmem:[%s1 + $0x348] sm:$0xff]
    %v320 = vld [vmem:[%s1 + $0x350] sm:$0xff]
    %v321 = vld [vmem:[%s1 + $0x358] sm:$0xff]
    %v322 = vld [vmem:[%s1 + $0x360] sm:$0xff]
    %v323 = vld [vmem:[%s1 + $0x368] sm:$0xff]
    %v324 = vld [vmem:[%s1 + $0x370] sm:$0xff]
    %v325 = vld [vmem:[%s1 + $0x378] sm:$0xff]
    %v326 = vld [vmem:[%s1 + $0x380] sm:$0xff]
    %v327 = vld [vmem:[%s1 + $0x388] sm:$0xff]
    %v328 = vld [vmem:[%s1 + $0x390] sm:$0xff]
    %v329 = vld [vmem:[%s1 + $0x398] sm:$0xff]
    %v330 = vld [vmem:[%s1 + $0x3a0] sm:$0xff]
    %v331 = vld [vmem:[%s1 + $0x3a8] sm:$0xff]
    %v332 = vld [vmem:[%s1 + $0x3b0] sm:$0xff]
    %v333 = vld [vmem:[%s1 + $0x3b8] sm:$0xff]
    %v334 = vld [vmem:[%s1 + $0x3c0] sm:$0xff]
    %v335 = vld [vmem:[%s1 + $0x3c8] sm:$0xff]
    %v336 = vld [vmem:[%s1 + $0x3d0] sm:$0xff]
    %v337 = vld [vmem:[%s1 + $0x3d8] sm:$0xff]
    %v338 = vld [vmem:[%s1 + $0x3e0] sm:$0xff]
    %v339 = vld [vmem:[%s1 + $0x3e8] sm:$0xff]
    %v340 = vld [vmem:[%s1 + $0x3f0] sm:$0xff]
    %v341 = vld [vmem:[%s1 + $0x3f8] sm:$0xff]
    %v342 = vld [vmem:[%s1 + $0x400] sm:$0xff]
    %v343 = vld [vmem:[%s1 + $0x408] sm:$0xff]
    %v344 = vld [vmem:[%s1 + $0x410] sm:$0xff]
    %v345 = vld [vmem:[%s1 + $0x418] sm:$0xff]
    %v346 = vld [vmem:[%s1 + $0x420] sm:$0xff]
    %v347 = vld [vmem:[%s1 + $0x428] sm:$0xff]
    %v348 = vld [vmem:[%s1 + $0x430] sm:$0xff]
    %v349 = vld [vmem:[%s1 + $0x438] sm:$0xff]
    %v350 = vld [vmem:[%s1 + $0x440] sm:$0xff]
    %v351 = vld [vmem:[%s1 + $0x448] sm:$0xff]
    %v352 = vld [vmem:[%s1 + $0x450] sm:$0xff]
    %v353 = vld [vmem:[%s1 + $0x458] sm:$0xff]
    %v354 = vld [vmem:[%s1 + $0x460] sm:$0xff]
    %v355 = vld [vmem:[%s1 + $0x468] sm:$0xff]
    %v356 = vld [vmem:[%s1 + $0x470] sm:$0xff]
    %v357 = vld [vmem:[%s1 + $0x478] sm:$0xff]
    %v358 = vld [vmem:[%s1 + $0x480] sm:$0xff]
    %v359 = vld [vmem:[%s1 + $0x488] sm:$0xff]
    %v360 = vld [vmem:[%s1 + $0x490] sm:$0xff]
    %v361 = vld [vmem:[%s1 + $0x498] sm:$0xff]
    %v362 = vld [vmem:[%s1 + $0x4a0] sm:$0xff]
    %v363 = vld [vmem:[%s1 + $0x4a8] sm:$0xff]
    %v364 = vld [vmem:[%s1 + $0x4b0] sm:$0xff]
    %v365 = vld [vmem:[%s1 + $0x4b8] sm:$0xff]
    %v366 = vld [vmem:[%s1 + $0x4c0] sm:$0xff]
    %v367 = vld [vmem:[%s1 + $0x4c8] sm:$0xff]
    %v368 = vld [vmem:[%s1 + $0x4d0] sm:$0xff]
    %v369 = vld [vmem:[%s1 + $0x4d8] sm:$0xff]
    %v370 = vld [vmem:[%s1 + $0x4e0] sm:$0xff]
    %v371 = vld [vmem:[%s1 + $0x4e8] sm:$0xff]
    %v372 = vld [vmem:[%s1 + $0x4f0] sm:$0xff]
    %v373 = vld [vmem:[%s1 + $0x4f8] sm:$0xff]
    %v374 = vld [vmem:[%s1 + $0x500] sm:$0xff]
    %v375 = vld [vmem:[%s1 + $0x508] sm:$0xff]
    %v376 = vld [vmem:[%s1 + $0x510] sm:$0xff]
    %v377 = vld [vmem:[%s1 + $0x518] sm:$0xff]
    %v378 = vld [vmem:[%s1 + $0x520] sm:$0xff]
    %v379 = vld [vmem:[%s1 + $0x528] sm:$0xff]
    %v380 = vld [vmem:[%s1 + $0x530] sm:$0xff]
    %v381 = vld [vmem:[%s1 + $0x538] sm:$0xff]
    %v382 = vld [vmem:[%s1 + $0x540] sm:$0xff]
    %v383 = vld [vmem:[%s1 + $0x548] sm:$0xff]
    %v384 = vld [vmem:[%s1 + $0x550] sm:$0xff]
    %v385 = vld [vmem:[%s1 + $0x558] sm:$0xff]
    %v386 = vld [vmem:[%s1 + $0x560] sm:$0xff]
    %v387 = vld [vmem:[%s1 + $0x568] sm:$0xff]
    %v388 = vld [vmem:[%s1 + $0x570] sm:$0xff]
    %v389 = vld [vmem:[%s1 + $0x578] sm:$0xff]
    %v390 = vld [vmem:[%s1 + $0x580] sm:$0xff]
    %v391 = vld [vmem:[%s1 + $0x588] sm:$0xff]
    %v392 = vld [vmem:[%s1 + $0x590] sm:$0xff]
    %v393 = vld [vmem:[%s1 + $0x598] sm:$0xff]
    %v394 = vld [vmem:[%s1 + $0x5a0] sm:$0xff]
    %v395 = vld [vmem:[%s1 + $0x5a8] sm:$0xff]
    %v396 = vld [vmem:[%s1 + $0x5b0] sm:$0xff]
    %v397 = vld [vmem:[%s1 + $0x5b8] sm:$0xff]
    %v398 = vld [vmem:[%s1 + $0x5c0] sm:$0xff]
    %v399 = vld [vmem:[%s1 + $0x5c8] sm:$0xff]
    %v400 = vld [vmem:[%s1 + $0x5d0] sm:$0xff]
    %v401 = vld [vmem:[%s1 + $0x5d8] sm:$0xff]
    %v402 = vld [vmem:[%s1 + $0x5e0] sm:$0xff]
    %v403 = vld [vmem:[%s1 + $0x5e8] sm:$0xff]
    %v404 = vld [vmem:[%s1 + $0x5f0] sm:$0xff]
    %v405 = vld [vmem:[%s1 + $0x5f8] sm:$0xff]
    %v406 = vld [vmem:[%s1 + $0x600] sm:$0xff]
    %v407 = vld [vmem:[%s1 + $0x608] sm:$0xff]
    %v408 = vld [vmem:[%s1 + $0x610] sm:$0xff]
    %v409 = vld [vmem:[%s1 + $0x618] sm:$0xff]
    %v410 = vld [vmem:[%s1 + $0x620] sm:$0xff]
    %v411 = vld [vmem:[%s1 + $0x628] sm:$0xff]
    %v412 = vld [vmem:[%s1 + $0x630] sm:$0xff]
    %v413 = vld [vmem:[%s1 + $0x638] sm:$0xff]
    %v414 = vld [vmem:[%s1 + $0x640] sm:$0xff]
    %v415 = vld [vmem:[%s1 + $0x648] sm:$0xff]
    %v416 = vld [vmem:[%s1 + $0x650] sm:$0xff]
    %v417 = vld [vmem:[%s1 + $0x658] sm:$0xff]
    %v418 = vld [vmem:[%s1 + $0x660] sm:$0xff]
    %v419 = vld [vmem:[%s1 + $0x668] sm:$0xff]
    %v420 = vld [vmem:[%s1 + $0x670] sm:$0xff]
    %v421 = vld [vmem:[%s1 + $0x678] sm:$0xff]
    %v422 = vld [vmem:[%s1 + $0x680] sm:$0xff]
    %v423 = vld [vmem:[%s1 + $0x688] sm:$0xff]
    %v424 = vld [vmem:[%s1 + $0x690] sm:$0xff]
    %v425 = vld [vmem:[%s1 + $0x698] sm:$0xff]
    %v426 = vld [vmem:[%s1 + $0x6a0] sm:$0xff]
    %v427 = vld [vmem:[%s1 + $0x6a8] sm:$0xff]
    %v428 = vld [vmem:[%s1 + $0x6b0] sm:$0xff]
    %v429 = vld [vmem:[%s1 + $0x6b8] sm:$0xff]
    %v430 = vld [vmem:[%s1 + $0x6c0] sm:$0xff]
    %v431 = vld [vmem:[%s1 + $0x6c8] sm:$0xff]
    %v432 = vld [vmem:[%s1 + $0x6d0] sm:$0xff]
    %v433 = vld [vmem:[%s1 + $0x6d8] sm:$0xff]
    %v434 = vld [vmem:[%s1 + $0x6e0] sm:$0xff]
    %v435 = vld [vmem:[%s1 + $0x6e8] sm:$0xff]
    %v436 = vld [vmem:[%s1 + $0x6f0] sm:$0xff]
    %v437 = vld [vmem:[%s1 + $0x6f8] sm:$0xff]
    %v438 = vld [vmem:[%s1 + $0x700] sm:$0xff]
    %v439 = vld [vmem:[%s1 + $0x708] sm:$0xff]
    %v440 = vld [vmem:[%s1 + $0x710] sm:$0xff]
    %v441 = vld [vmem:[%s1 + $0x718] sm:$0xff]
    %v442 = vld [vmem:[%s1 + $0x720] sm:$0xff]
    %v443 = vld [vmem:[%s1 + $0x728] sm:$0xff]
    %v444 = vld [vmem:[%s1 + $0x730] sm:$0xff]
    %v445 = vld [vmem:[%s1 + $0x738] sm:$0xff]
    %v446 = vld [vmem:[%s1 + $0x740] sm:$0xff]
    %v447 = vld [vmem:[%s1 + $0x748] sm:$0xff]
    %v448 = vld [vmem:[%s1 + $0x750] sm:$0xff]
    %v449 = vld [vmem:[%s1 + $0x758] sm:$0xff]
    %v450 = vld [vmem:[%s1 + $0x760] sm:$0xff]
    %v451 = vld [vmem:[%s1 + $0x768] sm:$0xff]
    %v452 = vld [vmem:[%s1 + $0x770] sm:$0xff]
    %v453 = vld [vmem:[%s1 + $0x778] sm:$0xff]
    %v454 = vld [vmem:[%s1 + $0x780] sm:$0xff]
    %v455 = vld [vmem:[%s1 + $0x788] sm:$0xff]
    %v456 = vld [vmem:[%s1 + $0x790] sm:$0xff]
    %v457 = vld [vmem:[%s1 + $0x798] sm:$0xff]
    %v458 = vld [vmem:[%s1 + $0x7a0] sm:$0xff]
    %v459 = vld [vmem:[%s1 + $0x7a8] sm:$0xff]
    %v460 = vld [vmem:[%s1 + $0x7b0] sm:$0xff]
    %v461 = vld [vmem:[%s1 + $0x7b8] sm:$0xff]
    %v462 = vld [vmem:[%s1 + $0x7c0] sm:$0xff]
    %v463 = vld [vmem:[%s1 + $0x7c8] sm:$0xff]
    %v464 = vld [vmem:[%s1 + $0x7d0] sm:$0xff]
    %v465 = vld [vmem:[%s1 + $0x7d8] sm:$0xff]
    %v466 = vld [vmem:[%s1 + $0x7e0] sm:$0xff]
    %v467 = vld [vmem:[%s1 + $0x7e8] sm:$0xff]
    %v468 = vld [vmem:[%s1 + $0x7f0] sm:$0xff]
    %v469 = vld [vmem:[%s1 + $0x7f8] sm:$0xff]
    %v470 = vld [vmem:[%s1 + $0x800] sm:$0xff]
    %v471 = vld [vmem:[%s1 + $0x808] sm:$0xff]
    %v472 = vld [vmem:[%s1 + $0x810] sm:$0xff]
    %v473 = vld [vmem:[%s1 + $0x818] sm:$0xff]
    %v474 = vld [vmem:[%s1 + $0x820] sm:$0xff]
    %v475 = vld [vmem:[%s1 + $0x828] sm:$0xff]
    %v476 = vld [vmem:[%s1 + $0x830] sm:$0xff]
    %v477 = vld [vmem:[%s1 + $0x838] sm:$0xff]
    %v478 = vld [vmem:[%s1 + $0x840] sm:$0xff]
    %v479 = vld [vmem:[%s1 + $0x848] sm:$0xff]
    %v480 = vld [vmem:[%s1 + $0x850] sm:$0xff]
    %v481 = vld [vmem:[%s1 + $0x858] sm:$0xff]
    %v482 = vld [vmem:[%s1 + $0x860] sm:$0xff]
    %v483 = vld [vmem:[%s1 + $0x868] sm:$0xff]
    %v484 = vld [vmem:[%s1 + $0x870] sm:$0xff]
    %v485 = vld [vmem:[%s1 + $0x878] sm:$0xff]
    %v486 = vld [vmem:[%s1 + $0x880] sm:$0xff]
    %v487 = vld [vmem:[%s1 + $0x888] sm:$0xff]
    %v488 = vld [vmem:[%s1 + $0x890] sm:$0xff]
    %v489 = vld [vmem:[%s1 + $0x898] sm:$0xff]
    %v490 = vld [vmem:[%s1 + $0x8a0] sm:$0xff]
    %v491 = vld [vmem:[%s1 + $0x8a8] sm:$0xff]
    %v492 = vld [vmem:[%s1 + $0x8b0] sm:$0xff]
    %v493 = vld [vmem:[%s1 + $0x8b8] sm:$0xff]
    %v494 = vld [vmem:[%s1 + $0x8c0] sm:$0xff]
    %v495 = vld [vmem:[%s1 + $0x8c8] sm:$0xff]
    %v496 = vld [vmem:[%s1 + $0x8d0] sm:$0xff]
    %v497 = vld [vmem:[%s1 + $0x8d8] sm:$0xff]
    %v498 = vld [vmem:[%s1 + $0x8e0] sm:$0xff]
    %v499 = vld [vmem:[%s1 + $0x8e8] sm:$0xff]
    %v500 = vld [vmem:[%s1 + $0x8f0] sm:$0xff]
    %v501 = vld [vmem:[%s1 + $0x8f8] sm:$0xff]
    %v502 = vld [vmem:[%s1 + $0x900] sm:$0xff]
    %v503 = vld [vmem:[%s1 + $0x908] sm:$0xff]
    %v504 = vld [vmem:[%s1 + $0x910] sm:$0xff]
    %v505 = vld [vmem:[%s1 + $0x918] sm:$0xff]
    %v506 = vld [vmem:[%s1 + $0x920] sm:$0xff]
    %v507 = vld [vmem:[%s1 + $0x928] sm:$0xff]
    %v508 = vld [vmem:[%s1 + $0x930] sm:$0xff]
    %v509 = vld [vmem:[%s1 + $0x938] sm:$0xff]
    %v510 = vld [vmem:[%s1 + $0x940] sm:$0xff]
    %v511 = vld [vmem:[%s1 + $0x948] sm:$0xff]
    %v512 = vld [vmem:[%s1 + $0x950] sm:$0xff]
    %v513 = vld [vmem:[%s1 + $0x958] sm:$0xff]
    %v514 = vld [vmem:[%s1 + $0x960] sm:$0xff]
    %v515 = vld [vmem:[%s1 + $0x968] sm:$0xff]
    %v516 = vld [vmem:[%s1 + $0x970] sm:$0xff]
    %v517 = vld [vmem:[%s1 + $0x978] sm:$0xff]
    %v518 = vld [vmem:[%s1 + $0x980] sm:$0xff]
    %v519 = vld [vmem:[%s1 + $0x988] sm:$0xff]
    %v520 = vld [vmem:[%s1 + $0x990] sm:$0xff]
    %v521 = vld [vmem:[%s1 + $0x998] sm:$0xff]
    %v522 = vld [vmem:[%s1 + $0x9a0] sm:$0xff]
    %v523 = vld [vmem:[%s1 + $0x9a8] sm:$0xff]
    %v524 = vld [vmem:[%s1 + $0x9b0] sm:$0xff]
    %v525 = vld [vmem:[%s1 + $0x9b8] sm:$0xff]
    %v526 = vld [vmem:[%s1 + $0x9c0] sm:$0xff]
    %v527 = vld [vmem:[%s1 + $0x9c8] sm:$0xff]
    %v528 = vld [vmem:[%s1 + $0x9d0] sm:$0xff]
    %v529 = vld [vmem:[%s1 + $0x9d8] sm:$0xff]
    %v530 = vld [vmem:[%s1 + $0x9e0] sm:$0xff]
    %v531 = vld [vmem:[%s1 + $0x9e8] sm:$0xff]
    %v532 = vld [vmem:[%s1 + $0x9f0] sm:$0xff]
    %v533 = vld [vmem:[%s1 + $0x9f8] sm:$0xff]
    %v534 = vld [vmem:[%s1 + $0xa00] sm:$0xff]
    %v535 = vld [vmem:[%s1 + $0xa08] sm:$0xff]
    %v536 = vld [vmem:[%s1 + $0xa10] sm:$0xff]
    %v537 = vld [vmem:[%s1 + $0xa18] sm:$0xff]
    %v538 = vld [vmem:[%s1 + $0xa20] sm:$0xff]
    %v539 = vld [vmem:[%s1 + $0xa28] sm:$0xff]
    %v540 = vld [vmem:[%s1 + $0xa30] sm:$0xff]
    %v541 = vld [vmem:[%s1 + $0xa38] sm:$0xff]
    %v542 = vld [vmem:[%s1 + $0xa40] sm:$0xff]
    %v543 = vld [vmem:[%s1 + $0xa48] sm:$0xff]
    %v544 = vld [vmem:[%s1 + $0xa50] sm:$0xff]
    %v545 = vld [vmem:[%s1 + $0xa58] sm:$0xff]
    %v546 = vld [vmem:[%s1 + $0xa60] sm:$0xff]
    %v547 = vld [vmem:[%s1 + $0xa68] sm:$0xff]
    %v548 = vld [vmem:[%s1 + $0xa70] sm:$0xff]
    %v549 = vld [vmem:[%s1 + $0xa78] sm:$0xff]
    %v550 = vld [vmem:[%s1 + $0xa80] sm:$0xff]
    %v551 = vld [vmem:[%s1 + $0xa88] sm:$0xff]
    %v552 = vld [vmem:[%s1 + $0xa90] sm:$0xff]
    %v553 = vld [vmem:[%s1 + $0xa98] sm:$0xff]
    %v554 = vld [vmem:[%s1 + $0xaa0] sm:$0xff]
    %v555 = vld [vmem:[%s1 + $0xaa8] sm:$0xff]
    %v556 = vld [vmem:[%s2] sm:$0x3]
    %v558 = vperm.slane %v556, 0
    %v559 = vperm.slane %v556, 1
    %v738 = vunpack.c.l.b16 %v38
    %v739 = vunpack.c.h.b16 %v38
    %v740 = vunpack.c.l.b16 %v39
    %v741 = vunpack.c.h.b16 %v39
    %v742 = vunpack.c.l.b16 %v40
    %v743 = vunpack.c.h.b16 %v40
    %v744 = vunpack.c.l.b16 %v41
    %v745 = vunpack.c.h.b16 %v41
    %v746 = vunpack.c.l.b16 %v42
    %v747 = vunpack.c.h.b16 %v42
    %v748 = vunpack.c.l.b16 %v43
    %v749 = vunpack.c.h.b16 %v43
    %v750 = vunpack.c.l.b16 %v44
    %v751 = vunpack.c.h.b16 %v44
    %v752 = vunpack.c.l.b16 %v45
    %v753 = vunpack.c.h.b16 %v45
    %v754 = vunpack.c.l.b16 %v46
    %v755 = vunpack.c.h.b16 %v46
    %v756 = vunpack.c.l.b16 %v47
    %v757 = vunpack.c.h.b16 %v47
    %v758 = vunpack.c.l.b16 %v48
    %v759 = vunpack.c.h.b16 %v48
    %v760 = vunpack.c.l.b16 %v49
    %v761 = vunpack.c.h.b16 %v49
    %v762 = vunpack.c.l.b16 %v50
    %v763 = vunpack.c.h.b16 %v50
    %v764 = vunpack.c.l.b16 %v51
    %v765 = vunpack.c.h.b16 %v51
    %v766 = vunpack.c.l.b16 %v52
    %v767 = vunpack.c.h.b16 %v52
    %v768 = vunpack.c.l.b16 %v53
    %v769 = vunpack.c.h.b16 %v53
    %v770 = vunpack.c.l.b16 %v54
    %v771 = vunpack.c.h.b16 %v54
    %v772 = vunpack.c.l.b16 %v55
    %v773 = vunpack.c.h.b16 %v55
    %v774 = vunpack.c.l.b16 %v56
    %v775 = vunpack.c.h.b16 %v56
    %v776 = vunpack.c.l.b16 %v57
    %v777 = vunpack.c.h.b16 %v57
    %v778 = vunpack.c.l.b16 %v58
    %v779 = vunpack.c.h.b16 %v58
    %v780 = vunpack.c.l.b16 %v59
    %v781 = vunpack.c.h.b16 %v59
    %v782 = vunpack.c.l.b16 %v60
    %v783 = vunpack.c.h.b16 %v60
    %v784 = vunpack.c.l.b16 %v61
    %v785 = vunpack.c.h.b16 %v61
    %v786 = vunpack.c.l.b16 %v62
    %v787 = vunpack.c.h.b16 %v62
    %v788 = vunpack.c.l.b16 %v63
    %v789 = vunpack.c.h.b16 %v63
    %v790 = vunpack.c.l.b16 %v64
    %v791 = vunpack.c.h.b16 %v64
    %v792 = vunpack.c.l.b16 %v65
    %v793 = vunpack.c.h.b16 %v65
    %v794 = vunpack.c.l.b16 %v66
    %v795 = vunpack.c.h.b16 %v66
    %v796 = vunpack.c.l.b16 %v67
    %v797 = vunpack.c.h.b16 %v67
    %v798 = vunpack.c.l.b16 %v68
    %v799 = vunpack.c.h.b16 %v68
    %v800 = vunpack.c.l.b16 %v69
    %v801 = vunpack.c.h.b16 %v69
    %v802 = vunpack.c.l.b16 %v70
    %v803 = vunpack.c.h.b16 %v70
    %v804 = vunpack.c.l.b16 %v71
    %v805 = vunpack.c.h.b16 %v71
    %v806 = vunpack.c.l.b16 %v72
    %v807 = vunpack.c.h.b16 %v72
    %v808 = vunpack.c.l.b16 %v73
    %v809 = vunpack.c.h.b16 %v73
    %v810 = vunpack.c.l.b16 %v74
    %v811 = vunpack.c.h.b16 %v74
    %v812 = vunpack.c.l.b16 %v75
    %v813 = vunpack.c.h.b16 %v75
    %v814 = vunpack.c.l.b16 %v76
    %v815 = vunpack.c.h.b16 %v76
    %v816 = vunpack.c.l.b16 %v77
    %v817 = vunpack.c.h.b16 %v77
    %v818 = vunpack.c.l.b16 %v78
    %v819 = vunpack.c.h.b16 %v78
    %v820 = vunpack.c.l.b16 %v79
    %v821 = vunpack.c.h.b16 %v79
    %v822 = vunpack.c.l.b16 %v80
    %v823 = vunpack.c.h.b16 %v80
    %v824 = vunpack.c.l.b16 %v81
    %v825 = vunpack.c.h.b16 %v81
    %v826 = vunpack.c.l.b16 %v82
    %v827 = vunpack.c.h.b16 %v82
    %v828 = vunpack.c.l.b16 %v83
    %v829 = vunpack.c.h.b16 %v83
    %v830 = vunpack.c.l.b16 %v84
    %v831 = vunpack.c.h.b16 %v84
    %v832 = vunpack.c.l.b16 %v85
    %v833 = vunpack.c.h.b16 %v85
    %v834 = vunpack.c.l.b16 %v86
    %v835 = vunpack.c.h.b16 %v86
    %v836 = vunpack.c.l.b16 %v87
    %v837 = vunpack.c.h.b16 %v87
    %v838 = vunpack.c.l.b16 %v88
    %v839 = vunpack.c.h.b16 %v88
    %v840 = vunpack.c.l.b16 %v89
    %v841 = vunpack.c.h.b16 %v89
    %v842 = vunpack.c.l.b16 %v90
    %v843 = vunpack.c.h.b16 %v90
    %v844 = vunpack.c.l.b16 %v91
    %v845 = vunpack.c.h.b16 %v91
    %v846 = vunpack.c.l.b16 %v92
    %v847 = vunpack.c.h.b16 %v92
    %v848 = vunpack.c.l.b16 %v93
    %v849 = vunpack.c.h.b16 %v93
    %v850 = vunpack.c.l.b16 %v94
    %v851 = vunpack.c.h.b16 %v94
    %v852 = vunpack.c.l.b16 %v95
    %v853 = vunpack.c.h.b16 %v95
    %v854 = vunpack.c.l.b16 %v96
    %v855 = vunpack.c.h.b16 %v96
    %v856 = vunpack.c.l.b16 %v97
    %v857 = vunpack.c.h.b16 %v97
    %v858 = vunpack.c.l.b16 %v98
    %v859 = vunpack.c.h.b16 %v98
    %v860 = vunpack.c.l.b16 %v99
    %v861 = vunpack.c.h.b16 %v99
    %v862 = vunpack.c.l.b16 %v100
    %v863 = vunpack.c.h.b16 %v100
    %v864 = vunpack.c.l.b16 %v101
    %v865 = vunpack.c.h.b16 %v101
    %v866 = vunpack.c.l.b16 %v102
    %v867 = vunpack.c.h.b16 %v102
    %v868 = vunpack.c.l.b16 %v103
    %v869 = vunpack.c.h.b16 %v103
    %v870 = vunpack.c.l.b16 %v104
    %v871 = vunpack.c.h.b16 %v104
    %v872 = vunpack.c.l.b16 %v105
    %v873 = vunpack.c.h.b16 %v105
    %v874 = vunpack.c.l.b16 %v106
    %v875 = vunpack.c.h.b16 %v106
    %v876 = vunpack.c.l.b16 %v107
    %v877 = vunpack.c.h.b16 %v107
    %v878 = vunpack.c.l.b16 %v108
    %v879 = vunpack.c.h.b16 %v108
    %v880 = vunpack.c.l.b16 %v109
    %v881 = vunpack.c.h.b16 %v109
    %v882 = vunpack.c.l.b16 %v110
    %v883 = vunpack.c.h.b16 %v110
    %v884 = vunpack.c.l.b16 %v111
    %v885 = vunpack.c.h.b16 %v111
    %v886 = vunpack.c.l.b16 %v112
    %v887 = vunpack.c.h.b16 %v112
    %v888 = vunpack.c.l.b16 %v113
    %v889 = vunpack.c.h.b16 %v113
    %v890 = vunpack.c.l.b16 %v114
    %v891 = vunpack.c.h.b16 %v114
    %v892 = vunpack.c.l.b16 %v115
    %v893 = vunpack.c.h.b16 %v115
    %v894 = vunpack.c.l.b16 %v116
    %v895 = vunpack.c.h.b16 %v116
    %v896 = vunpack.c.l.b16 %v117
    %v897 = vunpack.c.h.b16 %v117
    %v898 = vunpack.c.l.b16 %v118
    %v899 = vunpack.c.h.b16 %v118
    %v900 = vunpack.c.l.b16 %v119
    %v901 = vunpack.c.h.b16 %v119
    %v902 = vunpack.c.l.b16 %v120
    %v903 = vunpack.c.h.b16 %v120
    %v904 = vunpack.c.l.b16 %v121
    %v905 = vunpack.c.h.b16 %v121
    %v906 = vunpack.c.l.b16 %v122
    %v907 = vunpack.c.h.b16 %v122
    %v908 = vunpack.c.l.b16 %v123
    %v909 = vunpack.c.h.b16 %v123
    %v910 = vunpack.c.l.b16 %v124
    %v911 = vunpack.c.h.b16 %v124
    %v912 = vunpack.c.l.b16 %v125
    %v913 = vunpack.c.h.b16 %v125
    %v914 = vunpack.c.l.b16 %v126
    %v915 = vunpack.c.h.b16 %v126
    %v916 = vunpack.c.l.b16 %v127
    %v917 = vunpack.c.h.b16 %v127
    %v918 = vunpack.c.l.b16 %v128
    %v919 = vunpack.c.h.b16 %v128
    %v920 = vunpack.c.l.b16 %v129
    %v921 = vunpack.c.h.b16 %v129
    %v922 = vunpack.c.l.b16 %v130
    %v923 = vunpack.c.h.b16 %v130
    %v924 = vunpack.c.l.b16 %v131
    %v925 = vunpack.c.h.b16 %v131
    %v926 = vunpack.c.l.b16 %v132
    %v927 = vunpack.c.h.b16 %v132
    %v928 = vunpack.c.l.b16 %v133
    %v929 = vunpack.c.h.b16 %v133
    %v930 = vunpack.c.l.b16 %v134
    %v931 = vunpack.c.h.b16 %v134
    %v932 = vunpack.c.l.b16 %v135
    %v933 = vunpack.c.h.b16 %v135
    %v934 = vunpack.c.l.b16 %v136
    %v935 = vunpack.c.h.b16 %v136
    %v936 = vunpack.c.l.b16 %v137
    %v937 = vunpack.c.h.b16 %v137
    %v938 = vunpack.c.l.b16 %v138
    %v939 = vunpack.c.h.b16 %v138
    %v940 = vunpack.c.l.b16 %v139
    %v941 = vunpack.c.h.b16 %v139
    %v942 = vunpack.c.l.b16 %v140
    %v943 = vunpack.c.h.b16 %v140
    %v944 = vunpack.c.l.b16 %v141
    %v945 = vunpack.c.h.b16 %v141
    %v946 = vunpack.c.l.b16 %v142
    %v947 = vunpack.c.h.b16 %v142
    %v948 = vunpack.c.l.b16 %v143
    %v949 = vunpack.c.h.b16 %v143
    %v950 = vunpack.c.l.b16 %v144
    %v951 = vunpack.c.h.b16 %v144
    %v952 = vunpack.c.l.b16 %v145
    %v953 = vunpack.c.h.b16 %v145
    %v954 = vunpack.c.l.b16 %v146
    %v955 = vunpack.c.h.b16 %v146
    %v956 = vunpack.c.l.b16 %v147
    %v957 = vunpack.c.h.b16 %v147
    %v958 = vunpack.c.l.b16 %v148
    %v959 = vunpack.c.h.b16 %v148
    %v960 = vunpack.c.l.b16 %v149
    %v961 = vunpack.c.h.b16 %v149
    %v962 = vunpack.c.l.b16 %v150
    %v963 = vunpack.c.h.b16 %v150
    %v964 = vunpack.c.l.b16 %v151
    %v965 = vunpack.c.h.b16 %v151
    %v966 = vunpack.c.l.b16 %v152
    %v967 = vunpack.c.h.b16 %v152
    %v968 = vunpack.c.l.b16 %v153
    %v969 = vunpack.c.h.b16 %v153
    %v970 = vunpack.c.l.b16 %v154
    %v971 = vunpack.c.h.b16 %v154
    %v972 = vunpack.c.l.b16 %v155
    %v973 = vunpack.c.h.b16 %v155
    %v974 = vunpack.c.l.b16 %v156
    %v975 = vunpack.c.h.b16 %v156
    %v976 = vunpack.c.l.b16 %v157
    %v977 = vunpack.c.h.b16 %v157
    %v978 = vunpack.c.l.b16 %v158
    %v979 = vunpack.c.h.b16 %v158
    %v980 = vunpack.c.l.b16 %v159
    %v981 = vunpack.c.h.b16 %v159
    %v982 = vunpack.c.l.b16 %v160
    %v983 = vunpack.c.h.b16 %v160
    %v984 = vunpack.c.l.b16 %v161
    %v985 = vunpack.c.h.b16 %v161
    %v986 = vunpack.c.l.b16 %v162
    %v987 = vunpack.c.h.b16 %v162
    %v988 = vunpack.c.l.b16 %v163
    %v989 = vunpack.c.h.b16 %v163
    %v990 = vunpack.c.l.b16 %v164
    %v991 = vunpack.c.h.b16 %v164
    %v992 = vunpack.c.l.b16 %v165
    %v993 = vunpack.c.h.b16 %v165
    %v994 = vunpack.c.l.b16 %v166
    %v995 = vunpack.c.h.b16 %v166
    %v996 = vunpack.c.l.b16 %v167
    %v997 = vunpack.c.h.b16 %v167
    %v998 = vunpack.c.l.b16 %v168
    %v999 = vunpack.c.h.b16 %v168
    %v1000 = vunpack.c.l.b16 %v169
    %v1001 = vunpack.c.h.b16 %v169
    %v1002 = vunpack.c.l.b16 %v170
    %v1003 = vunpack.c.h.b16 %v170
    %v1004 = vunpack.c.l.b16 %v171
    %v1005 = vunpack.c.h.b16 %v171
    %v1006 = vunpack.c.l.b16 %v172
    %v1007 = vunpack.c.h.b16 %v172
    %v1008 = vunpack.c.l.b16 %v173
    %v1009 = vunpack.c.h.b16 %v173
    %v1010 = vunpack.c.l.b16 %v174
    %v1011 = vunpack.c.h.b16 %v174
    %v1012 = vunpack.c.l.b16 %v175
    %v1013 = vunpack.c.h.b16 %v175
    %v1014 = vunpack.c.l.b16 %v176
    %v1015 = vunpack.c.h.b16 %v176
    %v1016 = vunpack.c.l.b16 %v177
    %v1017 = vunpack.c.h.b16 %v177
    %v1018 = vunpack.c.l.b16 %v178
    %v1019 = vunpack.c.h.b16 %v178
    %v1020 = vunpack.c.l.b16 %v179
    %v1021 = vunpack.c.h.b16 %v179
    %v1022 = vunpack.c.l.b16 %v180
    %v1023 = vunpack.c.h.b16 %v180
    %v1024 = vunpack.c.l.b16 %v181
    %v1025 = vunpack.c.h.b16 %v181
    %v1026 = vunpack.c.l.b16 %v182
    %v1027 = vunpack.c.h.b16 %v182
    %v1028 = vunpack.c.l.b16 %v183
    %v1029 = vunpack.c.h.b16 %v183
    %v1030 = vunpack.c.l.b16 %v184
    %v1031 = vunpack.c.h.b16 %v184
    %v1032 = vunpack.c.l.b16 %v185
    %v1033 = vunpack.c.h.b16 %v185
    %v1034 = vunpack.c.l.b16 %v186
    %v1035 = vunpack.c.h.b16 %v186
    %v1036 = vunpack.c.l.b16 %v187
    %v1037 = vunpack.c.h.b16 %v187
    %v1038 = vunpack.c.l.b16 %v188
    %v1039 = vunpack.c.h.b16 %v188
    %v1040 = vunpack.c.l.b16 %v189
    %v1041 = vunpack.c.h.b16 %v189
    %v1042 = vunpack.c.l.b16 %v190
    %v1043 = vunpack.c.h.b16 %v190
    %v1044 = vunpack.c.l.b16 %v191
    %v1045 = vunpack.c.h.b16 %v191
    %v1046 = vunpack.c.l.b16 %v192
    %v1047 = vunpack.c.h.b16 %v192
    %v1048 = vunpack.c.l.b16 %v193
    %v1049 = vunpack.c.h.b16 %v193
    %v1050 = vunpack.c.l.b16 %v194
    %v1051 = vunpack.c.h.b16 %v194
    %v1052 = vunpack.c.l.b16 %v195
    %v1053 = vunpack.c.h.b16 %v195
    %v1054 = vunpack.c.l.b16 %v196
    %v1055 = vunpack.c.h.b16 %v196
    %v1056 = vunpack.c.l.b16 %v197
    %v1057 = vunpack.c.h.b16 %v197
    %v1058 = vunpack.c.l.b16 %v198
    %v1059 = vunpack.c.h.b16 %v198
    %v1060 = vunpack.c.l.b16 %v199
    %v1061 = vunpack.c.h.b16 %v199
    %v1062 = vunpack.c.l.b16 %v200
    %v1063 = vunpack.c.h.b16 %v200
    %v1064 = vunpack.c.l.b16 %v201
    %v1065 = vunpack.c.h.b16 %v201
    %v1066 = vunpack.c.l.b16 %v202
    %v1067 = vunpack.c.h.b16 %v202
    %v1068 = vunpack.c.l.b16 %v203
    %v1069 = vunpack.c.h.b16 %v203
    %v1070 = vunpack.c.l.b16 %v204
    %v1071 = vunpack.c.h.b16 %v204
    %v1072 = vunpack.c.l.b16 %v205
    %v1073 = vunpack.c.h.b16 %v205
    %v1074 = vunpack.c.l.b16 %v206
    %v1075 = vunpack.c.h.b16 %v206
    %v1076 = vunpack.c.l.b16 %v207
    %v1077 = vunpack.c.h.b16 %v207
    %v1078 = vunpack.c.l.b16 %v208
    %v1079 = vunpack.c.h.b16 %v208
    %v1080 = vunpack.c.l.b16 %v209
    %v1081 = vunpack.c.h.b16 %v209
    %v1082 = vunpack.c.l.b16 %v210
    %v1083 = vunpack.c.h.b16 %v210
    %v1084 = vunpack.c.l.b16 %v211
    %v1085 = vunpack.c.h.b16 %v211
    %v1086 = vunpack.c.l.b16 %v212
    %v1087 = vunpack.c.h.b16 %v212
    %v1088 = vunpack.c.l.b16 %v213
    %v1089 = vunpack.c.h.b16 %v213
    %v1090 = vpack.c.b16 %v760, %v738
    %v1091 = vpack.c.b16 %v761, %v739
    %v1092 = vpack.c.b16 %v762, %v740
    %v1093 = vpack.c.b16 %v763, %v741
    %v1094 = vpack.c.b16 %v764, %v742
    %v1095 = vpack.c.b16 %v765, %v743
    %v1096 = vpack.c.b16 %v766, %v744
    %v1097 = vpack.c.b16 %v767, %v745
    %v1098 = vpack.c.b16 %v768, %v746
    %v1099 = vpack.c.b16 %v769, %v747
    %v1100 = vpack.c.b16 %v770, %v748
    %v1101 = vpack.c.b16 %v771, %v749
    %v1102 = vpack.c.b16 %v772, %v750
    %v1103 = vpack.c.b16 %v773, %v751
    %v1104 = vpack.c.b16 %v774, %v752
    %v1105 = vpack.c.b16 %v775, %v753
    %v1106 = vpack.c.b16 %v776, %v754
    %v1107 = vpack.c.b16 %v777, %v755
    %v1108 = vpack.c.b16 %v778, %v756
    %v1109 = vpack.c.b16 %v779, %v757
    %v1110 = vpack.c.b16 %v780, %v758
    %v1111 = vpack.c.b16 %v781, %v759
    %v1112 = vpack.c.b16 %v804, %v782
    %v1113 = vpack.c.b16 %v805, %v783
    %v1114 = vpack.c.b16 %v806, %v784
    %v1115 = vpack.c.b16 %v807, %v785
    %v1116 = vpack.c.b16 %v808, %v786
    %v1117 = vpack.c.b16 %v809, %v787
    %v1118 = vpack.c.b16 %v810, %v788
    %v1119 = vpack.c.b16 %v811, %v789
    %v1120 = vpack.c.b16 %v812, %v790
    %v1121 = vpack.c.b16 %v813, %v791
    %v1122 = vpack.c.b16 %v814, %v792
    %v1123 = vpack.c.b16 %v815, %v793
    %v1124 = vpack.c.b16 %v816, %v794
    %v1125 = vpack.c.b16 %v817, %v795
    %v1126 = vpack.c.b16 %v818, %v796
    %v1127 = vpack.c.b16 %v819, %v797
    %v1128 = vpack.c.b16 %v820, %v798
    %v1129 = vpack.c.b16 %v821, %v799
    %v1130 = vpack.c.b16 %v822, %v800
    %v1131 = vpack.c.b16 %v823, %v801
    %v1132 = vpack.c.b16 %v824, %v802
    %v1133 = vpack.c.b16 %v825, %v803
    %v1134 = vpack.c.b16 %v848, %v826
    %v1135 = vpack.c.b16 %v849, %v827
    %v1136 = vpack.c.b16 %v850, %v828
    %v1137 = vpack.c.b16 %v851, %v829
    %v1138 = vpack.c.b16 %v852, %v830
    %v1139 = vpack.c.b16 %v853, %v831
    %v1140 = vpack.c.b16 %v854, %v832
    %v1141 = vpack.c.b16 %v855, %v833
    %v1142 = vpack.c.b16 %v856, %v834
    %v1143 = vpack.c.b16 %v857, %v835
    %v1144 = vpack.c.b16 %v858, %v836
    %v1145 = vpack.c.b16 %v859, %v837
    %v1146 = vpack.c.b16 %v860, %v838
    %v1147 = vpack.c.b16 %v861, %v839
    %v1148 = vpack.c.b16 %v862, %v840
    %v1149 = vpack.c.b16 %v863, %v841
    %v1150 = vpack.c.b16 %v864, %v842
    %v1151 = vpack.c.b16 %v865, %v843
    %v1152 = vpack.c.b16 %v866, %v844
    %v1153 = vpack.c.b16 %v867, %v845
    %v1154 = vpack.c.b16 %v868, %v846
    %v1155 = vpack.c.b16 %v869, %v847
    %v1156 = vpack.c.b16 %v892, %v870
    %v1157 = vpack.c.b16 %v893, %v871
    %v1158 = vpack.c.b16 %v894, %v872
    %v1159 = vpack.c.b16 %v895, %v873
    %v1160 = vpack.c.b16 %v896, %v874
    %v1161 = vpack.c.b16 %v897, %v875
    %v1162 = vpack.c.b16 %v898, %v876
    %v1163 = vpack.c.b16 %v899, %v877
    %v1164 = vpack.c.b16 %v900, %v878
    %v1165 = vpack.c.b16 %v901, %v879
    %v1166 = vpack.c.b16 %v902, %v880
    %v1167 = vpack.c.b16 %v903, %v881
    %v1168 = vpack.c.b16 %v904, %v882
    %v1169 = vpack.c.b16 %v905, %v883
    %v1170 = vpack.c.b16 %v906, %v884
    %v1171 = vpack.c.b16 %v907, %v885
    %v1172 = vpack.c.b16 %v908, %v886
    %v1173 = vpack.c.b16 %v909, %v887
    %v1174 = vpack.c.b16 %v910, %v888
    %v1175 = vpack.c.b16 %v911, %v889
    %v1176 = vpack.c.b16 %v912, %v890
    %v1177 = vpack.c.b16 %v913, %v891
    %v1178 = vpack.c.b16 %v936, %v914
    %v1179 = vpack.c.b16 %v937, %v915
    %v1180 = vpack.c.b16 %v938, %v916
    %v1181 = vpack.c.b16 %v939, %v917
    %v1182 = vpack.c.b16 %v940, %v918
    %v1183 = vpack.c.b16 %v941, %v919
    %v1184 = vpack.c.b16 %v942, %v920
    %v1185 = vpack.c.b16 %v943, %v921
    %v1186 = vpack.c.b16 %v944, %v922
    %v1187 = vpack.c.b16 %v945, %v923
    %v1188 = vpack.c.b16 %v946, %v924
    %v1189 = vpack.c.b16 %v947, %v925
    %v1190 = vpack.c.b16 %v948, %v926
    %v1191 = vpack.c.b16 %v949, %v927
    %v1192 = vpack.c.b16 %v950, %v928
    %v1193 = vpack.c.b16 %v951, %v929
    %v1194 = vpack.c.b16 %v952, %v930
    %v1195 = vpack.c.b16 %v953, %v931
    %v1196 = vpack.c.b16 %v954, %v932
    %v1197 = vpack.c.b16 %v955, %v933
    %v1198 = vpack.c.b16 %v956, %v934
    %v1199 = vpack.c.b16 %v957, %v935
    %v1200 = vpack.c.b16 %v980, %v958
    %v1201 = vpack.c.b16 %v981, %v959
    %v1202 = vpack.c.b16 %v982, %v960
    %v1203 = vpack.c.b16 %v983, %v961
    %v1204 = vpack.c.b16 %v984, %v962
    %v1205 = vpack.c.b16 %v985, %v963
    %v1206 = vpack.c.b16 %v986, %v964
    %v1207 = vpack.c.b16 %v987, %v965
    %v1208 = vpack.c.b16 %v988, %v966
    %v1209 = vpack.c.b16 %v989, %v967
    %v1210 = vpack.c.b16 %v990, %v968
    %v1211 = vpack.c.b16 %v991, %v969
    %v1212 = vpack.c.b16 %v992, %v970
    %v1213 = vpack.c.b16 %v993, %v971
    %v1214 = vpack.c.b16 %v994, %v972
    %v1215 = vpack.c.b16 %v995, %v973
    %v1216 = vpack.c.b16 %v996, %v974
    %v1217 = vpack.c.b16 %v997, %v975
    %v1218 = vpack.c.b16 %v998, %v976
    %v1219 = vpack.c.b16 %v999, %v977
    %v1220 = vpack.c.b16 %v1000, %v978
    %v1221 = vpack.c.b16 %v1001, %v979
    %v1222 = vpack.c.b16 %v1024, %v1002
    %v1223 = vpack.c.b16 %v1025, %v1003
    %v1224 = vpack.c.b16 %v1026, %v1004
    %v1225 = vpack.c.b16 %v1027, %v1005
    %v1226 = vpack.c.b16 %v1028, %v1006
    %v1227 = vpack.c.b16 %v1029, %v1007
    %v1228 = vpack.c.b16 %v1030, %v1008
    %v1229 = vpack.c.b16 %v1031, %v1009
    %v1230 = vpack.c.b16 %v1032, %v1010
    %v1231 = vpack.c.b16 %v1033, %v1011
    %v1232 = vpack.c.b16 %v1034, %v1012
    %v1233 = vpack.c.b16 %v1035, %v1013
    %v1234 = vpack.c.b16 %v1036, %v1014
    %v1235 = vpack.c.b16 %v1037, %v1015
    %v1236 = vpack.c.b16 %v1038, %v1016
    %v1237 = vpack.c.b16 %v1039, %v1017
    %v1238 = vpack.c.b16 %v1040, %v1018
    %v1239 = vpack.c.b16 %v1041, %v1019
    %v1240 = vpack.c.b16 %v1042, %v1020
    %v1241 = vpack.c.b16 %v1043, %v1021
    %v1242 = vpack.c.b16 %v1044, %v1022
    %v1243 = vpack.c.b16 %v1045, %v1023
    %v1244 = vpack.c.b16 %v1068, %v1046
    %v1245 = vpack.c.b16 %v1069, %v1047
    %v1246 = vpack.c.b16 %v1070, %v1048
    %v1247 = vpack.c.b16 %v1071, %v1049
    %v1248 = vpack.c.b16 %v1072, %v1050
    %v1249 = vpack.c.b16 %v1073, %v1051
    %v1250 = vpack.c.b16 %v1074, %v1052
    %v1251 = vpack.c.b16 %v1075, %v1053
    %v1252 = vpack.c.b16 %v1076, %v1054
    %v1253 = vpack.c.b16 %v1077, %v1055
    %v1254 = vpack.c.b16 %v1078, %v1056
    %v1255 = vpack.c.b16 %v1079, %v1057
    %v1256 = vpack.c.b16 %v1080, %v1058
    %v1257 = vpack.c.b16 %v1081, %v1059
    %v1258 = vpack.c.b16 %v1082, %v1060
    %v1259 = vpack.c.b16 %v1083, %v1061
    %v1260 = vpack.c.b16 %v1084, %v1062
    %v1261 = vpack.c.b16 %v1085, %v1063
    %v1262 = vpack.c.b16 %v1086, %v1064
    %v1263 = vpack.c.b16 %v1087, %v1065
    %v1264 = vpack.c.b16 %v1088, %v1066
    %v1265 = vpack.c.b16 %v1089, %v1067
    %v1776 = vunpack.c.l.b16 %v214
    %v1777 = vunpack.c.h.b16 %v214
    %v1778 = vunpack.c.l.b16 %v215
    %v1779 = vunpack.c.h.b16 %v215
    %v1780 = vunpack.c.l.b16 %v216
    %v1781 = vunpack.c.h.b16 %v216
    %v1782 = vunpack.c.l.b16 %v217
    %v1783 = vunpack.c.h.b16 %v217
    %v1784 = vunpack.c.l.b16 %v218
    %v1785 = vunpack.c.h.b16 %v218
    %v1786 = vunpack.c.l.b16 %v219
    %v1787 = vunpack.c.h.b16 %v219
    %v1788 = vunpack.c.l.b16 %v220
    %v1789 = vunpack.c.h.b16 %v220
    %v1790 = vunpack.c.l.b16 %v221
    %v1791 = vunpack.c.h.b16 %v221
    %v1792 = vunpack.c.l.b16 %v222
    %v1793 = vunpack.c.h.b16 %v222
    %v1794 = vunpack.c.l.b16 %v223
    %v1795 = vunpack.c.h.b16 %v223
    %v1796 = vunpack.c.l.b16 %v224
    %v1797 = vunpack.c.h.b16 %v224
    %v1798 = vunpack.c.l.b16 %v225
    %v1799 = vunpack.c.h.b16 %v225
    %v1800 = vunpack.c.l.b16 %v226
    %v1801 = vunpack.c.h.b16 %v226
    %v1802 = vunpack.c.l.b16 %v227
    %v1803 = vunpack.c.h.b16 %v227
    %v1804 = vunpack.c.l.b16 %v228
    %v1805 = vunpack.c.h.b16 %v228
    %v1806 = vunpack.c.l.b16 %v229
    %v1807 = vunpack.c.h.b16 %v229
    %v1808 = vunpack.c.l.b16 %v230
    %v1809 = vunpack.c.h.b16 %v230
    %v1810 = vunpack.c.l.b16 %v231
    %v1811 = vunpack.c.h.b16 %v231
    %v1812 = vunpack.c.l.b16 %v232
    %v1813 = vunpack.c.h.b16 %v232
    %v1814 = vunpack.c.l.b16 %v233
    %v1815 = vunpack.c.h.b16 %v233
    %v1816 = vunpack.c.l.b16 %v234
    %v1817 = vunpack.c.h.b16 %v234
    %v1818 = vunpack.c.l.b16 %v235
    %v1819 = vunpack.c.h.b16 %v235
    %v1820 = vunpack.c.l.b16 %v236
    %v1821 = vunpack.c.h.b16 %v236
    %v1822 = vunpack.c.l.b16 %v237
    %v1823 = vunpack.c.h.b16 %v237
    %v1824 = vunpack.c.l.b16 %v238
    %v1825 = vunpack.c.h.b16 %v238
    %v1826 = vunpack.c.l.b16 %v239
    %v1827 = vunpack.c.h.b16 %v239
    %v1828 = vunpack.c.l.b16 %v240
    %v1829 = vunpack.c.h.b16 %v240
    %v1830 = vunpack.c.l.b16 %v241
    %v1831 = vunpack.c.h.b16 %v241
    %v1832 = vunpack.c.l.b16 %v242
    %v1833 = vunpack.c.h.b16 %v242
    %v1834 = vunpack.c.l.b16 %v243
    %v1835 = vunpack.c.h.b16 %v243
    %v1836 = vunpack.c.l.b16 %v244
    %v1837 = vunpack.c.h.b16 %v244
    %v1838 = vunpack.c.l.b16 %v245
    %v1839 = vunpack.c.h.b16 %v245
    %v1840 = vunpack.c.l.b16 %v246
    %v1841 = vunpack.c.h.b16 %v246
    %v1842 = vunpack.c.l.b16 %v247
    %v1843 = vunpack.c.h.b16 %v247
    %v1844 = vunpack.c.l.b16 %v248
    %v1845 = vunpack.c.h.b16 %v248
    %v1846 = vunpack.c.l.b16 %v249
    %v1847 = vunpack.c.h.b16 %v249
    %v1848 = vunpack.c.l.b16 %v250
    %v1849 = vunpack.c.h.b16 %v250
    %v1850 = vunpack.c.l.b16 %v251
    %v1851 = vunpack.c.h.b16 %v251
    %v1852 = vunpack.c.l.b16 %v252
    %v1853 = vunpack.c.h.b16 %v252
    %v1854 = vunpack.c.l.b16 %v253
    %v1855 = vunpack.c.h.b16 %v253
    %v1856 = vunpack.c.l.b16 %v254
    %v1857 = vunpack.c.h.b16 %v254
    %v1858 = vunpack.c.l.b16 %v255
    %v1859 = vunpack.c.h.b16 %v255
    %v1860 = vunpack.c.l.b16 %v256
    %v1861 = vunpack.c.h.b16 %v256
    %v1862 = vunpack.c.l.b16 %v257
    %v1863 = vunpack.c.h.b16 %v257
    %v1864 = vunpack.c.l.b16 %v258
    %v1865 = vunpack.c.h.b16 %v258
    %v1866 = vunpack.c.l.b16 %v259
    %v1867 = vunpack.c.h.b16 %v259
    %v1868 = vunpack.c.l.b16 %v260
    %v1869 = vunpack.c.h.b16 %v260
    %v1870 = vunpack.c.l.b16 %v261
    %v1871 = vunpack.c.h.b16 %v261
    %v1872 = vunpack.c.l.b16 %v262
    %v1873 = vunpack.c.h.b16 %v262
    %v1874 = vunpack.c.l.b16 %v263
    %v1875 = vunpack.c.h.b16 %v263
    %v1876 = vunpack.c.l.b16 %v264
    %v1877 = vunpack.c.h.b16 %v264
    %v1878 = vunpack.c.l.b16 %v265
    %v1879 = vunpack.c.h.b16 %v265
    %v1880 = vunpack.c.l.b16 %v266
    %v1881 = vunpack.c.h.b16 %v266
    %v1882 = vunpack.c.l.b16 %v267
    %v1883 = vunpack.c.h.b16 %v267
    %v1884 = vunpack.c.l.b16 %v268
    %v1885 = vunpack.c.h.b16 %v268
    %v1886 = vunpack.c.l.b16 %v269
    %v1887 = vunpack.c.h.b16 %v269
    %v1888 = vunpack.c.l.b16 %v270
    %v1889 = vunpack.c.h.b16 %v270
    %v1890 = vunpack.c.l.b16 %v271
    %v1891 = vunpack.c.h.b16 %v271
    %v1892 = vunpack.c.l.b16 %v272
    %v1893 = vunpack.c.h.b16 %v272
    %v1894 = vunpack.c.l.b16 %v273
    %v1895 = vunpack.c.h.b16 %v273
    %v1896 = vunpack.c.l.b16 %v274
    %v1897 = vunpack.c.h.b16 %v274
    %v1898 = vunpack.c.l.b16 %v275
    %v1899 = vunpack.c.h.b16 %v275
    %v1900 = vunpack.c.l.b16 %v276
    %v1901 = vunpack.c.h.b16 %v276
    %v1902 = vunpack.c.l.b16 %v277
    %v1903 = vunpack.c.h.b16 %v277
    %v1904 = vunpack.c.l.b16 %v278
    %v1905 = vunpack.c.h.b16 %v278
    %v1906 = vunpack.c.l.b16 %v279
    %v1907 = vunpack.c.h.b16 %v279
    %v1908 = vunpack.c.l.b16 %v280
    %v1909 = vunpack.c.h.b16 %v280
    %v1910 = vunpack.c.l.b16 %v281
    %v1911 = vunpack.c.h.b16 %v281
    %v1912 = vunpack.c.l.b16 %v282
    %v1913 = vunpack.c.h.b16 %v282
    %v1914 = vunpack.c.l.b16 %v283
    %v1915 = vunpack.c.h.b16 %v283
    %v1916 = vunpack.c.l.b16 %v284
    %v1917 = vunpack.c.h.b16 %v284
    %v1918 = vunpack.c.l.b16 %v285
    %v1919 = vunpack.c.h.b16 %v285
    %v1920 = vunpack.c.l.b16 %v286
    %v1921 = vunpack.c.h.b16 %v286
    %v1922 = vunpack.c.l.b16 %v287
    %v1923 = vunpack.c.h.b16 %v287
    %v1924 = vunpack.c.l.b16 %v288
    %v1925 = vunpack.c.h.b16 %v288
    %v1926 = vunpack.c.l.b16 %v289
    %v1927 = vunpack.c.h.b16 %v289
    %v1928 = vunpack.c.l.b16 %v290
    %v1929 = vunpack.c.h.b16 %v290
    %v1930 = vunpack.c.l.b16 %v291
    %v1931 = vunpack.c.h.b16 %v291
    %v1932 = vunpack.c.l.b16 %v292
    %v1933 = vunpack.c.h.b16 %v292
    %v1934 = vunpack.c.l.b16 %v293
    %v1935 = vunpack.c.h.b16 %v293
    %v1936 = vunpack.c.l.b16 %v294
    %v1937 = vunpack.c.h.b16 %v294
    %v1938 = vunpack.c.l.b16 %v295
    %v1939 = vunpack.c.h.b16 %v295
    %v1940 = vunpack.c.l.b16 %v296
    %v1941 = vunpack.c.h.b16 %v296
    %v1942 = vunpack.c.l.b16 %v297
    %v1943 = vunpack.c.h.b16 %v297
    %v1944 = vunpack.c.l.b16 %v298
    %v1945 = vunpack.c.h.b16 %v298
    %v1946 = vunpack.c.l.b16 %v299
    %v1947 = vunpack.c.h.b16 %v299
    %v1948 = vunpack.c.l.b16 %v300
    %v1949 = vunpack.c.h.b16 %v300
    %v1950 = vunpack.c.l.b16 %v301
    %v1951 = vunpack.c.h.b16 %v301
    %v1952 = vunpack.c.l.b16 %v302
    %v1953 = vunpack.c.h.b16 %v302
    %v1954 = vunpack.c.l.b16 %v303
    %v1955 = vunpack.c.h.b16 %v303
    %v1956 = vunpack.c.l.b16 %v304
    %v1957 = vunpack.c.h.b16 %v304
    %v1958 = vunpack.c.l.b16 %v305
    %v1959 = vunpack.c.h.b16 %v305
    %v1960 = vunpack.c.l.b16 %v306
    %v1961 = vunpack.c.h.b16 %v306
    %v1962 = vunpack.c.l.b16 %v307
    %v1963 = vunpack.c.h.b16 %v307
    %v1964 = vunpack.c.l.b16 %v308
    %v1965 = vunpack.c.h.b16 %v308
    %v1966 = vunpack.c.l.b16 %v309
    %v1967 = vunpack.c.h.b16 %v309
    %v1968 = vunpack.c.l.b16 %v310
    %v1969 = vunpack.c.h.b16 %v310
    %v1970 = vunpack.c.l.b16 %v311
    %v1971 = vunpack.c.h.b16 %v311
    %v1972 = vunpack.c.l.b16 %v312
    %v1973 = vunpack.c.h.b16 %v312
    %v1974 = vunpack.c.l.b16 %v313
    %v1975 = vunpack.c.h.b16 %v313
    %v1976 = vunpack.c.l.b16 %v314
    %v1977 = vunpack.c.h.b16 %v314
    %v1978 = vunpack.c.l.b16 %v315
    %v1979 = vunpack.c.h.b16 %v315
    %v1980 = vunpack.c.l.b16 %v316
    %v1981 = vunpack.c.h.b16 %v316
    %v1982 = vunpack.c.l.b16 %v317
    %v1983 = vunpack.c.h.b16 %v317
    %v1984 = vunpack.c.l.b16 %v318
    %v1985 = vunpack.c.h.b16 %v318
    %v1986 = vunpack.c.l.b16 %v319
    %v1987 = vunpack.c.h.b16 %v319
    %v1988 = vunpack.c.l.b16 %v320
    %v1989 = vunpack.c.h.b16 %v320
    %v1990 = vunpack.c.l.b16 %v321
    %v1991 = vunpack.c.h.b16 %v321
    %v1992 = vunpack.c.l.b16 %v322
    %v1993 = vunpack.c.h.b16 %v322
    %v1994 = vunpack.c.l.b16 %v323
    %v1995 = vunpack.c.h.b16 %v323
    %v1996 = vunpack.c.l.b16 %v324
    %v1997 = vunpack.c.h.b16 %v324
    %v1998 = vunpack.c.l.b16 %v325
    %v1999 = vunpack.c.h.b16 %v325
    %v2000 = vunpack.c.l.b16 %v326
    %v2001 = vunpack.c.h.b16 %v326
    %v2002 = vunpack.c.l.b16 %v327
    %v2003 = vunpack.c.h.b16 %v327
    %v2004 = vunpack.c.l.b16 %v328
    %v2005 = vunpack.c.h.b16 %v328
    %v2006 = vunpack.c.l.b16 %v329
    %v2007 = vunpack.c.h.b16 %v329
    %v2008 = vunpack.c.l.b16 %v330
    %v2009 = vunpack.c.h.b16 %v330
    %v2010 = vunpack.c.l.b16 %v331
    %v2011 = vunpack.c.h.b16 %v331
    %v2012 = vunpack.c.l.b16 %v332
    %v2013 = vunpack.c.h.b16 %v332
    %v2014 = vunpack.c.l.b16 %v333
    %v2015 = vunpack.c.h.b16 %v333
    %v2016 = vunpack.c.l.b16 %v334
    %v2017 = vunpack.c.h.b16 %v334
    %v2018 = vunpack.c.l.b16 %v335
    %v2019 = vunpack.c.h.b16 %v335
    %v2020 = vunpack.c.l.b16 %v336
    %v2021 = vunpack.c.h.b16 %v336
    %v2022 = vunpack.c.l.b16 %v337
    %v2023 = vunpack.c.h.b16 %v337
    %v2024 = vunpack.c.l.b16 %v338
    %v2025 = vunpack.c.h.b16 %v338
    %v2026 = vunpack.c.l.b16 %v339
    %v2027 = vunpack.c.h.b16 %v339
    %v2028 = vunpack.c.l.b16 %v340
    %v2029 = vunpack.c.h.b16 %v340
    %v2030 = vunpack.c.l.b16 %v341
    %v2031 = vunpack.c.h.b16 %v341
    %v2032 = vunpack.c.l.b16 %v342
    %v2033 = vunpack.c.h.b16 %v342
    %v2034 = vunpack.c.l.b16 %v343
    %v2035 = vunpack.c.h.b16 %v343
    %v2036 = vunpack.c.l.b16 %v344
    %v2037 = vunpack.c.h.b16 %v344
    %v2038 = vunpack.c.l.b16 %v345
    %v2039 = vunpack.c.h.b16 %v345
    %v2040 = vunpack.c.l.b16 %v346
    %v2041 = vunpack.c.h.b16 %v346
    %v2042 = vunpack.c.l.b16 %v347
    %v2043 = vunpack.c.h.b16 %v347
    %v2044 = vunpack.c.l.b16 %v348
    %v2045 = vunpack.c.h.b16 %v348
    %v2046 = vunpack.c.l.b16 %v349
    %v2047 = vunpack.c.h.b16 %v349
    %v2048 = vunpack.c.l.b16 %v350
    %v2049 = vunpack.c.h.b16 %v350
    %v2050 = vunpack.c.l.b16 %v351
    %v2051 = vunpack.c.h.b16 %v351
    %v2052 = vunpack.c.l.b16 %v352
    %v2053 = vunpack.c.h.b16 %v352
    %v2054 = vunpack.c.l.b16 %v353
    %v2055 = vunpack.c.h.b16 %v353
    %v2056 = vunpack.c.l.b16 %v354
    %v2057 = vunpack.c.h.b16 %v354
    %v2058 = vunpack.c.l.b16 %v355
    %v2059 = vunpack.c.h.b16 %v355
    %v2060 = vunpack.c.l.b16 %v356
    %v2061 = vunpack.c.h.b16 %v356
    %v2062 = vunpack.c.l.b16 %v357
    %v2063 = vunpack.c.h.b16 %v357
    %v2064 = vunpack.c.l.b16 %v358
    %v2065 = vunpack.c.h.b16 %v358
    %v2066 = vunpack.c.l.b16 %v359
    %v2067 = vunpack.c.h.b16 %v359
    %v2068 = vunpack.c.l.b16 %v360
    %v2069 = vunpack.c.h.b16 %v360
    %v2070 = vunpack.c.l.b16 %v361
    %v2071 = vunpack.c.h.b16 %v361
    %v2072 = vunpack.c.l.b16 %v362
    %v2073 = vunpack.c.h.b16 %v362
    %v2074 = vunpack.c.l.b16 %v363
    %v2075 = vunpack.c.h.b16 %v363
    %v2076 = vunpack.c.l.b16 %v364
    %v2077 = vunpack.c.h.b16 %v364
    %v2078 = vunpack.c.l.b16 %v365
    %v2079 = vunpack.c.h.b16 %v365
    %v2080 = vunpack.c.l.b16 %v366
    %v2081 = vunpack.c.h.b16 %v366
    %v2082 = vunpack.c.l.b16 %v367
    %v2083 = vunpack.c.h.b16 %v367
    %v2084 = vunpack.c.l.b16 %v368
    %v2085 = vunpack.c.h.b16 %v368
    %v2086 = vunpack.c.l.b16 %v369
    %v2087 = vunpack.c.h.b16 %v369
    %v2088 = vunpack.c.l.b16 %v370
    %v2089 = vunpack.c.h.b16 %v370
    %v2090 = vunpack.c.l.b16 %v371
    %v2091 = vunpack.c.h.b16 %v371
    %v2092 = vunpack.c.l.b16 %v372
    %v2093 = vunpack.c.h.b16 %v372
    %v2094 = vunpack.c.l.b16 %v373
    %v2095 = vunpack.c.h.b16 %v373
    %v2096 = vunpack.c.l.b16 %v374
    %v2097 = vunpack.c.h.b16 %v374
    %v2098 = vunpack.c.l.b16 %v375
    %v2099 = vunpack.c.h.b16 %v375
    %v2100 = vunpack.c.l.b16 %v376
    %v2101 = vunpack.c.h.b16 %v376
    %v2102 = vunpack.c.l.b16 %v377
    %v2103 = vunpack.c.h.b16 %v377
    %v2104 = vunpack.c.l.b16 %v378
    %v2105 = vunpack.c.h.b16 %v378
    %v2106 = vunpack.c.l.b16 %v379
    %v2107 = vunpack.c.h.b16 %v379
    %v2108 = vunpack.c.l.b16 %v380
    %v2109 = vunpack.c.h.b16 %v380
    %v2110 = vunpack.c.l.b16 %v381
    %v2111 = vunpack.c.h.b16 %v381
    %v2112 = vunpack.c.l.b16 %v382
    %v2113 = vunpack.c.h.b16 %v382
    %v2114 = vunpack.c.l.b16 %v383
    %v2115 = vunpack.c.h.b16 %v383
    %v2116 = vunpack.c.l.b16 %v384
    %v2117 = vunpack.c.h.b16 %v384
    %v2118 = vunpack.c.l.b16 %v385
    %v2119 = vunpack.c.h.b16 %v385
    %v2120 = vunpack.c.l.b16 %v386
    %v2121 = vunpack.c.h.b16 %v386
    %v2122 = vunpack.c.l.b16 %v387
    %v2123 = vunpack.c.h.b16 %v387
    %v2124 = vunpack.c.l.b16 %v388
    %v2125 = vunpack.c.h.b16 %v388
    %v2126 = vunpack.c.l.b16 %v389
    %v2127 = vunpack.c.h.b16 %v389
    %v2128 = vunpack.c.l.b16 %v390
    %v2129 = vunpack.c.h.b16 %v390
    %v2130 = vunpack.c.l.b16 %v391
    %v2131 = vunpack.c.h.b16 %v391
    %v2132 = vunpack.c.l.b16 %v392
    %v2133 = vunpack.c.h.b16 %v392
    %v2134 = vunpack.c.l.b16 %v393
    %v2135 = vunpack.c.h.b16 %v393
    %v2136 = vunpack.c.l.b16 %v394
    %v2137 = vunpack.c.h.b16 %v394
    %v2138 = vunpack.c.l.b16 %v395
    %v2139 = vunpack.c.h.b16 %v395
    %v2140 = vunpack.c.l.b16 %v396
    %v2141 = vunpack.c.h.b16 %v396
    %v2142 = vunpack.c.l.b16 %v397
    %v2143 = vunpack.c.h.b16 %v397
    %v2144 = vunpack.c.l.b16 %v398
    %v2145 = vunpack.c.h.b16 %v398
    %v2146 = vunpack.c.l.b16 %v399
    %v2147 = vunpack.c.h.b16 %v399
    %v2148 = vunpack.c.l.b16 %v400
    %v2149 = vunpack.c.h.b16 %v400
    %v2150 = vunpack.c.l.b16 %v401
    %v2151 = vunpack.c.h.b16 %v401
    %v2152 = vunpack.c.l.b16 %v402
    %v2153 = vunpack.c.h.b16 %v402
    %v2154 = vunpack.c.l.b16 %v403
    %v2155 = vunpack.c.h.b16 %v403
    %v2156 = vunpack.c.l.b16 %v404
    %v2157 = vunpack.c.h.b16 %v404
    %v2158 = vunpack.c.l.b16 %v405
    %v2159 = vunpack.c.h.b16 %v405
    %v2160 = vunpack.c.l.b16 %v406
    %v2161 = vunpack.c.h.b16 %v406
    %v2162 = vunpack.c.l.b16 %v407
    %v2163 = vunpack.c.h.b16 %v407
    %v2164 = vunpack.c.l.b16 %v408
    %v2165 = vunpack.c.h.b16 %v408
    %v2166 = vunpack.c.l.b16 %v409
    %v2167 = vunpack.c.h.b16 %v409
    %v2168 = vunpack.c.l.b16 %v410
    %v2169 = vunpack.c.h.b16 %v410
    %v2170 = vunpack.c.l.b16 %v411
    %v2171 = vunpack.c.h.b16 %v411
    %v2172 = vunpack.c.l.b16 %v412
    %v2173 = vunpack.c.h.b16 %v412
    %v2174 = vunpack.c.l.b16 %v413
    %v2175 = vunpack.c.h.b16 %v413
    %v2176 = vunpack.c.l.b16 %v414
    %v2177 = vunpack.c.h.b16 %v414
    %v2178 = vunpack.c.l.b16 %v415
    %v2179 = vunpack.c.h.b16 %v415
    %v2180 = vunpack.c.l.b16 %v416
    %v2181 = vunpack.c.h.b16 %v416
    %v2182 = vunpack.c.l.b16 %v417
    %v2183 = vunpack.c.h.b16 %v417
    %v2184 = vunpack.c.l.b16 %v418
    %v2185 = vunpack.c.h.b16 %v418
    %v2186 = vunpack.c.l.b16 %v419
    %v2187 = vunpack.c.h.b16 %v419
    %v2188 = vunpack.c.l.b16 %v420
    %v2189 = vunpack.c.h.b16 %v420
    %v2190 = vunpack.c.l.b16 %v421
    %v2191 = vunpack.c.h.b16 %v421
    %v2192 = vunpack.c.l.b16 %v422
    %v2193 = vunpack.c.h.b16 %v422
    %v2194 = vunpack.c.l.b16 %v423
    %v2195 = vunpack.c.h.b16 %v423
    %v2196 = vunpack.c.l.b16 %v424
    %v2197 = vunpack.c.h.b16 %v424
    %v2198 = vunpack.c.l.b16 %v425
    %v2199 = vunpack.c.h.b16 %v425
    %v2200 = vunpack.c.l.b16 %v426
    %v2201 = vunpack.c.h.b16 %v426
    %v2202 = vunpack.c.l.b16 %v427
    %v2203 = vunpack.c.h.b16 %v427
    %v2204 = vunpack.c.l.b16 %v428
    %v2205 = vunpack.c.h.b16 %v428
    %v2206 = vunpack.c.l.b16 %v429
    %v2207 = vunpack.c.h.b16 %v429
    %v2208 = vunpack.c.l.b16 %v430
    %v2209 = vunpack.c.h.b16 %v430
    %v2210 = vunpack.c.l.b16 %v431
    %v2211 = vunpack.c.h.b16 %v431
    %v2212 = vunpack.c.l.b16 %v432
    %v2213 = vunpack.c.h.b16 %v432
    %v2214 = vunpack.c.l.b16 %v433
    %v2215 = vunpack.c.h.b16 %v433
    %v2216 = vunpack.c.l.b16 %v434
    %v2217 = vunpack.c.h.b16 %v434
    %v2218 = vunpack.c.l.b16 %v435
    %v2219 = vunpack.c.h.b16 %v435
    %v2220 = vunpack.c.l.b16 %v436
    %v2221 = vunpack.c.h.b16 %v436
    %v2222 = vunpack.c.l.b16 %v437
    %v2223 = vunpack.c.h.b16 %v437
    %v2224 = vunpack.c.l.b16 %v438
    %v2225 = vunpack.c.h.b16 %v438
    %v2226 = vunpack.c.l.b16 %v439
    %v2227 = vunpack.c.h.b16 %v439
    %v2228 = vunpack.c.l.b16 %v440
    %v2229 = vunpack.c.h.b16 %v440
    %v2230 = vunpack.c.l.b16 %v441
    %v2231 = vunpack.c.h.b16 %v441
    %v2232 = vunpack.c.l.b16 %v442
    %v2233 = vunpack.c.h.b16 %v442
    %v2234 = vunpack.c.l.b16 %v443
    %v2235 = vunpack.c.h.b16 %v443
    %v2236 = vunpack.c.l.b16 %v444
    %v2237 = vunpack.c.h.b16 %v444
    %v2238 = vunpack.c.l.b16 %v445
    %v2239 = vunpack.c.h.b16 %v445
    %v2240 = vunpack.c.l.b16 %v446
    %v2241 = vunpack.c.h.b16 %v446
    %v2242 = vunpack.c.l.b16 %v447
    %v2243 = vunpack.c.h.b16 %v447
    %v2244 = vunpack.c.l.b16 %v448
    %v2245 = vunpack.c.h.b16 %v448
    %v2246 = vunpack.c.l.b16 %v449
    %v2247 = vunpack.c.h.b16 %v449
    %v2248 = vunpack.c.l.b16 %v450
    %v2249 = vunpack.c.h.b16 %v450
    %v2250 = vunpack.c.l.b16 %v451
    %v2251 = vunpack.c.h.b16 %v451
    %v2252 = vunpack.c.l.b16 %v452
    %v2253 = vunpack.c.h.b16 %v452
    %v2254 = vunpack.c.l.b16 %v453
    %v2255 = vunpack.c.h.b16 %v453
    %v2256 = vunpack.c.l.b16 %v454
    %v2257 = vunpack.c.h.b16 %v454
    %v2258 = vunpack.c.l.b16 %v455
    %v2259 = vunpack.c.h.b16 %v455
    %v2260 = vunpack.c.l.b16 %v456
    %v2261 = vunpack.c.h.b16 %v456
    %v2262 = vunpack.c.l.b16 %v457
    %v2263 = vunpack.c.h.b16 %v457
    %v2264 = vunpack.c.l.b16 %v458
    %v2265 = vunpack.c.h.b16 %v458
    %v2266 = vunpack.c.l.b16 %v459
    %v2267 = vunpack.c.h.b16 %v459
    %v2268 = vunpack.c.l.b16 %v460
    %v2269 = vunpack.c.h.b16 %v460
    %v2270 = vunpack.c.l.b16 %v461
    %v2271 = vunpack.c.h.b16 %v461
    %v2272 = vunpack.c.l.b16 %v462
    %v2273 = vunpack.c.h.b16 %v462
    %v2274 = vunpack.c.l.b16 %v463
    %v2275 = vunpack.c.h.b16 %v463
    %v2276 = vunpack.c.l.b16 %v464
    %v2277 = vunpack.c.h.b16 %v464
    %v2278 = vunpack.c.l.b16 %v465
    %v2279 = vunpack.c.h.b16 %v465
    %v2280 = vunpack.c.l.b16 %v466
    %v2281 = vunpack.c.h.b16 %v466
    %v2282 = vunpack.c.l.b16 %v467
    %v2283 = vunpack.c.h.b16 %v467
    %v2284 = vunpack.c.l.b16 %v468
    %v2285 = vunpack.c.h.b16 %v468
    %v2286 = vunpack.c.l.b16 %v469
    %v2287 = vunpack.c.h.b16 %v469
    %v2288 = vunpack.c.l.b16 %v470
    %v2289 = vunpack.c.h.b16 %v470
    %v2290 = vunpack.c.l.b16 %v471
    %v2291 = vunpack.c.h.b16 %v471
    %v2292 = vunpack.c.l.b16 %v472
    %v2293 = vunpack.c.h.b16 %v472
    %v2294 = vunpack.c.l.b16 %v473
    %v2295 = vunpack.c.h.b16 %v473
    %v2296 = vunpack.c.l.b16 %v474
    %v2297 = vunpack.c.h.b16 %v474
    %v2298 = vunpack.c.l.b16 %v475
    %v2299 = vunpack.c.h.b16 %v475
    %v2300 = vunpack.c.l.b16 %v476
    %v2301 = vunpack.c.h.b16 %v476
    %v2302 = vunpack.c.l.b16 %v477
    %v2303 = vunpack.c.h.b16 %v477
    %v2304 = vunpack.c.l.b16 %v478
    %v2305 = vunpack.c.h.b16 %v478
    %v2306 = vunpack.c.l.b16 %v479
    %v2307 = vunpack.c.h.b16 %v479
    %v2308 = vunpack.c.l.b16 %v480
    %v2309 = vunpack.c.h.b16 %v480
    %v2310 = vunpack.c.l.b16 %v481
    %v2311 = vunpack.c.h.b16 %v481
    %v2312 = vunpack.c.l.b16 %v482
    %v2313 = vunpack.c.h.b16 %v482
    %v2314 = vunpack.c.l.b16 %v483
    %v2315 = vunpack.c.h.b16 %v483
    %v2316 = vunpack.c.l.b16 %v484
    %v2317 = vunpack.c.h.b16 %v484
    %v2318 = vunpack.c.l.b16 %v485
    %v2319 = vunpack.c.h.b16 %v485
    %v2320 = vunpack.c.l.b16 %v486
    %v2321 = vunpack.c.h.b16 %v486
    %v2322 = vunpack.c.l.b16 %v487
    %v2323 = vunpack.c.h.b16 %v487
    %v2324 = vunpack.c.l.b16 %v488
    %v2325 = vunpack.c.h.b16 %v488
    %v2326 = vunpack.c.l.b16 %v489
    %v2327 = vunpack.c.h.b16 %v489
    %v2328 = vunpack.c.l.b16 %v490
    %v2329 = vunpack.c.h.b16 %v490
    %v2330 = vunpack.c.l.b16 %v491
    %v2331 = vunpack.c.h.b16 %v491
    %v2332 = vunpack.c.l.b16 %v492
    %v2333 = vunpack.c.h.b16 %v492
    %v2334 = vunpack.c.l.b16 %v493
    %v2335 = vunpack.c.h.b16 %v493
    %v2336 = vunpack.c.l.b16 %v494
    %v2337 = vunpack.c.h.b16 %v494
    %v2338 = vunpack.c.l.b16 %v495
    %v2339 = vunpack.c.h.b16 %v495
    %v2340 = vunpack.c.l.b16 %v496
    %v2341 = vunpack.c.h.b16 %v496
    %v2342 = vunpack.c.l.b16 %v497
    %v2343 = vunpack.c.h.b16 %v497
    %v2344 = vunpack.c.l.b16 %v498
    %v2345 = vunpack.c.h.b16 %v498
    %v2346 = vunpack.c.l.b16 %v499
    %v2347 = vunpack.c.h.b16 %v499
    %v2348 = vunpack.c.l.b16 %v500
    %v2349 = vunpack.c.h.b16 %v500
    %v2350 = vunpack.c.l.b16 %v501
    %v2351 = vunpack.c.h.b16 %v501
    %v2352 = vunpack.c.l.b16 %v502
    %v2353 = vunpack.c.h.b16 %v502
    %v2354 = vunpack.c.l.b16 %v503
    %v2355 = vunpack.c.h.b16 %v503
    %v2356 = vunpack.c.l.b16 %v504
    %v2357 = vunpack.c.h.b16 %v504
    %v2358 = vunpack.c.l.b16 %v505
    %v2359 = vunpack.c.h.b16 %v505
    %v2360 = vunpack.c.l.b16 %v506
    %v2361 = vunpack.c.h.b16 %v506
    %v2362 = vunpack.c.l.b16 %v507
    %v2363 = vunpack.c.h.b16 %v507
    %v2364 = vunpack.c.l.b16 %v508
    %v2365 = vunpack.c.h.b16 %v508
    %v2366 = vunpack.c.l.b16 %v509
    %v2367 = vunpack.c.h.b16 %v509
    %v2368 = vunpack.c.l.b16 %v510
    %v2369 = vunpack.c.h.b16 %v510
    %v2370 = vunpack.c.l.b16 %v511
    %v2371 = vunpack.c.h.b16 %v511
    %v2372 = vunpack.c.l.b16 %v512
    %v2373 = vunpack.c.h.b16 %v512
    %v2374 = vunpack.c.l.b16 %v513
    %v2375 = vunpack.c.h.b16 %v513
    %v2376 = vunpack.c.l.b16 %v514
    %v2377 = vunpack.c.h.b16 %v514
    %v2378 = vunpack.c.l.b16 %v515
    %v2379 = vunpack.c.h.b16 %v515
    %v2380 = vunpack.c.l.b16 %v516
    %v2381 = vunpack.c.h.b16 %v516
    %v2382 = vunpack.c.l.b16 %v517
    %v2383 = vunpack.c.h.b16 %v517
    %v2384 = vunpack.c.l.b16 %v518
    %v2385 = vunpack.c.h.b16 %v518
    %v2386 = vunpack.c.l.b16 %v519
    %v2387 = vunpack.c.h.b16 %v519
    %v2388 = vunpack.c.l.b16 %v520
    %v2389 = vunpack.c.h.b16 %v520
    %v2390 = vunpack.c.l.b16 %v521
    %v2391 = vunpack.c.h.b16 %v521
    %v2392 = vunpack.c.l.b16 %v522
    %v2393 = vunpack.c.h.b16 %v522
    %v2394 = vunpack.c.l.b16 %v523
    %v2395 = vunpack.c.h.b16 %v523
    %v2396 = vunpack.c.l.b16 %v524
    %v2397 = vunpack.c.h.b16 %v524
    %v2398 = vunpack.c.l.b16 %v525
    %v2399 = vunpack.c.h.b16 %v525
    %v2400 = vunpack.c.l.b16 %v526
    %v2401 = vunpack.c.h.b16 %v526
    %v2402 = vunpack.c.l.b16 %v527
    %v2403 = vunpack.c.h.b16 %v527
    %v2404 = vunpack.c.l.b16 %v528
    %v2405 = vunpack.c.h.b16 %v528
    %v2406 = vunpack.c.l.b16 %v529
    %v2407 = vunpack.c.h.b16 %v529
    %v2408 = vunpack.c.l.b16 %v530
    %v2409 = vunpack.c.h.b16 %v530
    %v2410 = vunpack.c.l.b16 %v531
    %v2411 = vunpack.c.h.b16 %v531
    %v2412 = vunpack.c.l.b16 %v532
    %v2413 = vunpack.c.h.b16 %v532
    %v2414 = vunpack.c.l.b16 %v533
    %v2415 = vunpack.c.h.b16 %v533
    %v2416 = vunpack.c.l.b16 %v534
    %v2417 = vunpack.c.h.b16 %v534
    %v2418 = vunpack.c.l.b16 %v535
    %v2419 = vunpack.c.h.b16 %v535
    %v2420 = vunpack.c.l.b16 %v536
    %v2421 = vunpack.c.h.b16 %v536
    %v2422 = vunpack.c.l.b16 %v537
    %v2423 = vunpack.c.h.b16 %v537
    %v2424 = vunpack.c.l.b16 %v538
    %v2425 = vunpack.c.h.b16 %v538
    %v2426 = vunpack.c.l.b16 %v539
    %v2427 = vunpack.c.h.b16 %v539
    %v2428 = vunpack.c.l.b16 %v540
    %v2429 = vunpack.c.h.b16 %v540
    %v2430 = vunpack.c.l.b16 %v541
    %v2431 = vunpack.c.h.b16 %v541
    %v2432 = vunpack.c.l.b16 %v542
    %v2433 = vunpack.c.h.b16 %v542
    %v2434 = vunpack.c.l.b16 %v543
    %v2435 = vunpack.c.h.b16 %v543
    %v2436 = vunpack.c.l.b16 %v544
    %v2437 = vunpack.c.h.b16 %v544
    %v2438 = vunpack.c.l.b16 %v545
    %v2439 = vunpack.c.h.b16 %v545
    %v2440 = vunpack.c.l.b16 %v546
    %v2441 = vunpack.c.h.b16 %v546
    %v2442 = vunpack.c.l.b16 %v547
    %v2443 = vunpack.c.h.b16 %v547
    %v2444 = vunpack.c.l.b16 %v548
    %v2445 = vunpack.c.h.b16 %v548
    %v2446 = vunpack.c.l.b16 %v549
    %v2447 = vunpack.c.h.b16 %v549
    %v2448 = vunpack.c.l.b16 %v550
    %v2449 = vunpack.c.h.b16 %v550
    %v2450 = vunpack.c.l.b16 %v551
    %v2451 = vunpack.c.h.b16 %v551
    %v2452 = vunpack.c.l.b16 %v552
    %v2453 = vunpack.c.h.b16 %v552
    %v2454 = vunpack.c.l.b16 %v553
    %v2455 = vunpack.c.h.b16 %v553
    %v2456 = vunpack.c.l.b16 %v554
    %v2457 = vunpack.c.h.b16 %v554
    %v2458 = vunpack.c.l.b16 %v555
    %v2459 = vunpack.c.h.b16 %v555
    %v2460 = vpack.c.b16 %v1778, %v1776
    %v2461 = vpack.c.b16 %v1779, %v1777
    %v2462 = vpack.c.b16 %v1782, %v1780
    %v2463 = vpack.c.b16 %v1783, %v1781
    %v2464 = vpack.c.b16 %v1786, %v1784
    %v2465 = vpack.c.b16 %v1787, %v1785
    %v2466 = vpack.c.b16 %v1790, %v1788
    %v2467 = vpack.c.b16 %v1791, %v1789
    %v2468 = vpack.c.b16 %v1794, %v1792
    %v2469 = vpack.c.b16 %v1795, %v1793
    %v2470 = vpack.c.b16 %v1798, %v1796
    %v2471 = vpack.c.b16 %v1799, %v1797
    %v2472 = vpack.c.b16 %v1802, %v1800
    %v2473 = vpack.c.b16 %v1803, %v1801
    %v2474 = vpack.c.b16 %v1806, %v1804
    %v2475 = vpack.c.b16 %v1807, %v1805
    %v2476 = vpack.c.b16 %v1810, %v1808
    %v2477 = vpack.c.b16 %v1811, %v1809
    %v2478 = vpack.c.b16 %v1814, %v1812
    %v2479 = vpack.c.b16 %v1815, %v1813
    %v2480 = vpack.c.b16 %v1818, %v1816
    %v2481 = vpack.c.b16 %v1819, %v1817
    %v2482 = vpack.c.b16 %v1822, %v1820
    %v2483 = vpack.c.b16 %v1823, %v1821
    %v2484 = vpack.c.b16 %v1826, %v1824
    %v2485 = vpack.c.b16 %v1827, %v1825
    %v2486 = vpack.c.b16 %v1830, %v1828
    %v2487 = vpack.c.b16 %v1831, %v1829
    %v2488 = vpack.c.b16 %v1834, %v1832
    %v2489 = vpack.c.b16 %v1835, %v1833
    %v2490 = vpack.c.b16 %v1838, %v1836
    %v2491 = vpack.c.b16 %v1839, %v1837
    %v2492 = vpack.c.b16 %v1842, %v1840
    %v2493 = vpack.c.b16 %v1843, %v1841
    %v2494 = vpack.c.b16 %v1846, %v1844
    %v2495 = vpack.c.b16 %v1847, %v1845
    %v2496 = vpack.c.b16 %v1850, %v1848
    %v2497 = vpack.c.b16 %v1851, %v1849
    %v2498 = vpack.c.b16 %v1854, %v1852
    %v2499 = vpack.c.b16 %v1855, %v1853
    %v2500 = vpack.c.b16 %v1858, %v1856
    %v2501 = vpack.c.b16 %v1859, %v1857
    %v2502 = vpack.c.b16 %v1862, %v1860
    %v2503 = vpack.c.b16 %v1863, %v1861
    %v2504 = vpack.c.b16 %v1866, %v1864
    %v2505 = vpack.c.b16 %v1867, %v1865
    %v2506 = vpack.c.b16 %v1870, %v1868
    %v2507 = vpack.c.b16 %v1871, %v1869
    %v2508 = vpack.c.b16 %v1874, %v1872
    %v2509 = vpack.c.b16 %v1875, %v1873
    %v2510 = vpack.c.b16 %v1878, %v1876
    %v2511 = vpack.c.b16 %v1879, %v1877
    %v2512 = vpack.c.b16 %v1882, %v1880
    %v2513 = vpack.c.b16 %v1883, %v1881
    %v2514 = vpack.c.b16 %v1886, %v1884
    %v2515 = vpack.c.b16 %v1887, %v1885
    %v2516 = vpack.c.b16 %v1890, %v1888
    %v2517 = vpack.c.b16 %v1891, %v1889
    %v2518 = vpack.c.b16 %v1894, %v1892
    %v2519 = vpack.c.b16 %v1895, %v1893
    %v2520 = vpack.c.b16 %v1898, %v1896
    %v2521 = vpack.c.b16 %v1899, %v1897
    %v2522 = vpack.c.b16 %v1902, %v1900
    %v2523 = vpack.c.b16 %v1903, %v1901
    %v2524 = vpack.c.b16 %v1906, %v1904
    %v2525 = vpack.c.b16 %v1907, %v1905
    %v2526 = vpack.c.b16 %v1910, %v1908
    %v2527 = vpack.c.b16 %v1911, %v1909
    %v2528 = vpack.c.b16 %v1914, %v1912
    %v2529 = vpack.c.b16 %v1915, %v1913
    %v2530 = vpack.c.b16 %v1918, %v1916
    %v2531 = vpack.c.b16 %v1919, %v1917
    %v2532 = vpack.c.b16 %v1922, %v1920
    %v2533 = vpack.c.b16 %v1923, %v1921
    %v2534 = vpack.c.b16 %v1926, %v1924
    %v2535 = vpack.c.b16 %v1927, %v1925
    %v2536 = vpack.c.b16 %v1930, %v1928
    %v2537 = vpack.c.b16 %v1931, %v1929
    %v2538 = vpack.c.b16 %v1934, %v1932
    %v2539 = vpack.c.b16 %v1935, %v1933
    %v2540 = vpack.c.b16 %v1938, %v1936
    %v2541 = vpack.c.b16 %v1939, %v1937
    %v2542 = vpack.c.b16 %v1942, %v1940
    %v2543 = vpack.c.b16 %v1943, %v1941
    %v2544 = vpack.c.b16 %v1946, %v1944
    %v2545 = vpack.c.b16 %v1947, %v1945
    %v2546 = vpack.c.b16 %v1950, %v1948
    %v2547 = vpack.c.b16 %v1951, %v1949
    %v2548 = vpack.c.b16 %v1954, %v1952
    %v2549 = vpack.c.b16 %v1955, %v1953
    %v2550 = vpack.c.b16 %v1958, %v1956
    %v2551 = vpack.c.b16 %v1959, %v1957
    %v2552 = vpack.c.b16 %v1962, %v1960
    %v2553 = vpack.c.b16 %v1963, %v1961
    %v2554 = vpack.c.b16 %v1966, %v1964
    %v2555 = vpack.c.b16 %v1967, %v1965
    %v2556 = vpack.c.b16 %v1970, %v1968
    %v2557 = vpack.c.b16 %v1971, %v1969
    %v2558 = vpack.c.b16 %v1974, %v1972
    %v2559 = vpack.c.b16 %v1975, %v1973
    %v2560 = vpack.c.b16 %v1978, %v1976
    %v2561 = vpack.c.b16 %v1979, %v1977
    %v2562 = vpack.c.b16 %v1982, %v1980
    %v2563 = vpack.c.b16 %v1983, %v1981
    %v2564 = vpack.c.b16 %v1986, %v1984
    %v2565 = vpack.c.b16 %v1987, %v1985
    %v2566 = vpack.c.b16 %v1990, %v1988
    %v2567 = vpack.c.b16 %v1991, %v1989
    %v2568 = vpack.c.b16 %v1994, %v1992
    %v2569 = vpack.c.b16 %v1995, %v1993
    %v2570 = vpack.c.b16 %v1998, %v1996
    %v2571 = vpack.c.b16 %v1999, %v1997
    %v2572 = vpack.c.b16 %v2002, %v2000
    %v2573 = vpack.c.b16 %v2003, %v2001
    %v2574 = vpack.c.b16 %v2006, %v2004
    %v2575 = vpack.c.b16 %v2007, %v2005
    %v2576 = vpack.c.b16 %v2010, %v2008
    %v2577 = vpack.c.b16 %v2011, %v2009
    %v2578 = vpack.c.b16 %v2014, %v2012
    %v2579 = vpack.c.b16 %v2015, %v2013
    %v2580 = vpack.c.b16 %v2018, %v2016
    %v2581 = vpack.c.b16 %v2019, %v2017
    %v2582 = vpack.c.b16 %v2022, %v2020
    %v2583 = vpack.c.b16 %v2023, %v2021
    %v2584 = vpack.c.b16 %v2026, %v2024
    %v2585 = vpack.c.b16 %v2027, %v2025
    %v2586 = vpack.c.b16 %v2030, %v2028
    %v2587 = vpack.c.b16 %v2031, %v2029
    %v2588 = vpack.c.b16 %v2034, %v2032
    %v2589 = vpack.c.b16 %v2035, %v2033
    %v2590 = vpack.c.b16 %v2038, %v2036
    %v2591 = vpack.c.b16 %v2039, %v2037
    %v2592 = vpack.c.b16 %v2042, %v2040
    %v2593 = vpack.c.b16 %v2043, %v2041
    %v2594 = vpack.c.b16 %v2046, %v2044
    %v2595 = vpack.c.b16 %v2047, %v2045
    %v2596 = vpack.c.b16 %v2050, %v2048
    %v2597 = vpack.c.b16 %v2051, %v2049
    %v2598 = vpack.c.b16 %v2054, %v2052
    %v2599 = vpack.c.b16 %v2055, %v2053
    %v2600 = vpack.c.b16 %v2058, %v2056
    %v2601 = vpack.c.b16 %v2059, %v2057
    %v2602 = vpack.c.b16 %v2062, %v2060
    %v2603 = vpack.c.b16 %v2063, %v2061
    %v2604 = vpack.c.b16 %v2066, %v2064
    %v2605 = vpack.c.b16 %v2067, %v2065
    %v2606 = vpack.c.b16 %v2070, %v2068
    %v2607 = vpack.c.b16 %v2071, %v2069
    %v2608 = vpack.c.b16 %v2074, %v2072
    %v2609 = vpack.c.b16 %v2075, %v2073
    %v2610 = vpack.c.b16 %v2078, %v2076
    %v2611 = vpack.c.b16 %v2079, %v2077
    %v2612 = vpack.c.b16 %v2082, %v2080
    %v2613 = vpack.c.b16 %v2083, %v2081
    %v2614 = vpack.c.b16 %v2086, %v2084
    %v2615 = vpack.c.b16 %v2087, %v2085
    %v2616 = vpack.c.b16 %v2090, %v2088
    %v2617 = vpack.c.b16 %v2091, %v2089
    %v2618 = vpack.c.b16 %v2094, %v2092
    %v2619 = vpack.c.b16 %v2095, %v2093
    %v2620 = vpack.c.b16 %v2098, %v2096
    %v2621 = vpack.c.b16 %v2099, %v2097
    %v2622 = vpack.c.b16 %v2102, %v2100
    %v2623 = vpack.c.b16 %v2103, %v2101
    %v2624 = vpack.c.b16 %v2106, %v2104
    %v2625 = vpack.c.b16 %v2107, %v2105
    %v2626 = vpack.c.b16 %v2110, %v2108
    %v2627 = vpack.c.b16 %v2111, %v2109
    %v2628 = vpack.c.b16 %v2114, %v2112
    %v2629 = vpack.c.b16 %v2115, %v2113
    %v2630 = vpack.c.b16 %v2118, %v2116
    %v2631 = vpack.c.b16 %v2119, %v2117
    %v2632 = vpack.c.b16 %v2122, %v2120
    %v2633 = vpack.c.b16 %v2123, %v2121
    %v2634 = vpack.c.b16 %v2126, %v2124
    %v2635 = vpack.c.b16 %v2127, %v2125
    %v2636 = vpack.c.b16 %v2130, %v2128
    %v2637 = vpack.c.b16 %v2131, %v2129
    %v2638 = vpack.c.b16 %v2134, %v2132
    %v2639 = vpack.c.b16 %v2135, %v2133
    %v2640 = vpack.c.b16 %v2138, %v2136
    %v2641 = vpack.c.b16 %v2139, %v2137
    %v2642 = vpack.c.b16 %v2142, %v2140
    %v2643 = vpack.c.b16 %v2143, %v2141
    %v2644 = vpack.c.b16 %v2146, %v2144
    %v2645 = vpack.c.b16 %v2147, %v2145
    %v2646 = vpack.c.b16 %v2150, %v2148
    %v2647 = vpack.c.b16 %v2151, %v2149
    %v2648 = vpack.c.b16 %v2154, %v2152
    %v2649 = vpack.c.b16 %v2155, %v2153
    %v2650 = vpack.c.b16 %v2158, %v2156
    %v2651 = vpack.c.b16 %v2159, %v2157
    %v2652 = vpack.c.b16 %v2162, %v2160
    %v2653 = vpack.c.b16 %v2163, %v2161
    %v2654 = vpack.c.b16 %v2166, %v2164
    %v2655 = vpack.c.b16 %v2167, %v2165
    %v2656 = vpack.c.b16 %v2170, %v2168
    %v2657 = vpack.c.b16 %v2171, %v2169
    %v2658 = vpack.c.b16 %v2174, %v2172
    %v2659 = vpack.c.b16 %v2175, %v2173
    %v2660 = vpack.c.b16 %v2178, %v2176
    %v2661 = vpack.c.b16 %v2179, %v2177
    %v2662 = vpack.c.b16 %v2182, %v2180
    %v2663 = vpack.c.b16 %v2183, %v2181
    %v2664 = vpack.c.b16 %v2186, %v2184
    %v2665 = vpack.c.b16 %v2187, %v2185
    %v2666 = vpack.c.b16 %v2190, %v2188
    %v2667 = vpack.c.b16 %v2191, %v2189
    %v2668 = vpack.c.b16 %v2194, %v2192
    %v2669 = vpack.c.b16 %v2195, %v2193
    %v2670 = vpack.c.b16 %v2198, %v2196
    %v2671 = vpack.c.b16 %v2199, %v2197
    %v2672 = vpack.c.b16 %v2202, %v2200
    %v2673 = vpack.c.b16 %v2203, %v2201
    %v2674 = vpack.c.b16 %v2206, %v2204
    %v2675 = vpack.c.b16 %v2207, %v2205
    %v2676 = vpack.c.b16 %v2210, %v2208
    %v2677 = vpack.c.b16 %v2211, %v2209
    %v2678 = vpack.c.b16 %v2214, %v2212
    %v2679 = vpack.c.b16 %v2215, %v2213
    %v2680 = vpack.c.b16 %v2218, %v2216
    %v2681 = vpack.c.b16 %v2219, %v2217
    %v2682 = vpack.c.b16 %v2222, %v2220
    %v2683 = vpack.c.b16 %v2223, %v2221
    %v2684 = vpack.c.b16 %v2226, %v2224
    %v2685 = vpack.c.b16 %v2227, %v2225
    %v2686 = vpack.c.b16 %v2230, %v2228
    %v2687 = vpack.c.b16 %v2231, %v2229
    %v2688 = vpack.c.b16 %v2234, %v2232
    %v2689 = vpack.c.b16 %v2235, %v2233
    %v2690 = vpack.c.b16 %v2238, %v2236
    %v2691 = vpack.c.b16 %v2239, %v2237
    %v2692 = vpack.c.b16 %v2242, %v2240
    %v2693 = vpack.c.b16 %v2243, %v2241
    %v2694 = vpack.c.b16 %v2246, %v2244
    %v2695 = vpack.c.b16 %v2247, %v2245
    %v2696 = vpack.c.b16 %v2250, %v2248
    %v2697 = vpack.c.b16 %v2251, %v2249
    %v2698 = vpack.c.b16 %v2254, %v2252
    %v2699 = vpack.c.b16 %v2255, %v2253
    %v2700 = vpack.c.b16 %v2258, %v2256
    %v2701 = vpack.c.b16 %v2259, %v2257
    %v2702 = vpack.c.b16 %v2262, %v2260
    %v2703 = vpack.c.b16 %v2263, %v2261
    %v2704 = vpack.c.b16 %v2266, %v2264
    %v2705 = vpack.c.b16 %v2267, %v2265
    %v2706 = vpack.c.b16 %v2270, %v2268
    %v2707 = vpack.c.b16 %v2271, %v2269
    %v2708 = vpack.c.b16 %v2274, %v2272
    %v2709 = vpack.c.b16 %v2275, %v2273
    %v2710 = vpack.c.b16 %v2278, %v2276
    %v2711 = vpack.c.b16 %v2279, %v2277
    %v2712 = vpack.c.b16 %v2282, %v2280
    %v2713 = vpack.c.b16 %v2283, %v2281
    %v2714 = vpack.c.b16 %v2286, %v2284
    %v2715 = vpack.c.b16 %v2287, %v2285
    %v2716 = vpack.c.b16 %v2290, %v2288
    %v2717 = vpack.c.b16 %v2291, %v2289
    %v2718 = vpack.c.b16 %v2294, %v2292
    %v2719 = vpack.c.b16 %v2295, %v2293
    %v2720 = vpack.c.b16 %v2298, %v2296
    %v2721 = vpack.c.b16 %v2299, %v2297
    %v2722 = vpack.c.b16 %v2302, %v2300
    %v2723 = vpack.c.b16 %v2303, %v2301
    %v2724 = vpack.c.b16 %v2306, %v2304
    %v2725 = vpack.c.b16 %v2307, %v2305
    %v2726 = vpack.c.b16 %v2310, %v2308
    %v2727 = vpack.c.b16 %v2311, %v2309
    %v2728 = vpack.c.b16 %v2314, %v2312
    %v2729 = vpack.c.b16 %v2315, %v2313
    %v2730 = vpack.c.b16 %v2318, %v2316
    %v2731 = vpack.c.b16 %v2319, %v2317
    %v2732 = vpack.c.b16 %v2322, %v2320
    %v2733 = vpack.c.b16 %v2323, %v2321
    %v2734 = vpack.c.b16 %v2326, %v2324
    %v2735 = vpack.c.b16 %v2327, %v2325
    %v2736 = vpack.c.b16 %v2330, %v2328
    %v2737 = vpack.c.b16 %v2331, %v2329
    %v2738 = vpack.c.b16 %v2334, %v2332
    %v2739 = vpack.c.b16 %v2335, %v2333
    %v2740 = vpack.c.b16 %v2338, %v2336
    %v2741 = vpack.c.b16 %v2339, %v2337
    %v2742 = vpack.c.b16 %v2342, %v2340
    %v2743 = vpack.c.b16 %v2343, %v2341
    %v2744 = vpack.c.b16 %v2346, %v2344
    %v2745 = vpack.c.b16 %v2347, %v2345
    %v2746 = vpack.c.b16 %v2350, %v2348
    %v2747 = vpack.c.b16 %v2351, %v2349
    %v2748 = vpack.c.b16 %v2354, %v2352
    %v2749 = vpack.c.b16 %v2355, %v2353
    %v2750 = vpack.c.b16 %v2358, %v2356
    %v2751 = vpack.c.b16 %v2359, %v2357
    %v2752 = vpack.c.b16 %v2362, %v2360
    %v2753 = vpack.c.b16 %v2363, %v2361
    %v2754 = vpack.c.b16 %v2366, %v2364
    %v2755 = vpack.c.b16 %v2367, %v2365
    %v2756 = vpack.c.b16 %v2370, %v2368
    %v2757 = vpack.c.b16 %v2371, %v2369
    %v2758 = vpack.c.b16 %v2374, %v2372
    %v2759 = vpack.c.b16 %v2375, %v2373
    %v2760 = vpack.c.b16 %v2378, %v2376
    %v2761 = vpack.c.b16 %v2379, %v2377
    %v2762 = vpack.c.b16 %v2382, %v2380
    %v2763 = vpack.c.b16 %v2383, %v2381
    %v2764 = vpack.c.b16 %v2386, %v2384
    %v2765 = vpack.c.b16 %v2387, %v2385
    %v2766 = vpack.c.b16 %v2390, %v2388
    %v2767 = vpack.c.b16 %v2391, %v2389
    %v2768 = vpack.c.b16 %v2394, %v2392
    %v2769 = vpack.c.b16 %v2395, %v2393
    %v2770 = vpack.c.b16 %v2398, %v2396
    %v2771 = vpack.c.b16 %v2399, %v2397
    %v2772 = vpack.c.b16 %v2402, %v2400
    %v2773 = vpack.c.b16 %v2403, %v2401
    %v2774 = vpack.c.b16 %v2406, %v2404
    %v2775 = vpack.c.b16 %v2407, %v2405
    %v2776 = vpack.c.b16 %v2410, %v2408
    %v2777 = vpack.c.b16 %v2411, %v2409
    %v2778 = vpack.c.b16 %v2414, %v2412
    %v2779 = vpack.c.b16 %v2415, %v2413
    %v2780 = vpack.c.b16 %v2418, %v2416
    %v2781 = vpack.c.b16 %v2419, %v2417
    %v2782 = vpack.c.b16 %v2422, %v2420
    %v2783 = vpack.c.b16 %v2423, %v2421
    %v2784 = vpack.c.b16 %v2426, %v2424
    %v2785 = vpack.c.b16 %v2427, %v2425
    %v2786 = vpack.c.b16 %v2430, %v2428
    %v2787 = vpack.c.b16 %v2431, %v2429
    %v2788 = vpack.c.b16 %v2434, %v2432
    %v2789 = vpack.c.b16 %v2435, %v2433
    %v2790 = vpack.c.b16 %v2438, %v2436
    %v2791 = vpack.c.b16 %v2439, %v2437
    %v2792 = vpack.c.b16 %v2442, %v2440
    %v2793 = vpack.c.b16 %v2443, %v2441
    %v2794 = vpack.c.b16 %v2446, %v2444
    %v2795 = vpack.c.b16 %v2447, %v2445
    %v2796 = vpack.c.b16 %v2450, %v2448
    %v2797 = vpack.c.b16 %v2451, %v2449
    %v2798 = vpack.c.b16 %v2454, %v2452
    %v2799 = vpack.c.b16 %v2455, %v2453
    %v2800 = vpack.c.b16 %v2458, %v2456
    %v2801 = vpack.c.b16 %v2459, %v2457
    %vm3144 = vcmask 392192
    %v3146 = vsel %vm3144, %v1111, 0
    %v3149 = vsel %vm3144, %v1133, 0
    %v3152 = vsel %vm3144, %v1155, 0
    %v3155 = vsel %vm3144, %v1177, 0
    %v3158 = vsel %vm3144, %v1199, 0
    %v3161 = vsel %vm3144, %v1221, 0
    %v3164 = vsel %vm3144, %v1243, 0
    %v3167 = vsel %vm3144, %v1265, 0
    %3169 = vmatpush.bf16.msra.mxu0 %v2474
    %3170 = vmatpush.bf16.msra.mxu0 %v2472
    %3171 = vmatpush.bf16.msra.mxu0 %v2470
    %3172 = vmatpush.bf16.msra.mxu0 %v2468
    %3173 = vmatpush.bf16.msra.mxu0 %v2466
    %3174 = vmatpush.bf16.msra.mxu0 %v2464
    %3175 = vmatpush.bf16.msra.mxu0 %v2462
    %3176 = vmatpush.bf16.msra.mxu0 %v2460
    %3177 = vmatmul.bf16.gmra.mxu0 %v1090
    %v3178 = vpop.f32.mrf.mxu0
    %v3179 = vadd.f32 %v558, %v3178
    %v3180 = vpop.f32.mrf.mxu0
    %v3181 = vadd.f32 %v558, %v3180
    %3182 = vmatmul.bf16.gmra.mxu0 %v1112
    %v3183 = vpop.f32.mrf.mxu0
    %v3184 = vadd.f32 %v558, %v3183
    %v3185 = vpop.f32.mrf.mxu0
    %v3186 = vadd.f32 %v558, %v3185
    %3187 = vmatmul.bf16.gmra.mxu0 %v1134
    %v3188 = vpop.f32.mrf.mxu0
    %v3189 = vadd.f32 %v558, %v3188
    %v3190 = vpop.f32.mrf.mxu0
    %v3191 = vadd.f32 %v558, %v3190
    %3192 = vmatmul.bf16.gmra.mxu0 %v1156
    %v3193 = vpop.f32.mrf.mxu0
    %v3194 = vadd.f32 %v558, %v3193
    %v3195 = vpop.f32.mrf.mxu0
    %v3196 = vadd.f32 %v558, %v3195
    %3197 = vmatmul.bf16.gmra.mxu0 %v1178
    %v3198 = vpop.f32.mrf.mxu0
    %v3199 = vadd.f32 %v558, %v3198
    %v3200 = vpop.f32.mrf.mxu0
    %v3201 = vadd.f32 %v558, %v3200
    %3202 = vmatmul.bf16.gmra.mxu0 %v1200
    %v3203 = vpop.f32.mrf.mxu0
    %v3204 = vadd.f32 %v558, %v3203
    %v3205 = vpop.f32.mrf.mxu0
    %v3206 = vadd.f32 %v558, %v3205
    %3207 = vmatmul.bf16.gmra.mxu0 %v1222
    %v3208 = vpop.f32.mrf.mxu0
    %v3209 = vadd.f32 %v558, %v3208
    %v3210 = vpop.f32.mrf.mxu0
    %v3211 = vadd.f32 %v558, %v3210
    %3212 = vmatmul.bf16.gmra.mxu0 %v1244
    %v3213 = vpop.f32.mrf.mxu0
    %v3214 = vadd.f32 %v558, %v3213
    %v3215 = vpop.f32.mrf.mxu0
    %v3216 = vadd.f32 %v558, %v3215
    %3217 = vdwg.mxu0
    %3218 = vmatpush.bf16.msra.mxu0 %v2490
    %3219 = vmatpush.bf16.msra.mxu0 %v2488
    %3220 = vmatpush.bf16.msra.mxu0 %v2486
    %3221 = vmatpush.bf16.msra.mxu0 %v2484
    %3222 = vmatpush.bf16.msra.mxu0 %v2482
    %3223 = vmatpush.bf16.msra.mxu0 %v2480
    %3224 = vmatpush.bf16.msra.mxu0 %v2478
    %3225 = vmatpush.bf16.msra.mxu0 %v2476
    %3226 = vmatmul.bf16.gmra.mxu0 %v1091
    %v3227 = vpop.f32.mrf.mxu0
    %v3228 = vadd.f32 %v3179, %v3227
    %v3229 = vpop.f32.mrf.mxu0
    %v3230 = vadd.f32 %v3181, %v3229
    %3231 = vmatmul.bf16.gmra.mxu0 %v1113
    %v3232 = vpop.f32.mrf.mxu0
    %v3233 = vadd.f32 %v3184, %v3232
    %v3234 = vpop.f32.mrf.mxu0
    %v3235 = vadd.f32 %v3186, %v3234
    %3236 = vmatmul.bf16.gmra.mxu0 %v1135
    %v3237 = vpop.f32.mrf.mxu0
    %v3238 = vadd.f32 %v3189, %v3237
    %v3239 = vpop.f32.mrf.mxu0
    %v3240 = vadd.f32 %v3191, %v3239
    %3241 = vmatmul.bf16.gmra.mxu0 %v1157
    %v3242 = vpop.f32.mrf.mxu0
    %v3243 = vadd.f32 %v3194, %v3242
    %v3244 = vpop.f32.mrf.mxu0
    %v3245 = vadd.f32 %v3196, %v3244
    %3246 = vmatmul.bf16.gmra.mxu0 %v1179
    %v3247 = vpop.f32.mrf.mxu0
    %v3248 = vadd.f32 %v3199, %v3247
    %v3249 = vpop.f32.mrf.mxu0
    %v3250 = vadd.f32 %v3201, %v3249
    %3251 = vmatmul.bf16.gmra.mxu0 %v1201
    %v3252 = vpop.f32.mrf.mxu0
    %v3253 = vadd.f32 %v3204, %v3252
    %v3254 = vpop.f32.mrf.mxu0
    %v3255 = vadd.f32 %v3206, %v3254
    %3256 = vmatmul.bf16.gmra.mxu0 %v1223
    %v3257 = vpop.f32.mrf.mxu0
    %v3258 = vadd.f32 %v3209, %v3257
    %v3259 = vpop.f32.mrf.mxu0
    %v3260 = vadd.f32 %v3211, %v3259
    %3261 = vmatmul.bf16.gmra.mxu0 %v1245
    %v3262 = vpop.f32.mrf.mxu0
    %v3263 = vadd.f32 %v3214, %v3262
    %v3264 = vpop.f32.mrf.mxu0
    %v3265 = vadd.f32 %v3216, %v3264
    %3266 = vdwg.mxu0
    %3267 = vmatpush.bf16.msra.mxu0 %v2506
    %3268 = vmatpush.bf16.msra.mxu0 %v2504
    %3269 = vmatpush.bf16.msra.mxu0 %v2502
    %3270 = vmatpush.bf16.msra.mxu0 %v2500
    %3271 = vmatpush.bf16.msra.mxu0 %v2498
    %3272 = vmatpush.bf16.msra.mxu0 %v2496
    %3273 = vmatpush.bf16.msra.mxu0 %v2494
    %3274 = vmatpush.bf16.msra.mxu0 %v2492
    %3275 = vmatmul.bf16.gmra.mxu0 %v1092
    %v3276 = vpop.f32.mrf.mxu0
    %v3277 = vadd.f32 %v3228, %v3276
    %v3278 = vpop.f32.mrf.mxu0
    %v3279 = vadd.f32 %v3230, %v3278
    %3280 = vmatmul.bf16.gmra.mxu0 %v1114
    %v3281 = vpop.f32.mrf.mxu0
    %v3282 = vadd.f32 %v3233, %v3281
    %v3283 = vpop.f32.mrf.mxu0
    %v3284 = vadd.f32 %v3235, %v3283
    %3285 = vmatmul.bf16.gmra.mxu0 %v1136
    %v3286 = vpop.f32.mrf.mxu0
    %v3287 = vadd.f32 %v3238, %v3286
    %v3288 = vpop.f32.mrf.mxu0
    %v3289 = vadd.f32 %v3240, %v3288
    %3290 = vmatmul.bf16.gmra.mxu0 %v1158
    %v3291 = vpop.f32.mrf.mxu0
    %v3292 = vadd.f32 %v3243, %v3291
    %v3293 = vpop.f32.mrf.mxu0
    %v3294 = vadd.f32 %v3245, %v3293
    %3295 = vmatmul.bf16.gmra.mxu0 %v1180
    %v3296 = vpop.f32.mrf.mxu0
    %v3297 = vadd.f32 %v3248, %v3296
    %v3298 = vpop.f32.mrf.mxu0
    %v3299 = vadd.f32 %v3250, %v3298
    %3300 = vmatmul.bf16.gmra.mxu0 %v1202
    %v3301 = vpop.f32.mrf.mxu0
    %v3302 = vadd.f32 %v3253, %v3301
    %v3303 = vpop.f32.mrf.mxu0
    %v3304 = vadd.f32 %v3255, %v3303
    %3305 = vmatmul.bf16.gmra.mxu0 %v1224
    %v3306 = vpop.f32.mrf.mxu0
    %v3307 = vadd.f32 %v3258, %v3306
    %v3308 = vpop.f32.mrf.mxu0
    %v3309 = vadd.f32 %v3260, %v3308
    %3310 = vmatmul.bf16.gmra.mxu0 %v1246
    %v3311 = vpop.f32.mrf.mxu0
    %v3312 = vadd.f32 %v3263, %v3311
    %v3313 = vpop.f32.mrf.mxu0
    %v3314 = vadd.f32 %v3265, %v3313
    %3315 = vdwg.mxu0
    %3316 = vmatpush.bf16.msra.mxu0 %v2522
    %3317 = vmatpush.bf16.msra.mxu0 %v2520
    %3318 = vmatpush.bf16.msra.mxu0 %v2518
    %3319 = vmatpush.bf16.msra.mxu0 %v2516
    %3320 = vmatpush.bf16.msra.mxu0 %v2514
    %3321 = vmatpush.bf16.msra.mxu0 %v2512
    %3322 = vmatpush.bf16.msra.mxu0 %v2510
    %3323 = vmatpush.bf16.msra.mxu0 %v2508
    %3324 = vmatmul.bf16.gmra.mxu0 %v1093
    %v3325 = vpop.f32.mrf.mxu0
    %v3326 = vadd.f32 %v3277, %v3325
    %v3327 = vpop.f32.mrf.mxu0
    %v3328 = vadd.f32 %v3279, %v3327
    %3329 = vmatmul.bf16.gmra.mxu0 %v1115
    %v3330 = vpop.f32.mrf.mxu0
    %v3331 = vadd.f32 %v3282, %v3330
    %v3332 = vpop.f32.mrf.mxu0
    %v3333 = vadd.f32 %v3284, %v3332
    %3334 = vmatmul.bf16.gmra.mxu0 %v1137
    %v3335 = vpop.f32.mrf.mxu0
    %v3336 = vadd.f32 %v3287, %v3335
    %v3337 = vpop.f32.mrf.mxu0
    %v3338 = vadd.f32 %v3289, %v3337
    %3339 = vmatmul.bf16.gmra.mxu0 %v1159
    %v3340 = vpop.f32.mrf.mxu0
    %v3341 = vadd.f32 %v3292, %v3340
    %v3342 = vpop.f32.mrf.mxu0
    %v3343 = vadd.f32 %v3294, %v3342
    %3344 = vmatmul.bf16.gmra.mxu0 %v1181
    %v3345 = vpop.f32.mrf.mxu0
    %v3346 = vadd.f32 %v3297, %v3345
    %v3347 = vpop.f32.mrf.mxu0
    %v3348 = vadd.f32 %v3299, %v3347
    %3349 = vmatmul.bf16.gmra.mxu0 %v1203
    %v3350 = vpop.f32.mrf.mxu0
    %v3351 = vadd.f32 %v3302, %v3350
    %v3352 = vpop.f32.mrf.mxu0
    %v3353 = vadd.f32 %v3304, %v3352
    %3354 = vmatmul.bf16.gmra.mxu0 %v1225
    %v3355 = vpop.f32.mrf.mxu0
    %v3356 = vadd.f32 %v3307, %v3355
    %v3357 = vpop.f32.mrf.mxu0
    %v3358 = vadd.f32 %v3309, %v3357
    %3359 = vmatmul.bf16.gmra.mxu0 %v1247
    %v3360 = vpop.f32.mrf.mxu0
    %v3361 = vadd.f32 %v3312, %v3360
    %v3362 = vpop.f32.mrf.mxu0
    %v3363 = vadd.f32 %v3314, %v3362
    %3364 = vdwg.mxu0
    %3365 = vmatpush.bf16.msra.mxu0 %v2538
    %3366 = vmatpush.bf16.msra.mxu0 %v2536
    %3367 = vmatpush.bf16.msra.mxu0 %v2534
    %3368 = vmatpush.bf16.msra.mxu0 %v2532
    %3369 = vmatpush.bf16.msra.mxu0 %v2530
    %3370 = vmatpush.bf16.msra.mxu0 %v2528
    %3371 = vmatpush.bf16.msra.mxu0 %v2526
    %3372 = vmatpush.bf16.msra.mxu0 %v2524
    %3373 = vmatmul.bf16.gmra.mxu0 %v1094
    %v3374 = vpop.f32.mrf.mxu0
    %v3375 = vadd.f32 %v3326, %v3374
    %v3376 = vpop.f32.mrf.mxu0
    %v3377 = vadd.f32 %v3328, %v3376
    %3378 = vmatmul.bf16.gmra.mxu0 %v1116
    %v3379 = vpop.f32.mrf.mxu0
    %v3380 = vadd.f32 %v3331, %v3379
    %v3381 = vpop.f32.mrf.mxu0
    %v3382 = vadd.f32 %v3333, %v3381
    %3383 = vmatmul.bf16.gmra.mxu0 %v1138
    %v3384 = vpop.f32.mrf.mxu0
    %v3385 = vadd.f32 %v3336, %v3384
    %v3386 = vpop.f32.mrf.mxu0
    %v3387 = vadd.f32 %v3338, %v3386
    %3388 = vmatmul.bf16.gmra.mxu0 %v1160
    %v3389 = vpop.f32.mrf.mxu0
    %v3390 = vadd.f32 %v3341, %v3389
    %v3391 = vpop.f32.mrf.mxu0
    %v3392 = vadd.f32 %v3343, %v3391
    %3393 = vmatmul.bf16.gmra.mxu0 %v1182
    %v3394 = vpop.f32.mrf.mxu0
    %v3395 = vadd.f32 %v3346, %v3394
    %v3396 = vpop.f32.mrf.mxu0
    %v3397 = vadd.f32 %v3348, %v3396
    %3398 = vmatmul.bf16.gmra.mxu0 %v1204
    %v3399 = vpop.f32.mrf.mxu0
    %v3400 = vadd.f32 %v3351, %v3399
    %v3401 = vpop.f32.mrf.mxu0
    %v3402 = vadd.f32 %v3353, %v3401
    %3403 = vmatmul.bf16.gmra.mxu0 %v1226
    %v3404 = vpop.f32.mrf.mxu0
    %v3405 = vadd.f32 %v3356, %v3404
    %v3406 = vpop.f32.mrf.mxu0
    %v3407 = vadd.f32 %v3358, %v3406
    %3408 = vmatmul.bf16.gmra.mxu0 %v1248
    %v3409 = vpop.f32.mrf.mxu0
    %v3410 = vadd.f32 %v3361, %v3409
    %v3411 = vpop.f32.mrf.mxu0
    %v3412 = vadd.f32 %v3363, %v3411
    %3413 = vdwg.mxu0
    %3414 = vmatpush.bf16.msra.mxu0 %v2554
    %3415 = vmatpush.bf16.msra.mxu0 %v2552
    %3416 = vmatpush.bf16.msra.mxu0 %v2550
    %3417 = vmatpush.bf16.msra.mxu0 %v2548
    %3418 = vmatpush.bf16.msra.mxu0 %v2546
    %3419 = vmatpush.bf16.msra.mxu0 %v2544
    %3420 = vmatpush.bf16.msra.mxu0 %v2542
    %3421 = vmatpush.bf16.msra.mxu0 %v2540
    %3422 = vmatmul.bf16.gmra.mxu0 %v1095
    %v3423 = vpop.f32.mrf.mxu0
    %v3424 = vadd.f32 %v3375, %v3423
    %v3425 = vpop.f32.mrf.mxu0
    %v3426 = vadd.f32 %v3377, %v3425
    %3427 = vmatmul.bf16.gmra.mxu0 %v1117
    %v3428 = vpop.f32.mrf.mxu0
    %v3429 = vadd.f32 %v3380, %v3428
    %v3430 = vpop.f32.mrf.mxu0
    %v3431 = vadd.f32 %v3382, %v3430
    %3432 = vmatmul.bf16.gmra.mxu0 %v1139
    %v3433 = vpop.f32.mrf.mxu0
    %v3434 = vadd.f32 %v3385, %v3433
    %v3435 = vpop.f32.mrf.mxu0
    %v3436 = vadd.f32 %v3387, %v3435
    %3437 = vmatmul.bf16.gmra.mxu0 %v1161
    %v3438 = vpop.f32.mrf.mxu0
    %v3439 = vadd.f32 %v3390, %v3438
    %v3440 = vpop.f32.mrf.mxu0
    %v3441 = vadd.f32 %v3392, %v3440
    %3442 = vmatmul.bf16.gmra.mxu0 %v1183
    %v3443 = vpop.f32.mrf.mxu0
    %v3444 = vadd.f32 %v3395, %v3443
    %v3445 = vpop.f32.mrf.mxu0
    %v3446 = vadd.f32 %v3397, %v3445
    %3447 = vmatmul.bf16.gmra.mxu0 %v1205
    %v3448 = vpop.f32.mrf.mxu0
    %v3449 = vadd.f32 %v3400, %v3448
    %v3450 = vpop.f32.mrf.mxu0
    %v3451 = vadd.f32 %v3402, %v3450
    %3452 = vmatmul.bf16.gmra.mxu0 %v1227
    %v3453 = vpop.f32.mrf.mxu0
    %v3454 = vadd.f32 %v3405, %v3453
    %v3455 = vpop.f32.mrf.mxu0
    %v3456 = vadd.f32 %v3407, %v3455
    %3457 = vmatmul.bf16.gmra.mxu0 %v1249
    %v3458 = vpop.f32.mrf.mxu0
    %v3459 = vadd.f32 %v3410, %v3458
    %v3460 = vpop.f32.mrf.mxu0
    %v3461 = vadd.f32 %v3412, %v3460
    %3462 = vdwg.mxu0
    %3463 = vmatpush.bf16.msra.mxu0 %v2570
    %3464 = vmatpush.bf16.msra.mxu0 %v2568
    %3465 = vmatpush.bf16.msra.mxu0 %v2566
    %3466 = vmatpush.bf16.msra.mxu0 %v2564
    %3467 = vmatpush.bf16.msra.mxu0 %v2562
    %3468 = vmatpush.bf16.msra.mxu0 %v2560
    %3469 = vmatpush.bf16.msra.mxu0 %v2558
    %3470 = vmatpush.bf16.msra.mxu0 %v2556
    %3471 = vmatmul.bf16.gmra.mxu0 %v1096
    %v3472 = vpop.f32.mrf.mxu0
    %v3473 = vadd.f32 %v3424, %v3472
    %v3474 = vpop.f32.mrf.mxu0
    %v3475 = vadd.f32 %v3426, %v3474
    %3476 = vmatmul.bf16.gmra.mxu0 %v1118
    %v3477 = vpop.f32.mrf.mxu0
    %v3478 = vadd.f32 %v3429, %v3477
    %v3479 = vpop.f32.mrf.mxu0
    %v3480 = vadd.f32 %v3431, %v3479
    %3481 = vmatmul.bf16.gmra.mxu0 %v1140
    %v3482 = vpop.f32.mrf.mxu0
    %v3483 = vadd.f32 %v3434, %v3482
    %v3484 = vpop.f32.mrf.mxu0
    %v3485 = vadd.f32 %v3436, %v3484
    %3486 = vmatmul.bf16.gmra.mxu0 %v1162
    %v3487 = vpop.f32.mrf.mxu0
    %v3488 = vadd.f32 %v3439, %v3487
    %v3489 = vpop.f32.mrf.mxu0
    %v3490 = vadd.f32 %v3441, %v3489
    %3491 = vmatmul.bf16.gmra.mxu0 %v1184
    %v3492 = vpop.f32.mrf.mxu0
    %v3493 = vadd.f32 %v3444, %v3492
    %v3494 = vpop.f32.mrf.mxu0
    %v3495 = vadd.f32 %v3446, %v3494
    %3496 = vmatmul.bf16.gmra.mxu0 %v1206
    %v3497 = vpop.f32.mrf.mxu0
    %v3498 = vadd.f32 %v3449, %v3497
    %v3499 = vpop.f32.mrf.mxu0
    %v3500 = vadd.f32 %v3451, %v3499
    %3501 = vmatmul.bf16.gmra.mxu0 %v1228
    %v3502 = vpop.f32.mrf.mxu0
    %v3503 = vadd.f32 %v3454, %v3502
    %v3504 = vpop.f32.mrf.mxu0
    %v3505 = vadd.f32 %v3456, %v3504
    %3506 = vmatmul.bf16.gmra.mxu0 %v1250
    %v3507 = vpop.f32.mrf.mxu0
    %v3508 = vadd.f32 %v3459, %v3507
    %v3509 = vpop.f32.mrf.mxu0
    %v3510 = vadd.f32 %v3461, %v3509
    %3511 = vdwg.mxu0
    %3512 = vmatpush.bf16.msra.mxu0 %v2586
    %3513 = vmatpush.bf16.msra.mxu0 %v2584
    %3514 = vmatpush.bf16.msra.mxu0 %v2582
    %3515 = vmatpush.bf16.msra.mxu0 %v2580
    %3516 = vmatpush.bf16.msra.mxu0 %v2578
    %3517 = vmatpush.bf16.msra.mxu0 %v2576
    %3518 = vmatpush.bf16.msra.mxu0 %v2574
    %3519 = vmatpush.bf16.msra.mxu0 %v2572
    %3520 = vmatmul.bf16.gmra.mxu0 %v1097
    %v3521 = vpop.f32.mrf.mxu0
    %v3522 = vadd.f32 %v3473, %v3521
    %v3523 = vpop.f32.mrf.mxu0
    %v3524 = vadd.f32 %v3475, %v3523
    %3525 = vmatmul.bf16.gmra.mxu0 %v1119
    %v3526 = vpop.f32.mrf.mxu0
    %v3527 = vadd.f32 %v3478, %v3526
    %v3528 = vpop.f32.mrf.mxu0
    %v3529 = vadd.f32 %v3480, %v3528
    %3530 = vmatmul.bf16.gmra.mxu0 %v1141
    %v3531 = vpop.f32.mrf.mxu0
    %v3532 = vadd.f32 %v3483, %v3531
    %v3533 = vpop.f32.mrf.mxu0
    %v3534 = vadd.f32 %v3485, %v3533
    %3535 = vmatmul.bf16.gmra.mxu0 %v1163
    %v3536 = vpop.f32.mrf.mxu0
    %v3537 = vadd.f32 %v3488, %v3536
    %v3538 = vpop.f32.mrf.mxu0
    %v3539 = vadd.f32 %v3490, %v3538
    %3540 = vmatmul.bf16.gmra.mxu0 %v1185
    %v3541 = vpop.f32.mrf.mxu0
    %v3542 = vadd.f32 %v3493, %v3541
    %v3543 = vpop.f32.mrf.mxu0
    %v3544 = vadd.f32 %v3495, %v3543
    %3545 = vmatmul.bf16.gmra.mxu0 %v1207
    %v3546 = vpop.f32.mrf.mxu0
    %v3547 = vadd.f32 %v3498, %v3546
    %v3548 = vpop.f32.mrf.mxu0
    %v3549 = vadd.f32 %v3500, %v3548
    %3550 = vmatmul.bf16.gmra.mxu0 %v1229
    %v3551 = vpop.f32.mrf.mxu0
    %v3552 = vadd.f32 %v3503, %v3551
    %v3553 = vpop.f32.mrf.mxu0
    %v3554 = vadd.f32 %v3505, %v3553
    %3555 = vmatmul.bf16.gmra.mxu0 %v1251
    %v3556 = vpop.f32.mrf.mxu0
    %v3557 = vadd.f32 %v3508, %v3556
    %v3558 = vpop.f32.mrf.mxu0
    %v3559 = vadd.f32 %v3510, %v3558
    %3560 = vdwg.mxu0
    %3561 = vmatpush.bf16.msra.mxu0 %v2602
    %3562 = vmatpush.bf16.msra.mxu0 %v2600
    %3563 = vmatpush.bf16.msra.mxu0 %v2598
    %3564 = vmatpush.bf16.msra.mxu0 %v2596
    %3565 = vmatpush.bf16.msra.mxu0 %v2594
    %3566 = vmatpush.bf16.msra.mxu0 %v2592
    %3567 = vmatpush.bf16.msra.mxu0 %v2590
    %3568 = vmatpush.bf16.msra.mxu0 %v2588
    %3569 = vmatmul.bf16.gmra.mxu0 %v1098
    %v3570 = vpop.f32.mrf.mxu0
    %v3571 = vadd.f32 %v3522, %v3570
    %v3572 = vpop.f32.mrf.mxu0
    %v3573 = vadd.f32 %v3524, %v3572
    %3574 = vmatmul.bf16.gmra.mxu0 %v1120
    %v3575 = vpop.f32.mrf.mxu0
    %v3576 = vadd.f32 %v3527, %v3575
    %v3577 = vpop.f32.mrf.mxu0
    %v3578 = vadd.f32 %v3529, %v3577
    %3579 = vmatmul.bf16.gmra.mxu0 %v1142
    %v3580 = vpop.f32.mrf.mxu0
    %v3581 = vadd.f32 %v3532, %v3580
    %v3582 = vpop.f32.mrf.mxu0
    %v3583 = vadd.f32 %v3534, %v3582
    %3584 = vmatmul.bf16.gmra.mxu0 %v1164
    %v3585 = vpop.f32.mrf.mxu0
    %v3586 = vadd.f32 %v3537, %v3585
    %v3587 = vpop.f32.mrf.mxu0
    %v3588 = vadd.f32 %v3539, %v3587
    %3589 = vmatmul.bf16.gmra.mxu0 %v1186
    %v3590 = vpop.f32.mrf.mxu0
    %v3591 = vadd.f32 %v3542, %v3590
    %v3592 = vpop.f32.mrf.mxu0
    %v3593 = vadd.f32 %v3544, %v3592
    %3594 = vmatmul.bf16.gmra.mxu0 %v1208
    %v3595 = vpop.f32.mrf.mxu0
    %v3596 = vadd.f32 %v3547, %v3595
    %v3597 = vpop.f32.mrf.mxu0
    %v3598 = vadd.f32 %v3549, %v3597
    %3599 = vmatmul.bf16.gmra.mxu0 %v1230
    %v3600 = vpop.f32.mrf.mxu0
    %v3601 = vadd.f32 %v3552, %v3600
    %v3602 = vpop.f32.mrf.mxu0
    %v3603 = vadd.f32 %v3554, %v3602
    %3604 = vmatmul.bf16.gmra.mxu0 %v1252
    %v3605 = vpop.f32.mrf.mxu0
    %v3606 = vadd.f32 %v3557, %v3605
    %v3607 = vpop.f32.mrf.mxu0
    %v3608 = vadd.f32 %v3559, %v3607
    %3609 = vdwg.mxu0
    %3610 = vmatpush.bf16.msra.mxu0 %v2618
    %3611 = vmatpush.bf16.msra.mxu0 %v2616
    %3612 = vmatpush.bf16.msra.mxu0 %v2614
    %3613 = vmatpush.bf16.msra.mxu0 %v2612
    %3614 = vmatpush.bf16.msra.mxu0 %v2610
    %3615 = vmatpush.bf16.msra.mxu0 %v2608
    %3616 = vmatpush.bf16.msra.mxu0 %v2606
    %3617 = vmatpush.bf16.msra.mxu0 %v2604
    %3618 = vmatmul.bf16.gmra.mxu0 %v1099
    %v3619 = vpop.f32.mrf.mxu0
    %v3620 = vadd.f32 %v3571, %v3619
    %v3621 = vpop.f32.mrf.mxu0
    %v3622 = vadd.f32 %v3573, %v3621
    %3623 = vmatmul.bf16.gmra.mxu0 %v1121
    %v3624 = vpop.f32.mrf.mxu0
    %v3625 = vadd.f32 %v3576, %v3624
    %v3626 = vpop.f32.mrf.mxu0
    %v3627 = vadd.f32 %v3578, %v3626
    %3628 = vmatmul.bf16.gmra.mxu0 %v1143
    %v3629 = vpop.f32.mrf.mxu0
    %v3630 = vadd.f32 %v3581, %v3629
    %v3631 = vpop.f32.mrf.mxu0
    %v3632 = vadd.f32 %v3583, %v3631
    %3633 = vmatmul.bf16.gmra.mxu0 %v1165
    %v3634 = vpop.f32.mrf.mxu0
    %v3635 = vadd.f32 %v3586, %v3634
    %v3636 = vpop.f32.mrf.mxu0
    %v3637 = vadd.f32 %v3588, %v3636
    %3638 = vmatmul.bf16.gmra.mxu0 %v1187
    %v3639 = vpop.f32.mrf.mxu0
    %v3640 = vadd.f32 %v3591, %v3639
    %v3641 = vpop.f32.mrf.mxu0
    %v3642 = vadd.f32 %v3593, %v3641
    %3643 = vmatmul.bf16.gmra.mxu0 %v1209
    %v3644 = vpop.f32.mrf.mxu0
    %v3645 = vadd.f32 %v3596, %v3644
    %v3646 = vpop.f32.mrf.mxu0
    %v3647 = vadd.f32 %v3598, %v3646
    %3648 = vmatmul.bf16.gmra.mxu0 %v1231
    %v3649 = vpop.f32.mrf.mxu0
    %v3650 = vadd.f32 %v3601, %v3649
    %v3651 = vpop.f32.mrf.mxu0
    %v3652 = vadd.f32 %v3603, %v3651
    %3653 = vmatmul.bf16.gmra.mxu0 %v1253
    %v3654 = vpop.f32.mrf.mxu0
    %v3655 = vadd.f32 %v3606, %v3654
    %v3656 = vpop.f32.mrf.mxu0
    %v3657 = vadd.f32 %v3608, %v3656
    %3658 = vdwg.mxu0
    %3659 = vmatpush.bf16.msra.mxu0 %v2634
    %3660 = vmatpush.bf16.msra.mxu0 %v2632
    %3661 = vmatpush.bf16.msra.mxu0 %v2630
    %3662 = vmatpush.bf16.msra.mxu0 %v2628
    %3663 = vmatpush.bf16.msra.mxu0 %v2626
    %3664 = vmatpush.bf16.msra.mxu0 %v2624
    %3665 = vmatpush.bf16.msra.mxu0 %v2622
    %3666 = vmatpush.bf16.msra.mxu0 %v2620
    %3667 = vmatmul.bf16.gmra.mxu0 %v1100
    %v3668 = vpop.f32.mrf.mxu0
    %v3669 = vadd.f32 %v3620, %v3668
    %v3670 = vpop.f32.mrf.mxu0
    %v3671 = vadd.f32 %v3622, %v3670
    %3672 = vmatmul.bf16.gmra.mxu0 %v1122
    %v3673 = vpop.f32.mrf.mxu0
    %v3674 = vadd.f32 %v3625, %v3673
    %v3675 = vpop.f32.mrf.mxu0
    %v3676 = vadd.f32 %v3627, %v3675
    %3677 = vmatmul.bf16.gmra.mxu0 %v1144
    %v3678 = vpop.f32.mrf.mxu0
    %v3679 = vadd.f32 %v3630, %v3678
    %v3680 = vpop.f32.mrf.mxu0
    %v3681 = vadd.f32 %v3632, %v3680
    %3682 = vmatmul.bf16.gmra.mxu0 %v1166
    %v3683 = vpop.f32.mrf.mxu0
    %v3684 = vadd.f32 %v3635, %v3683
    %v3685 = vpop.f32.mrf.mxu0
    %v3686 = vadd.f32 %v3637, %v3685
    %3687 = vmatmul.bf16.gmra.mxu0 %v1188
    %v3688 = vpop.f32.mrf.mxu0
    %v3689 = vadd.f32 %v3640, %v3688
    %v3690 = vpop.f32.mrf.mxu0
    %v3691 = vadd.f32 %v3642, %v3690
    %3692 = vmatmul.bf16.gmra.mxu0 %v1210
    %v3693 = vpop.f32.mrf.mxu0
    %v3694 = vadd.f32 %v3645, %v3693
    %v3695 = vpop.f32.mrf.mxu0
    %v3696 = vadd.f32 %v3647, %v3695
    %3697 = vmatmul.bf16.gmra.mxu0 %v1232
    %v3698 = vpop.f32.mrf.mxu0
    %v3699 = vadd.f32 %v3650, %v3698
    %v3700 = vpop.f32.mrf.mxu0
    %v3701 = vadd.f32 %v3652, %v3700
    %3702 = vmatmul.bf16.gmra.mxu0 %v1254
    %v3703 = vpop.f32.mrf.mxu0
    %v3704 = vadd.f32 %v3655, %v3703
    %v3705 = vpop.f32.mrf.mxu0
    %v3706 = vadd.f32 %v3657, %v3705
    %3707 = vdwg.mxu0
    %3708 = vmatpush.bf16.msra.mxu0 %v2650
    %3709 = vmatpush.bf16.msra.mxu0 %v2648
    %3710 = vmatpush.bf16.msra.mxu0 %v2646
    %3711 = vmatpush.bf16.msra.mxu0 %v2644
    %3712 = vmatpush.bf16.msra.mxu0 %v2642
    %3713 = vmatpush.bf16.msra.mxu0 %v2640
    %3714 = vmatpush.bf16.msra.mxu0 %v2638
    %3715 = vmatpush.bf16.msra.mxu0 %v2636
    %3716 = vmatmul.bf16.gmra.mxu0 %v1101
    %v3717 = vpop.f32.mrf.mxu0
    %v3718 = vadd.f32 %v3669, %v3717
    %v3719 = vpop.f32.mrf.mxu0
    %v3720 = vadd.f32 %v3671, %v3719
    %3721 = vmatmul.bf16.gmra.mxu0 %v1123
    %v3722 = vpop.f32.mrf.mxu0
    %v3723 = vadd.f32 %v3674, %v3722
    %v3724 = vpop.f32.mrf.mxu0
    %v3725 = vadd.f32 %v3676, %v3724
    %3726 = vmatmul.bf16.gmra.mxu0 %v1145
    %v3727 = vpop.f32.mrf.mxu0
    %v3728 = vadd.f32 %v3679, %v3727
    %v3729 = vpop.f32.mrf.mxu0
    %v3730 = vadd.f32 %v3681, %v3729
    %3731 = vmatmul.bf16.gmra.mxu0 %v1167
    %v3732 = vpop.f32.mrf.mxu0
    %v3733 = vadd.f32 %v3684, %v3732
    %v3734 = vpop.f32.mrf.mxu0
    %v3735 = vadd.f32 %v3686, %v3734
    %3736 = vmatmul.bf16.gmra.mxu0 %v1189
    %v3737 = vpop.f32.mrf.mxu0
    %v3738 = vadd.f32 %v3689, %v3737
    %v3739 = vpop.f32.mrf.mxu0
    %v3740 = vadd.f32 %v3691, %v3739
    %3741 = vmatmul.bf16.gmra.mxu0 %v1211
    %v3742 = vpop.f32.mrf.mxu0
    %v3743 = vadd.f32 %v3694, %v3742
    %v3744 = vpop.f32.mrf.mxu0
    %v3745 = vadd.f32 %v3696, %v3744
    %3746 = vmatmul.bf16.gmra.mxu0 %v1233
    %v3747 = vpop.f32.mrf.mxu0
    %v3748 = vadd.f32 %v3699, %v3747
    %v3749 = vpop.f32.mrf.mxu0
    %v3750 = vadd.f32 %v3701, %v3749
    %3751 = vmatmul.bf16.gmra.mxu0 %v1255
    %v3752 = vpop.f32.mrf.mxu0
    %v3753 = vadd.f32 %v3704, %v3752
    %v3754 = vpop.f32.mrf.mxu0
    %v3755 = vadd.f32 %v3706, %v3754
    %3756 = vdwg.mxu0
    %3757 = vmatpush.bf16.msra.mxu0 %v2666
    %3758 = vmatpush.bf16.msra.mxu0 %v2664
    %3759 = vmatpush.bf16.msra.mxu0 %v2662
    %3760 = vmatpush.bf16.msra.mxu0 %v2660
    %3761 = vmatpush.bf16.msra.mxu0 %v2658
    %3762 = vmatpush.bf16.msra.mxu0 %v2656
    %3763 = vmatpush.bf16.msra.mxu0 %v2654
    %3764 = vmatpush.bf16.msra.mxu0 %v2652
    %3765 = vmatmul.bf16.gmra.mxu0 %v1102
    %v3766 = vpop.f32.mrf.mxu0
    %v3767 = vadd.f32 %v3718, %v3766
    %v3768 = vpop.f32.mrf.mxu0
    %v3769 = vadd.f32 %v3720, %v3768
    %3770 = vmatmul.bf16.gmra.mxu0 %v1124
    %v3771 = vpop.f32.mrf.mxu0
    %v3772 = vadd.f32 %v3723, %v3771
    %v3773 = vpop.f32.mrf.mxu0
    %v3774 = vadd.f32 %v3725, %v3773
    %3775 = vmatmul.bf16.gmra.mxu0 %v1146
    %v3776 = vpop.f32.mrf.mxu0
    %v3777 = vadd.f32 %v3728, %v3776
    %v3778 = vpop.f32.mrf.mxu0
    %v3779 = vadd.f32 %v3730, %v3778
    %3780 = vmatmul.bf16.gmra.mxu0 %v1168
    %v3781 = vpop.f32.mrf.mxu0
    %v3782 = vadd.f32 %v3733, %v3781
    %v3783 = vpop.f32.mrf.mxu0
    %v3784 = vadd.f32 %v3735, %v3783
    %3785 = vmatmul.bf16.gmra.mxu0 %v1190
    %v3786 = vpop.f32.mrf.mxu0
    %v3787 = vadd.f32 %v3738, %v3786
    %v3788 = vpop.f32.mrf.mxu0
    %v3789 = vadd.f32 %v3740, %v3788
    %3790 = vmatmul.bf16.gmra.mxu0 %v1212
    %v3791 = vpop.f32.mrf.mxu0
    %v3792 = vadd.f32 %v3743, %v3791
    %v3793 = vpop.f32.mrf.mxu0
    %v3794 = vadd.f32 %v3745, %v3793
    %3795 = vmatmul.bf16.gmra.mxu0 %v1234
    %v3796 = vpop.f32.mrf.mxu0
    %v3797 = vadd.f32 %v3748, %v3796
    %v3798 = vpop.f32.mrf.mxu0
    %v3799 = vadd.f32 %v3750, %v3798
    %3800 = vmatmul.bf16.gmra.mxu0 %v1256
    %v3801 = vpop.f32.mrf.mxu0
    %v3802 = vadd.f32 %v3753, %v3801
    %v3803 = vpop.f32.mrf.mxu0
    %v3804 = vadd.f32 %v3755, %v3803
    %3805 = vdwg.mxu0
    %3806 = vmatpush.bf16.msra.mxu0 %v2682
    %3807 = vmatpush.bf16.msra.mxu0 %v2680
    %3808 = vmatpush.bf16.msra.mxu0 %v2678
    %3809 = vmatpush.bf16.msra.mxu0 %v2676
    %3810 = vmatpush.bf16.msra.mxu0 %v2674
    %3811 = vmatpush.bf16.msra.mxu0 %v2672
    %3812 = vmatpush.bf16.msra.mxu0 %v2670
    %3813 = vmatpush.bf16.msra.mxu0 %v2668
    %3814 = vmatmul.bf16.gmra.mxu0 %v1103
    %v3815 = vpop.f32.mrf.mxu0
    %v3816 = vadd.f32 %v3767, %v3815
    %v3817 = vpop.f32.mrf.mxu0
    %v3818 = vadd.f32 %v3769, %v3817
    %3819 = vmatmul.bf16.gmra.mxu0 %v1125
    %v3820 = vpop.f32.mrf.mxu0
    %v3821 = vadd.f32 %v3772, %v3820
    %v3822 = vpop.f32.mrf.mxu0
    %v3823 = vadd.f32 %v3774, %v3822
    %3824 = vmatmul.bf16.gmra.mxu0 %v1147
    %v3825 = vpop.f32.mrf.mxu0
    %v3826 = vadd.f32 %v3777, %v3825
    %v3827 = vpop.f32.mrf.mxu0
    %v3828 = vadd.f32 %v3779, %v3827
    %3829 = vmatmul.bf16.gmra.mxu0 %v1169
    %v3830 = vpop.f32.mrf.mxu0
    %v3831 = vadd.f32 %v3782, %v3830
    %v3832 = vpop.f32.mrf.mxu0
    %v3833 = vadd.f32 %v3784, %v3832
    %3834 = vmatmul.bf16.gmra.mxu0 %v1191
    %v3835 = vpop.f32.mrf.mxu0
    %v3836 = vadd.f32 %v3787, %v3835
    %v3837 = vpop.f32.mrf.mxu0
    %v3838 = vadd.f32 %v3789, %v3837
    %3839 = vmatmul.bf16.gmra.mxu0 %v1213
    %v3840 = vpop.f32.mrf.mxu0
    %v3841 = vadd.f32 %v3792, %v3840
    %v3842 = vpop.f32.mrf.mxu0
    %v3843 = vadd.f32 %v3794, %v3842
    %3844 = vmatmul.bf16.gmra.mxu0 %v1235
    %v3845 = vpop.f32.mrf.mxu0
    %v3846 = vadd.f32 %v3797, %v3845
    %v3847 = vpop.f32.mrf.mxu0
    %v3848 = vadd.f32 %v3799, %v3847
    %3849 = vmatmul.bf16.gmra.mxu0 %v1257
    %v3850 = vpop.f32.mrf.mxu0
    %v3851 = vadd.f32 %v3802, %v3850
    %v3852 = vpop.f32.mrf.mxu0
    %v3853 = vadd.f32 %v3804, %v3852
    %3854 = vdwg.mxu0
    %3855 = vmatpush.bf16.msra.mxu0 %v2698
    %3856 = vmatpush.bf16.msra.mxu0 %v2696
    %3857 = vmatpush.bf16.msra.mxu0 %v2694
    %3858 = vmatpush.bf16.msra.mxu0 %v2692
    %3859 = vmatpush.bf16.msra.mxu0 %v2690
    %3860 = vmatpush.bf16.msra.mxu0 %v2688
    %3861 = vmatpush.bf16.msra.mxu0 %v2686
    %3862 = vmatpush.bf16.msra.mxu0 %v2684
    %3863 = vmatmul.bf16.gmra.mxu0 %v1104
    %v3864 = vpop.f32.mrf.mxu0
    %v3865 = vadd.f32 %v3816, %v3864
    %v3866 = vpop.f32.mrf.mxu0
    %v3867 = vadd.f32 %v3818, %v3866
    %3868 = vmatmul.bf16.gmra.mxu0 %v1126
    %v3869 = vpop.f32.mrf.mxu0
    %v3870 = vadd.f32 %v3821, %v3869
    %v3871 = vpop.f32.mrf.mxu0
    %v3872 = vadd.f32 %v3823, %v3871
    %3873 = vmatmul.bf16.gmra.mxu0 %v1148
    %v3874 = vpop.f32.mrf.mxu0
    %v3875 = vadd.f32 %v3826, %v3874
    %v3876 = vpop.f32.mrf.mxu0
    %v3877 = vadd.f32 %v3828, %v3876
    %3878 = vmatmul.bf16.gmra.mxu0 %v1170
    %v3879 = vpop.f32.mrf.mxu0
    %v3880 = vadd.f32 %v3831, %v3879
    %v3881 = vpop.f32.mrf.mxu0
    %v3882 = vadd.f32 %v3833, %v3881
    %3883 = vmatmul.bf16.gmra.mxu0 %v1192
    %v3884 = vpop.f32.mrf.mxu0
    %v3885 = vadd.f32 %v3836, %v3884
    %v3886 = vpop.f32.mrf.mxu0
    %v3887 = vadd.f32 %v3838, %v3886
    %3888 = vmatmul.bf16.gmra.mxu0 %v1214
    %v3889 = vpop.f32.mrf.mxu0
    %v3890 = vadd.f32 %v3841, %v3889
    %v3891 = vpop.f32.mrf.mxu0
    %v3892 = vadd.f32 %v3843, %v3891
    %3893 = vmatmul.bf16.gmra.mxu0 %v1236
    %v3894 = vpop.f32.mrf.mxu0
    %v3895 = vadd.f32 %v3846, %v3894
    %v3896 = vpop.f32.mrf.mxu0
    %v3897 = vadd.f32 %v3848, %v3896
    %3898 = vmatmul.bf16.gmra.mxu0 %v1258
    %v3899 = vpop.f32.mrf.mxu0
    %v3900 = vadd.f32 %v3851, %v3899
    %v3901 = vpop.f32.mrf.mxu0
    %v3902 = vadd.f32 %v3853, %v3901
    %3903 = vdwg.mxu0
    %3904 = vmatpush.bf16.msra.mxu0 %v2714
    %3905 = vmatpush.bf16.msra.mxu0 %v2712
    %3906 = vmatpush.bf16.msra.mxu0 %v2710
    %3907 = vmatpush.bf16.msra.mxu0 %v2708
    %3908 = vmatpush.bf16.msra.mxu0 %v2706
    %3909 = vmatpush.bf16.msra.mxu0 %v2704
    %3910 = vmatpush.bf16.msra.mxu0 %v2702
    %3911 = vmatpush.bf16.msra.mxu0 %v2700
    %3912 = vmatmul.bf16.gmra.mxu0 %v1105
    %v3913 = vpop.f32.mrf.mxu0
    %v3914 = vadd.f32 %v3865, %v3913
    %v3915 = vpop.f32.mrf.mxu0
    %v3916 = vadd.f32 %v3867, %v3915
    %3917 = vmatmul.bf16.gmra.mxu0 %v1127
    %v3918 = vpop.f32.mrf.mxu0
    %v3919 = vadd.f32 %v3870, %v3918
    %v3920 = vpop.f32.mrf.mxu0
    %v3921 = vadd.f32 %v3872, %v3920
    %3922 = vmatmul.bf16.gmra.mxu0 %v1149
    %v3923 = vpop.f32.mrf.mxu0
    %v3924 = vadd.f32 %v3875, %v3923
    %v3925 = vpop.f32.mrf.mxu0
    %v3926 = vadd.f32 %v3877, %v3925
    %3927 = vmatmul.bf16.gmra.mxu0 %v1171
    %v3928 = vpop.f32.mrf.mxu0
    %v3929 = vadd.f32 %v3880, %v3928
    %v3930 = vpop.f32.mrf.mxu0
    %v3931 = vadd.f32 %v3882, %v3930
    %3932 = vmatmul.bf16.gmra.mxu0 %v1193
    %v3933 = vpop.f32.mrf.mxu0
    %v3934 = vadd.f32 %v3885, %v3933
    %v3935 = vpop.f32.mrf.mxu0
    %v3936 = vadd.f32 %v3887, %v3935
    %3937 = vmatmul.bf16.gmra.mxu0 %v1215
    %v3938 = vpop.f32.mrf.mxu0
    %v3939 = vadd.f32 %v3890, %v3938
    %v3940 = vpop.f32.mrf.mxu0
    %v3941 = vadd.f32 %v3892, %v3940
    %3942 = vmatmul.bf16.gmra.mxu0 %v1237
    %v3943 = vpop.f32.mrf.mxu0
    %v3944 = vadd.f32 %v3895, %v3943
    %v3945 = vpop.f32.mrf.mxu0
    %v3946 = vadd.f32 %v3897, %v3945
    %3947 = vmatmul.bf16.gmra.mxu0 %v1259
    %v3948 = vpop.f32.mrf.mxu0
    %v3949 = vadd.f32 %v3900, %v3948
    %v3950 = vpop.f32.mrf.mxu0
    %v3951 = vadd.f32 %v3902, %v3950
    %3952 = vdwg.mxu0
    %3953 = vmatpush.bf16.msra.mxu0 %v2730
    %3954 = vmatpush.bf16.msra.mxu0 %v2728
    %3955 = vmatpush.bf16.msra.mxu0 %v2726
    %3956 = vmatpush.bf16.msra.mxu0 %v2724
    %3957 = vmatpush.bf16.msra.mxu0 %v2722
    %3958 = vmatpush.bf16.msra.mxu0 %v2720
    %3959 = vmatpush.bf16.msra.mxu0 %v2718
    %3960 = vmatpush.bf16.msra.mxu0 %v2716
    %3961 = vmatmul.bf16.gmra.mxu0 %v1106
    %v3962 = vpop.f32.mrf.mxu0
    %v3963 = vadd.f32 %v3914, %v3962
    %v3964 = vpop.f32.mrf.mxu0
    %v3965 = vadd.f32 %v3916, %v3964
    %3966 = vmatmul.bf16.gmra.mxu0 %v1128
    %v3967 = vpop.f32.mrf.mxu0
    %v3968 = vadd.f32 %v3919, %v3967
    %v3969 = vpop.f32.mrf.mxu0
    %v3970 = vadd.f32 %v3921, %v3969
    %3971 = vmatmul.bf16.gmra.mxu0 %v1150
    %v3972 = vpop.f32.mrf.mxu0
    %v3973 = vadd.f32 %v3924, %v3972
    %v3974 = vpop.f32.mrf.mxu0
    %v3975 = vadd.f32 %v3926, %v3974
    %3976 = vmatmul.bf16.gmra.mxu0 %v1172
    %v3977 = vpop.f32.mrf.mxu0
    %v3978 = vadd.f32 %v3929, %v3977
    %v3979 = vpop.f32.mrf.mxu0
    %v3980 = vadd.f32 %v3931, %v3979
    %3981 = vmatmul.bf16.gmra.mxu0 %v1194
    %v3982 = vpop.f32.mrf.mxu0
    %v3983 = vadd.f32 %v3934, %v3982
    %v3984 = vpop.f32.mrf.mxu0
    %v3985 = vadd.f32 %v3936, %v3984
    %3986 = vmatmul.bf16.gmra.mxu0 %v1216
    %v3987 = vpop.f32.mrf.mxu0
    %v3988 = vadd.f32 %v3939, %v3987
    %v3989 = vpop.f32.mrf.mxu0
    %v3990 = vadd.f32 %v3941, %v3989
    %3991 = vmatmul.bf16.gmra.mxu0 %v1238
    %v3992 = vpop.f32.mrf.mxu0
    %v3993 = vadd.f32 %v3944, %v3992
    %v3994 = vpop.f32.mrf.mxu0
    %v3995 = vadd.f32 %v3946, %v3994
    %3996 = vmatmul.bf16.gmra.mxu0 %v1260
    %v3997 = vpop.f32.mrf.mxu0
    %v3998 = vadd.f32 %v3949, %v3997
    %v3999 = vpop.f32.mrf.mxu0
    %v4000 = vadd.f32 %v3951, %v3999
    %4001 = vdwg.mxu0
    %4002 = vmatpush.bf16.msra.mxu0 %v2746
    %4003 = vmatpush.bf16.msra.mxu0 %v2744
    %4004 = vmatpush.bf16.msra.mxu0 %v2742
    %4005 = vmatpush.bf16.msra.mxu0 %v2740
    %4006 = vmatpush.bf16.msra.mxu0 %v2738
    %4007 = vmatpush.bf16.msra.mxu0 %v2736
    %4008 = vmatpush.bf16.msra.mxu0 %v2734
    %4009 = vmatpush.bf16.msra.mxu0 %v2732
    %4010 = vmatmul.bf16.gmra.mxu0 %v1107
    %v4011 = vpop.f32.mrf.mxu0
    %v4012 = vadd.f32 %v3963, %v4011
    %v4013 = vpop.f32.mrf.mxu0
    %v4014 = vadd.f32 %v3965, %v4013
    %4015 = vmatmul.bf16.gmra.mxu0 %v1129
    %v4016 = vpop.f32.mrf.mxu0
    %v4017 = vadd.f32 %v3968, %v4016
    %v4018 = vpop.f32.mrf.mxu0
    %v4019 = vadd.f32 %v3970, %v4018
    %4020 = vmatmul.bf16.gmra.mxu0 %v1151
    %v4021 = vpop.f32.mrf.mxu0
    %v4022 = vadd.f32 %v3973, %v4021
    %v4023 = vpop.f32.mrf.mxu0
    %v4024 = vadd.f32 %v3975, %v4023
    %4025 = vmatmul.bf16.gmra.mxu0 %v1173
    %v4026 = vpop.f32.mrf.mxu0
    %v4027 = vadd.f32 %v3978, %v4026
    %v4028 = vpop.f32.mrf.mxu0
    %v4029 = vadd.f32 %v3980, %v4028
    %4030 = vmatmul.bf16.gmra.mxu0 %v1195
    %v4031 = vpop.f32.mrf.mxu0
    %v4032 = vadd.f32 %v3983, %v4031
    %v4033 = vpop.f32.mrf.mxu0
    %v4034 = vadd.f32 %v3985, %v4033
    %4035 = vmatmul.bf16.gmra.mxu0 %v1217
    %v4036 = vpop.f32.mrf.mxu0
    %v4037 = vadd.f32 %v3988, %v4036
    %v4038 = vpop.f32.mrf.mxu0
    %v4039 = vadd.f32 %v3990, %v4038
    %4040 = vmatmul.bf16.gmra.mxu0 %v1239
    %v4041 = vpop.f32.mrf.mxu0
    %v4042 = vadd.f32 %v3993, %v4041
    %v4043 = vpop.f32.mrf.mxu0
    %v4044 = vadd.f32 %v3995, %v4043
    %4045 = vmatmul.bf16.gmra.mxu0 %v1261
    %v4046 = vpop.f32.mrf.mxu0
    %v4047 = vadd.f32 %v3998, %v4046
    %v4048 = vpop.f32.mrf.mxu0
    %v4049 = vadd.f32 %v4000, %v4048
    %4050 = vdwg.mxu0
    %4051 = vmatpush.bf16.msra.mxu0 %v2762
    %4052 = vmatpush.bf16.msra.mxu0 %v2760
    %4053 = vmatpush.bf16.msra.mxu0 %v2758
    %4054 = vmatpush.bf16.msra.mxu0 %v2756
    %4055 = vmatpush.bf16.msra.mxu0 %v2754
    %4056 = vmatpush.bf16.msra.mxu0 %v2752
    %4057 = vmatpush.bf16.msra.mxu0 %v2750
    %4058 = vmatpush.bf16.msra.mxu0 %v2748
    %4059 = vmatmul.bf16.gmra.mxu0 %v1108
    %v4060 = vpop.f32.mrf.mxu0
    %v4061 = vadd.f32 %v4012, %v4060
    %v4062 = vpop.f32.mrf.mxu0
    %v4063 = vadd.f32 %v4014, %v4062
    %4064 = vmatmul.bf16.gmra.mxu0 %v1130
    %v4065 = vpop.f32.mrf.mxu0
    %v4066 = vadd.f32 %v4017, %v4065
    %v4067 = vpop.f32.mrf.mxu0
    %v4068 = vadd.f32 %v4019, %v4067
    %4069 = vmatmul.bf16.gmra.mxu0 %v1152
    %v4070 = vpop.f32.mrf.mxu0
    %v4071 = vadd.f32 %v4022, %v4070
    %v4072 = vpop.f32.mrf.mxu0
    %v4073 = vadd.f32 %v4024, %v4072
    %4074 = vmatmul.bf16.gmra.mxu0 %v1174
    %v4075 = vpop.f32.mrf.mxu0
    %v4076 = vadd.f32 %v4027, %v4075
    %v4077 = vpop.f32.mrf.mxu0
    %v4078 = vadd.f32 %v4029, %v4077
    %4079 = vmatmul.bf16.gmra.mxu0 %v1196
    %v4080 = vpop.f32.mrf.mxu0
    %v4081 = vadd.f32 %v4032, %v4080
    %v4082 = vpop.f32.mrf.mxu0
    %v4083 = vadd.f32 %v4034, %v4082
    %4084 = vmatmul.bf16.gmra.mxu0 %v1218
    %v4085 = vpop.f32.mrf.mxu0
    %v4086 = vadd.f32 %v4037, %v4085
    %v4087 = vpop.f32.mrf.mxu0
    %v4088 = vadd.f32 %v4039, %v4087
    %4089 = vmatmul.bf16.gmra.mxu0 %v1240
    %v4090 = vpop.f32.mrf.mxu0
    %v4091 = vadd.f32 %v4042, %v4090
    %v4092 = vpop.f32.mrf.mxu0
    %v4093 = vadd.f32 %v4044, %v4092
    %4094 = vmatmul.bf16.gmra.mxu0 %v1262
    %v4095 = vpop.f32.mrf.mxu0
    %v4096 = vadd.f32 %v4047, %v4095
    %v4097 = vpop.f32.mrf.mxu0
    %v4098 = vadd.f32 %v4049, %v4097
    %4099 = vdwg.mxu0
    %4100 = vmatpush.bf16.msra.mxu0 %v2778
    %4101 = vmatpush.bf16.msra.mxu0 %v2776
    %4102 = vmatpush.bf16.msra.mxu0 %v2774
    %4103 = vmatpush.bf16.msra.mxu0 %v2772
    %4104 = vmatpush.bf16.msra.mxu0 %v2770
    %4105 = vmatpush.bf16.msra.mxu0 %v2768
    %4106 = vmatpush.bf16.msra.mxu0 %v2766
    %4107 = vmatpush.bf16.msra.mxu0 %v2764
    %4108 = vmatmul.bf16.gmra.mxu0 %v1109
    %v4109 = vpop.f32.mrf.mxu0
    %v4110 = vadd.f32 %v4061, %v4109
    %v4111 = vpop.f32.mrf.mxu0
    %v4112 = vadd.f32 %v4063, %v4111
    %4113 = vmatmul.bf16.gmra.mxu0 %v1131
    %v4114 = vpop.f32.mrf.mxu0
    %v4115 = vadd.f32 %v4066, %v4114
    %v4116 = vpop.f32.mrf.mxu0
    %v4117 = vadd.f32 %v4068, %v4116
    %4118 = vmatmul.bf16.gmra.mxu0 %v1153
    %v4119 = vpop.f32.mrf.mxu0
    %v4120 = vadd.f32 %v4071, %v4119
    %v4121 = vpop.f32.mrf.mxu0
    %v4122 = vadd.f32 %v4073, %v4121
    %4123 = vmatmul.bf16.gmra.mxu0 %v1175
    %v4124 = vpop.f32.mrf.mxu0
    %v4125 = vadd.f32 %v4076, %v4124
    %v4126 = vpop.f32.mrf.mxu0
    %v4127 = vadd.f32 %v4078, %v4126
    %4128 = vmatmul.bf16.gmra.mxu0 %v1197
    %v4129 = vpop.f32.mrf.mxu0
    %v4130 = vadd.f32 %v4081, %v4129
    %v4131 = vpop.f32.mrf.mxu0
    %v4132 = vadd.f32 %v4083, %v4131
    %4133 = vmatmul.bf16.gmra.mxu0 %v1219
    %v4134 = vpop.f32.mrf.mxu0
    %v4135 = vadd.f32 %v4086, %v4134
    %v4136 = vpop.f32.mrf.mxu0
    %v4137 = vadd.f32 %v4088, %v4136
    %4138 = vmatmul.bf16.gmra.mxu0 %v1241
    %v4139 = vpop.f32.mrf.mxu0
    %v4140 = vadd.f32 %v4091, %v4139
    %v4141 = vpop.f32.mrf.mxu0
    %v4142 = vadd.f32 %v4093, %v4141
    %4143 = vmatmul.bf16.gmra.mxu0 %v1263
    %v4144 = vpop.f32.mrf.mxu0
    %v4145 = vadd.f32 %v4096, %v4144
    %v4146 = vpop.f32.mrf.mxu0
    %v4147 = vadd.f32 %v4098, %v4146
    %4148 = vdwg.mxu0
    %4149 = vmatpush.bf16.msra.mxu0 %v2794
    %4150 = vmatpush.bf16.msra.mxu0 %v2792
    %4151 = vmatpush.bf16.msra.mxu0 %v2790
    %4152 = vmatpush.bf16.msra.mxu0 %v2788
    %4153 = vmatpush.bf16.msra.mxu0 %v2786
    %4154 = vmatpush.bf16.msra.mxu0 %v2784
    %4155 = vmatpush.bf16.msra.mxu0 %v2782
    %4156 = vmatpush.bf16.msra.mxu0 %v2780
    %4157 = vmatmul.bf16.gmra.mxu0 %v1110
    %v4158 = vpop.f32.mrf.mxu0
    %v4159 = vadd.f32 %v4110, %v4158
    %v4160 = vpop.f32.mrf.mxu0
    %v4161 = vadd.f32 %v4112, %v4160
    %4162 = vmatmul.bf16.gmra.mxu0 %v1132
    %v4163 = vpop.f32.mrf.mxu0
    %v4164 = vadd.f32 %v4115, %v4163
    %v4165 = vpop.f32.mrf.mxu0
    %v4166 = vadd.f32 %v4117, %v4165
    %4167 = vmatmul.bf16.gmra.mxu0 %v1154
    %v4168 = vpop.f32.mrf.mxu0
    %v4169 = vadd.f32 %v4120, %v4168
    %v4170 = vpop.f32.mrf.mxu0
    %v4171 = vadd.f32 %v4122, %v4170
    %4172 = vmatmul.bf16.gmra.mxu0 %v1176
    %v4173 = vpop.f32.mrf.mxu0
    %v4174 = vadd.f32 %v4125, %v4173
    %v4175 = vpop.f32.mrf.mxu0
    %v4176 = vadd.f32 %v4127, %v4175
    %4177 = vmatmul.bf16.gmra.mxu0 %v1198
    %v4178 = vpop.f32.mrf.mxu0
    %v4179 = vadd.f32 %v4130, %v4178
    %v4180 = vpop.f32.mrf.mxu0
    %v4181 = vadd.f32 %v4132, %v4180
    %4182 = vmatmul.bf16.gmra.mxu0 %v1220
    %v4183 = vpop.f32.mrf.mxu0
    %v4184 = vadd.f32 %v4135, %v4183
    %v4185 = vpop.f32.mrf.mxu0
    %v4186 = vadd.f32 %v4137, %v4185
    %4187 = vmatmul.bf16.gmra.mxu0 %v1242
    %v4188 = vpop.f32.mrf.mxu0
    %v4189 = vadd.f32 %v4140, %v4188
    %v4190 = vpop.f32.mrf.mxu0
    %v4191 = vadd.f32 %v4142, %v4190
    %4192 = vmatmul.bf16.gmra.mxu0 %v1264
    %v4193 = vpop.f32.mrf.mxu0
    %v4194 = vadd.f32 %v4145, %v4193
    %v4195 = vpop.f32.mrf.mxu0
    %v4196 = vadd.f32 %v4147, %v4195
    %4197 = vdwg.mxu0
    %4198 = vmatpush.bf16.msra.mxu0 0
    %4199 = vmatpush.bf16.msra.mxu0 0
    %4200 = vmatpush.bf16.msra.mxu0 0
    %4201 = vmatpush.bf16.msra.mxu0 0
    %4202 = vmatpush.bf16.msra.mxu0 0
    %4203 = vmatpush.bf16.msra.mxu0 %v2800
    %4204 = vmatpush.bf16.msra.mxu0 %v2798
    %4205 = vmatpush.bf16.msra.mxu0 %v2796
    %4206 = vmatmul.bf16.gmra.mxu0 %v3146
    %v4207 = vpop.f32.mrf.mxu0
    %v4208 = vadd.f32 %v4159, %v4207
    %v4209 = vpop.f32.mrf.mxu0
    %v4210 = vadd.f32 %v4161, %v4209
    %4211 = vmatmul.bf16.gmra.mxu0 %v3149
    %v4212 = vpop.f32.mrf.mxu0
    %v4213 = vadd.f32 %v4164, %v4212
    %v4214 = vpop.f32.mrf.mxu0
    %v4215 = vadd.f32 %v4166, %v4214
    %4216 = vmatmul.bf16.gmra.mxu0 %v3152
    %v4217 = vpop.f32.mrf.mxu0
    %v4218 = vadd.f32 %v4169, %v4217
    %v4219 = vpop.f32.mrf.mxu0
    %v4220 = vadd.f32 %v4171, %v4219
    %4221 = vmatmul.bf16.gmra.mxu0 %v3155
    %v4222 = vpop.f32.mrf.mxu0
    %v4223 = vadd.f32 %v4174, %v4222
    %v4224 = vpop.f32.mrf.mxu0
    %v4225 = vadd.f32 %v4176, %v4224
    %4226 = vmatmul.bf16.gmra.mxu0 %v3158
    %v4227 = vpop.f32.mrf.mxu0
    %v4228 = vadd.f32 %v4179, %v4227
    %v4229 = vpop.f32.mrf.mxu0
    %v4230 = vadd.f32 %v4181, %v4229
    %4231 = vmatmul.bf16.gmra.mxu0 %v3161
    %v4232 = vpop.f32.mrf.mxu0
    %v4233 = vadd.f32 %v4184, %v4232
    %v4234 = vpop.f32.mrf.mxu0
    %v4235 = vadd.f32 %v4186, %v4234
    %4236 = vmatmul.bf16.gmra.mxu0 %v3164
    %v4237 = vpop.f32.mrf.mxu0
    %v4238 = vadd.f32 %v4189, %v4237
    %v4239 = vpop.f32.mrf.mxu0
    %v4240 = vadd.f32 %v4191, %v4239
    %4241 = vmatmul.bf16.gmra.mxu0 %v3167
    %v4242 = vpop.f32.mrf.mxu0
    %v4243 = vadd.f32 %v4194, %v4242
    %v4244 = vpop.f32.mrf.mxu0
    %v4245 = vadd.f32 %v4196, %v4244
    %4246 = vdwg.mxu0
    %4247 = vmatpush.bf16.msra.mxu0 %v2475
    %4248 = vmatpush.bf16.msra.mxu0 %v2473
    %4249 = vmatpush.bf16.msra.mxu0 %v2471
    %4250 = vmatpush.bf16.msra.mxu0 %v2469
    %4251 = vmatpush.bf16.msra.mxu0 %v2467
    %4252 = vmatpush.bf16.msra.mxu0 %v2465
    %4253 = vmatpush.bf16.msra.mxu0 %v2463
    %4254 = vmatpush.bf16.msra.mxu0 %v2461
    %4255 = vmatmul.bf16.gmra.mxu0 %v1090
    %v4256 = vpop.f32.mrf.mxu0
    %v4257 = vadd.f32 %v559, %v4256
    %v4258 = vpop.f32.mrf.mxu0
    %v4259 = vadd.f32 %v559, %v4258
    %4260 = vmatmul.bf16.gmra.mxu0 %v1112
    %v4261 = vpop.f32.mrf.mxu0
    %v4262 = vadd.f32 %v559, %v4261
    %v4263 = vpop.f32.mrf.mxu0
    %v4264 = vadd.f32 %v559, %v4263
    %4265 = vmatmul.bf16.gmra.mxu0 %v1134
    %v4266 = vpop.f32.mrf.mxu0
    %v4267 = vadd.f32 %v559, %v4266
    %v4268 = vpop.f32.mrf.mxu0
    %v4269 = vadd.f32 %v559, %v4268
    %4270 = vmatmul.bf16.gmra.mxu0 %v1156
    %v4271 = vpop.f32.mrf.mxu0
    %v4272 = vadd.f32 %v559, %v4271
    %v4273 = vpop.f32.mrf.mxu0
    %v4274 = vadd.f32 %v559, %v4273
    %4275 = vmatmul.bf16.gmra.mxu0 %v1178
    %v4276 = vpop.f32.mrf.mxu0
    %v4277 = vadd.f32 %v559, %v4276
    %v4278 = vpop.f32.mrf.mxu0
    %v4279 = vadd.f32 %v559, %v4278
    %4280 = vmatmul.bf16.gmra.mxu0 %v1200
    %v4281 = vpop.f32.mrf.mxu0
    %v4282 = vadd.f32 %v559, %v4281
    %v4283 = vpop.f32.mrf.mxu0
    %v4284 = vadd.f32 %v559, %v4283
    %4285 = vmatmul.bf16.gmra.mxu0 %v1222
    %v4286 = vpop.f32.mrf.mxu0
    %v4287 = vadd.f32 %v559, %v4286
    %v4288 = vpop.f32.mrf.mxu0
    %v4289 = vadd.f32 %v559, %v4288
    %4290 = vmatmul.bf16.gmra.mxu0 %v1244
    %v4291 = vpop.f32.mrf.mxu0
    %v4292 = vadd.f32 %v559, %v4291
    %v4293 = vpop.f32.mrf.mxu0
    %v4294 = vadd.f32 %v559, %v4293
    %4295 = vdwg.mxu0
    %4296 = vmatpush.bf16.msra.mxu0 %v2491
    %4297 = vmatpush.bf16.msra.mxu0 %v2489
    %4298 = vmatpush.bf16.msra.mxu0 %v2487
    %4299 = vmatpush.bf16.msra.mxu0 %v2485
    %4300 = vmatpush.bf16.msra.mxu0 %v2483
    %4301 = vmatpush.bf16.msra.mxu0 %v2481
    %4302 = vmatpush.bf16.msra.mxu0 %v2479
    %4303 = vmatpush.bf16.msra.mxu0 %v2477
    %4304 = vmatmul.bf16.gmra.mxu0 %v1091
    %v4305 = vpop.f32.mrf.mxu0
    %v4306 = vadd.f32 %v4257, %v4305
    %v4307 = vpop.f32.mrf.mxu0
    %v4308 = vadd.f32 %v4259, %v4307
    %4309 = vmatmul.bf16.gmra.mxu0 %v1113
    %v4310 = vpop.f32.mrf.mxu0
    %v4311 = vadd.f32 %v4262, %v4310
    %v4312 = vpop.f32.mrf.mxu0
    %v4313 = vadd.f32 %v4264, %v4312
    %4314 = vmatmul.bf16.gmra.mxu0 %v1135
    %v4315 = vpop.f32.mrf.mxu0
    %v4316 = vadd.f32 %v4267, %v4315
    %v4317 = vpop.f32.mrf.mxu0
    %v4318 = vadd.f32 %v4269, %v4317
    %4319 = vmatmul.bf16.gmra.mxu0 %v1157
    %v4320 = vpop.f32.mrf.mxu0
    %v4321 = vadd.f32 %v4272, %v4320
    %v4322 = vpop.f32.mrf.mxu0
    %v4323 = vadd.f32 %v4274, %v4322
    %4324 = vmatmul.bf16.gmra.mxu0 %v1179
    %v4325 = vpop.f32.mrf.mxu0
    %v4326 = vadd.f32 %v4277, %v4325
    %v4327 = vpop.f32.mrf.mxu0
    %v4328 = vadd.f32 %v4279, %v4327
    %4329 = vmatmul.bf16.gmra.mxu0 %v1201
    %v4330 = vpop.f32.mrf.mxu0
    %v4331 = vadd.f32 %v4282, %v4330
    %v4332 = vpop.f32.mrf.mxu0
    %v4333 = vadd.f32 %v4284, %v4332
    %4334 = vmatmul.bf16.gmra.mxu0 %v1223
    %v4335 = vpop.f32.mrf.mxu0
    %v4336 = vadd.f32 %v4287, %v4335
    %v4337 = vpop.f32.mrf.mxu0
    %v4338 = vadd.f32 %v4289, %v4337
    %4339 = vmatmul.bf16.gmra.mxu0 %v1245
    %v4340 = vpop.f32.mrf.mxu0
    %v4341 = vadd.f32 %v4292, %v4340
    %v4342 = vpop.f32.mrf.mxu0
    %v4343 = vadd.f32 %v4294, %v4342
    %4344 = vdwg.mxu0
    %4345 = vmatpush.bf16.msra.mxu0 %v2507
    %4346 = vmatpush.bf16.msra.mxu0 %v2505
    %4347 = vmatpush.bf16.msra.mxu0 %v2503
    %4348 = vmatpush.bf16.msra.mxu0 %v2501
    %4349 = vmatpush.bf16.msra.mxu0 %v2499
    %4350 = vmatpush.bf16.msra.mxu0 %v2497
    %4351 = vmatpush.bf16.msra.mxu0 %v2495
    %4352 = vmatpush.bf16.msra.mxu0 %v2493
    %4353 = vmatmul.bf16.gmra.mxu0 %v1092
    %v4354 = vpop.f32.mrf.mxu0
    %v4355 = vadd.f32 %v4306, %v4354
    %v4356 = vpop.f32.mrf.mxu0
    %v4357 = vadd.f32 %v4308, %v4356
    %4358 = vmatmul.bf16.gmra.mxu0 %v1114
    %v4359 = vpop.f32.mrf.mxu0
    %v4360 = vadd.f32 %v4311, %v4359
    %v4361 = vpop.f32.mrf.mxu0
    %v4362 = vadd.f32 %v4313, %v4361
    %4363 = vmatmul.bf16.gmra.mxu0 %v1136
    %v4364 = vpop.f32.mrf.mxu0
    %v4365 = vadd.f32 %v4316, %v4364
    %v4366 = vpop.f32.mrf.mxu0
    %v4367 = vadd.f32 %v4318, %v4366
    %4368 = vmatmul.bf16.gmra.mxu0 %v1158
    %v4369 = vpop.f32.mrf.mxu0
    %v4370 = vadd.f32 %v4321, %v4369
    %v4371 = vpop.f32.mrf.mxu0
    %v4372 = vadd.f32 %v4323, %v4371
    %4373 = vmatmul.bf16.gmra.mxu0 %v1180
    %v4374 = vpop.f32.mrf.mxu0
    %v4375 = vadd.f32 %v4326, %v4374
    %v4376 = vpop.f32.mrf.mxu0
    %v4377 = vadd.f32 %v4328, %v4376
    %4378 = vmatmul.bf16.gmra.mxu0 %v1202
    %v4379 = vpop.f32.mrf.mxu0
    %v4380 = vadd.f32 %v4331, %v4379
    %v4381 = vpop.f32.mrf.mxu0
    %v4382 = vadd.f32 %v4333, %v4381
    %4383 = vmatmul.bf16.gmra.mxu0 %v1224
    %v4384 = vpop.f32.mrf.mxu0
    %v4385 = vadd.f32 %v4336, %v4384
    %v4386 = vpop.f32.mrf.mxu0
    %v4387 = vadd.f32 %v4338, %v4386
    %4388 = vmatmul.bf16.gmra.mxu0 %v1246
    %v4389 = vpop.f32.mrf.mxu0
    %v4390 = vadd.f32 %v4341, %v4389
    %v4391 = vpop.f32.mrf.mxu0
    %v4392 = vadd.f32 %v4343, %v4391
    %4393 = vdwg.mxu0
    %4394 = vmatpush.bf16.msra.mxu0 %v2523
    %4395 = vmatpush.bf16.msra.mxu0 %v2521
    %4396 = vmatpush.bf16.msra.mxu0 %v2519
    %4397 = vmatpush.bf16.msra.mxu0 %v2517
    %4398 = vmatpush.bf16.msra.mxu0 %v2515
    %4399 = vmatpush.bf16.msra.mxu0 %v2513
    %4400 = vmatpush.bf16.msra.mxu0 %v2511
    %4401 = vmatpush.bf16.msra.mxu0 %v2509
    %4402 = vmatmul.bf16.gmra.mxu0 %v1093
    %v4403 = vpop.f32.mrf.mxu0
    %v4404 = vadd.f32 %v4355, %v4403
    %v4405 = vpop.f32.mrf.mxu0
    %v4406 = vadd.f32 %v4357, %v4405
    %4407 = vmatmul.bf16.gmra.mxu0 %v1115
    %v4408 = vpop.f32.mrf.mxu0
    %v4409 = vadd.f32 %v4360, %v4408
    %v4410 = vpop.f32.mrf.mxu0
    %v4411 = vadd.f32 %v4362, %v4410
    %4412 = vmatmul.bf16.gmra.mxu0 %v1137
    %v4413 = vpop.f32.mrf.mxu0
    %v4414 = vadd.f32 %v4365, %v4413
    %v4415 = vpop.f32.mrf.mxu0
    %v4416 = vadd.f32 %v4367, %v4415
    %4417 = vmatmul.bf16.gmra.mxu0 %v1159
    %v4418 = vpop.f32.mrf.mxu0
    %v4419 = vadd.f32 %v4370, %v4418
    %v4420 = vpop.f32.mrf.mxu0
    %v4421 = vadd.f32 %v4372, %v4420
    %4422 = vmatmul.bf16.gmra.mxu0 %v1181
    %v4423 = vpop.f32.mrf.mxu0
    %v4424 = vadd.f32 %v4375, %v4423
    %v4425 = vpop.f32.mrf.mxu0
    %v4426 = vadd.f32 %v4377, %v4425
    %4427 = vmatmul.bf16.gmra.mxu0 %v1203
    %v4428 = vpop.f32.mrf.mxu0
    %v4429 = vadd.f32 %v4380, %v4428
    %v4430 = vpop.f32.mrf.mxu0
    %v4431 = vadd.f32 %v4382, %v4430
    %4432 = vmatmul.bf16.gmra.mxu0 %v1225
    %v4433 = vpop.f32.mrf.mxu0
    %v4434 = vadd.f32 %v4385, %v4433
    %v4435 = vpop.f32.mrf.mxu0
    %v4436 = vadd.f32 %v4387, %v4435
    %4437 = vmatmul.bf16.gmra.mxu0 %v1247
    %v4438 = vpop.f32.mrf.mxu0
    %v4439 = vadd.f32 %v4390, %v4438
    %v4440 = vpop.f32.mrf.mxu0
    %v4441 = vadd.f32 %v4392, %v4440
    %4442 = vdwg.mxu0
    %4443 = vmatpush.bf16.msra.mxu0 %v2539
    %4444 = vmatpush.bf16.msra.mxu0 %v2537
    %4445 = vmatpush.bf16.msra.mxu0 %v2535
    %4446 = vmatpush.bf16.msra.mxu0 %v2533
    %4447 = vmatpush.bf16.msra.mxu0 %v2531
    %4448 = vmatpush.bf16.msra.mxu0 %v2529
    %4449 = vmatpush.bf16.msra.mxu0 %v2527
    %4450 = vmatpush.bf16.msra.mxu0 %v2525
    %4451 = vmatmul.bf16.gmra.mxu0 %v1094
    %v4452 = vpop.f32.mrf.mxu0
    %v4453 = vadd.f32 %v4404, %v4452
    %v4454 = vpop.f32.mrf.mxu0
    %v4455 = vadd.f32 %v4406, %v4454
    %4456 = vmatmul.bf16.gmra.mxu0 %v1116
    %v4457 = vpop.f32.mrf.mxu0
    %v4458 = vadd.f32 %v4409, %v4457
    %v4459 = vpop.f32.mrf.mxu0
    %v4460 = vadd.f32 %v4411, %v4459
    %4461 = vmatmul.bf16.gmra.mxu0 %v1138
    %v4462 = vpop.f32.mrf.mxu0
    %v4463 = vadd.f32 %v4414, %v4462
    %v4464 = vpop.f32.mrf.mxu0
    %v4465 = vadd.f32 %v4416, %v4464
    %4466 = vmatmul.bf16.gmra.mxu0 %v1160
    %v4467 = vpop.f32.mrf.mxu0
    %v4468 = vadd.f32 %v4419, %v4467
    %v4469 = vpop.f32.mrf.mxu0
    %v4470 = vadd.f32 %v4421, %v4469
    %4471 = vmatmul.bf16.gmra.mxu0 %v1182
    %v4472 = vpop.f32.mrf.mxu0
    %v4473 = vadd.f32 %v4424, %v4472
    %v4474 = vpop.f32.mrf.mxu0
    %v4475 = vadd.f32 %v4426, %v4474
    %4476 = vmatmul.bf16.gmra.mxu0 %v1204
    %v4477 = vpop.f32.mrf.mxu0
    %v4478 = vadd.f32 %v4429, %v4477
    %v4479 = vpop.f32.mrf.mxu0
    %v4480 = vadd.f32 %v4431, %v4479
    %4481 = vmatmul.bf16.gmra.mxu0 %v1226
    %v4482 = vpop.f32.mrf.mxu0
    %v4483 = vadd.f32 %v4434, %v4482
    %v4484 = vpop.f32.mrf.mxu0
    %v4485 = vadd.f32 %v4436, %v4484
    %4486 = vmatmul.bf16.gmra.mxu0 %v1248
    %v4487 = vpop.f32.mrf.mxu0
    %v4488 = vadd.f32 %v4439, %v4487
    %v4489 = vpop.f32.mrf.mxu0
    %v4490 = vadd.f32 %v4441, %v4489
    %4491 = vdwg.mxu0
    %4492 = vmatpush.bf16.msra.mxu0 %v2555
    %4493 = vmatpush.bf16.msra.mxu0 %v2553
    %4494 = vmatpush.bf16.msra.mxu0 %v2551
    %4495 = vmatpush.bf16.msra.mxu0 %v2549
    %4496 = vmatpush.bf16.msra.mxu0 %v2547
    %4497 = vmatpush.bf16.msra.mxu0 %v2545
    %4498 = vmatpush.bf16.msra.mxu0 %v2543
    %4499 = vmatpush.bf16.msra.mxu0 %v2541
    %4500 = vmatmul.bf16.gmra.mxu0 %v1095
    %v4501 = vpop.f32.mrf.mxu0
    %v4502 = vadd.f32 %v4453, %v4501
    %v4503 = vpop.f32.mrf.mxu0
    %v4504 = vadd.f32 %v4455, %v4503
    %4505 = vmatmul.bf16.gmra.mxu0 %v1117
    %v4506 = vpop.f32.mrf.mxu0
    %v4507 = vadd.f32 %v4458, %v4506
    %v4508 = vpop.f32.mrf.mxu0
    %v4509 = vadd.f32 %v4460, %v4508
    %4510 = vmatmul.bf16.gmra.mxu0 %v1139
    %v4511 = vpop.f32.mrf.mxu0
    %v4512 = vadd.f32 %v4463, %v4511
    %v4513 = vpop.f32.mrf.mxu0
    %v4514 = vadd.f32 %v4465, %v4513
    %4515 = vmatmul.bf16.gmra.mxu0 %v1161
    %v4516 = vpop.f32.mrf.mxu0
    %v4517 = vadd.f32 %v4468, %v4516
    %v4518 = vpop.f32.mrf.mxu0
    %v4519 = vadd.f32 %v4470, %v4518
    %4520 = vmatmul.bf16.gmra.mxu0 %v1183
    %v4521 = vpop.f32.mrf.mxu0
    %v4522 = vadd.f32 %v4473, %v4521
    %v4523 = vpop.f32.mrf.mxu0
    %v4524 = vadd.f32 %v4475, %v4523
    %4525 = vmatmul.bf16.gmra.mxu0 %v1205
    %v4526 = vpop.f32.mrf.mxu0
    %v4527 = vadd.f32 %v4478, %v4526
    %v4528 = vpop.f32.mrf.mxu0
    %v4529 = vadd.f32 %v4480, %v4528
    %4530 = vmatmul.bf16.gmra.mxu0 %v1227
    %v4531 = vpop.f32.mrf.mxu0
    %v4532 = vadd.f32 %v4483, %v4531
    %v4533 = vpop.f32.mrf.mxu0
    %v4534 = vadd.f32 %v4485, %v4533
    %4535 = vmatmul.bf16.gmra.mxu0 %v1249
    %v4536 = vpop.f32.mrf.mxu0
    %v4537 = vadd.f32 %v4488, %v4536
    %v4538 = vpop.f32.mrf.mxu0
    %v4539 = vadd.f32 %v4490, %v4538
    %4540 = vdwg.mxu0
    %4541 = vmatpush.bf16.msra.mxu0 %v2571
    %4542 = vmatpush.bf16.msra.mxu0 %v2569
    %4543 = vmatpush.bf16.msra.mxu0 %v2567
    %4544 = vmatpush.bf16.msra.mxu0 %v2565
    %4545 = vmatpush.bf16.msra.mxu0 %v2563
    %4546 = vmatpush.bf16.msra.mxu0 %v2561
    %4547 = vmatpush.bf16.msra.mxu0 %v2559
    %4548 = vmatpush.bf16.msra.mxu0 %v2557
    %4549 = vmatmul.bf16.gmra.mxu0 %v1096
    %v4550 = vpop.f32.mrf.mxu0
    %v4551 = vadd.f32 %v4502, %v4550
    %v4552 = vpop.f32.mrf.mxu0
    %v4553 = vadd.f32 %v4504, %v4552
    %4554 = vmatmul.bf16.gmra.mxu0 %v1118
    %v4555 = vpop.f32.mrf.mxu0
    %v4556 = vadd.f32 %v4507, %v4555
    %v4557 = vpop.f32.mrf.mxu0
    %v4558 = vadd.f32 %v4509, %v4557
    %4559 = vmatmul.bf16.gmra.mxu0 %v1140
    %v4560 = vpop.f32.mrf.mxu0
    %v4561 = vadd.f32 %v4512, %v4560
    %v4562 = vpop.f32.mrf.mxu0
    %v4563 = vadd.f32 %v4514, %v4562
    %4564 = vmatmul.bf16.gmra.mxu0 %v1162
    %v4565 = vpop.f32.mrf.mxu0
    %v4566 = vadd.f32 %v4517, %v4565
    %v4567 = vpop.f32.mrf.mxu0
    %v4568 = vadd.f32 %v4519, %v4567
    %4569 = vmatmul.bf16.gmra.mxu0 %v1184
    %v4570 = vpop.f32.mrf.mxu0
    %v4571 = vadd.f32 %v4522, %v4570
    %v4572 = vpop.f32.mrf.mxu0
    %v4573 = vadd.f32 %v4524, %v4572
    %4574 = vmatmul.bf16.gmra.mxu0 %v1206
    %v4575 = vpop.f32.mrf.mxu0
    %v4576 = vadd.f32 %v4527, %v4575
    %v4577 = vpop.f32.mrf.mxu0
    %v4578 = vadd.f32 %v4529, %v4577
    %4579 = vmatmul.bf16.gmra.mxu0 %v1228
    %v4580 = vpop.f32.mrf.mxu0
    %v4581 = vadd.f32 %v4532, %v4580
    %v4582 = vpop.f32.mrf.mxu0
    %v4583 = vadd.f32 %v4534, %v4582
    %4584 = vmatmul.bf16.gmra.mxu0 %v1250
    %v4585 = vpop.f32.mrf.mxu0
    %v4586 = vadd.f32 %v4537, %v4585
    %v4587 = vpop.f32.mrf.mxu0
    %v4588 = vadd.f32 %v4539, %v4587
    %4589 = vdwg.mxu0
    %4590 = vmatpush.bf16.msra.mxu0 %v2587
    %4591 = vmatpush.bf16.msra.mxu0 %v2585
    %4592 = vmatpush.bf16.msra.mxu0 %v2583
    %4593 = vmatpush.bf16.msra.mxu0 %v2581
    %4594 = vmatpush.bf16.msra.mxu0 %v2579
    %4595 = vmatpush.bf16.msra.mxu0 %v2577
    %4596 = vmatpush.bf16.msra.mxu0 %v2575
    %4597 = vmatpush.bf16.msra.mxu0 %v2573
    %4598 = vmatmul.bf16.gmra.mxu0 %v1097
    %v4599 = vpop.f32.mrf.mxu0
    %v4600 = vadd.f32 %v4551, %v4599
    %v4601 = vpop.f32.mrf.mxu0
    %v4602 = vadd.f32 %v4553, %v4601
    %4603 = vmatmul.bf16.gmra.mxu0 %v1119
    %v4604 = vpop.f32.mrf.mxu0
    %v4605 = vadd.f32 %v4556, %v4604
    %v4606 = vpop.f32.mrf.mxu0
    %v4607 = vadd.f32 %v4558, %v4606
    %4608 = vmatmul.bf16.gmra.mxu0 %v1141
    %v4609 = vpop.f32.mrf.mxu0
    %v4610 = vadd.f32 %v4561, %v4609
    %v4611 = vpop.f32.mrf.mxu0
    %v4612 = vadd.f32 %v4563, %v4611
    %4613 = vmatmul.bf16.gmra.mxu0 %v1163
    %v4614 = vpop.f32.mrf.mxu0
    %v4615 = vadd.f32 %v4566, %v4614
    %v4616 = vpop.f32.mrf.mxu0
    %v4617 = vadd.f32 %v4568, %v4616
    %4618 = vmatmul.bf16.gmra.mxu0 %v1185
    %v4619 = vpop.f32.mrf.mxu0
    %v4620 = vadd.f32 %v4571, %v4619
    %v4621 = vpop.f32.mrf.mxu0
    %v4622 = vadd.f32 %v4573, %v4621
    %4623 = vmatmul.bf16.gmra.mxu0 %v1207
    %v4624 = vpop.f32.mrf.mxu0
    %v4625 = vadd.f32 %v4576, %v4624
    %v4626 = vpop.f32.mrf.mxu0
    %v4627 = vadd.f32 %v4578, %v4626
    %4628 = vmatmul.bf16.gmra.mxu0 %v1229
    %v4629 = vpop.f32.mrf.mxu0
    %v4630 = vadd.f32 %v4581, %v4629
    %v4631 = vpop.f32.mrf.mxu0
    %v4632 = vadd.f32 %v4583, %v4631
    %4633 = vmatmul.bf16.gmra.mxu0 %v1251
    %v4634 = vpop.f32.mrf.mxu0
    %v4635 = vadd.f32 %v4586, %v4634
    %v4636 = vpop.f32.mrf.mxu0
    %v4637 = vadd.f32 %v4588, %v4636
    %4638 = vdwg.mxu0
    %4639 = vmatpush.bf16.msra.mxu0 %v2603
    %4640 = vmatpush.bf16.msra.mxu0 %v2601
    %4641 = vmatpush.bf16.msra.mxu0 %v2599
    %4642 = vmatpush.bf16.msra.mxu0 %v2597
    %4643 = vmatpush.bf16.msra.mxu0 %v2595
    %4644 = vmatpush.bf16.msra.mxu0 %v2593
    %4645 = vmatpush.bf16.msra.mxu0 %v2591
    %4646 = vmatpush.bf16.msra.mxu0 %v2589
    %4647 = vmatmul.bf16.gmra.mxu0 %v1098
    %v4648 = vpop.f32.mrf.mxu0
    %v4649 = vadd.f32 %v4600, %v4648
    %v4650 = vpop.f32.mrf.mxu0
    %v4651 = vadd.f32 %v4602, %v4650
    %4652 = vmatmul.bf16.gmra.mxu0 %v1120
    %v4653 = vpop.f32.mrf.mxu0
    %v4654 = vadd.f32 %v4605, %v4653
    %v4655 = vpop.f32.mrf.mxu0
    %v4656 = vadd.f32 %v4607, %v4655
    %4657 = vmatmul.bf16.gmra.mxu0 %v1142
    %v4658 = vpop.f32.mrf.mxu0
    %v4659 = vadd.f32 %v4610, %v4658
    %v4660 = vpop.f32.mrf.mxu0
    %v4661 = vadd.f32 %v4612, %v4660
    %4662 = vmatmul.bf16.gmra.mxu0 %v1164
    %v4663 = vpop.f32.mrf.mxu0
    %v4664 = vadd.f32 %v4615, %v4663
    %v4665 = vpop.f32.mrf.mxu0
    %v4666 = vadd.f32 %v4617, %v4665
    %4667 = vmatmul.bf16.gmra.mxu0 %v1186
    %v4668 = vpop.f32.mrf.mxu0
    %v4669 = vadd.f32 %v4620, %v4668
    %v4670 = vpop.f32.mrf.mxu0
    %v4671 = vadd.f32 %v4622, %v4670
    %4672 = vmatmul.bf16.gmra.mxu0 %v1208
    %v4673 = vpop.f32.mrf.mxu0
    %v4674 = vadd.f32 %v4625, %v4673
    %v4675 = vpop.f32.mrf.mxu0
    %v4676 = vadd.f32 %v4627, %v4675
    %4677 = vmatmul.bf16.gmra.mxu0 %v1230
    %v4678 = vpop.f32.mrf.mxu0
    %v4679 = vadd.f32 %v4630, %v4678
    %v4680 = vpop.f32.mrf.mxu0
    %v4681 = vadd.f32 %v4632, %v4680
    %4682 = vmatmul.bf16.gmra.mxu0 %v1252
    %v4683 = vpop.f32.mrf.mxu0
    %v4684 = vadd.f32 %v4635, %v4683
    %v4685 = vpop.f32.mrf.mxu0
    %v4686 = vadd.f32 %v4637, %v4685
    %4687 = vdwg.mxu0
    %4688 = vmatpush.bf16.msra.mxu0 %v2619
    %4689 = vmatpush.bf16.msra.mxu0 %v2617
    %4690 = vmatpush.bf16.msra.mxu0 %v2615
    %4691 = vmatpush.bf16.msra.mxu0 %v2613
    %4692 = vmatpush.bf16.msra.mxu0 %v2611
    %4693 = vmatpush.bf16.msra.mxu0 %v2609
    %4694 = vmatpush.bf16.msra.mxu0 %v2607
    %4695 = vmatpush.bf16.msra.mxu0 %v2605
    %4696 = vmatmul.bf16.gmra.mxu0 %v1099
    %v4697 = vpop.f32.mrf.mxu0
    %v4698 = vadd.f32 %v4649, %v4697
    %v4699 = vpop.f32.mrf.mxu0
    %v4700 = vadd.f32 %v4651, %v4699
    %4701 = vmatmul.bf16.gmra.mxu0 %v1121
    %v4702 = vpop.f32.mrf.mxu0
    %v4703 = vadd.f32 %v4654, %v4702
    %v4704 = vpop.f32.mrf.mxu0
    %v4705 = vadd.f32 %v4656, %v4704
    %4706 = vmatmul.bf16.gmra.mxu0 %v1143
    %v4707 = vpop.f32.mrf.mxu0
    %v4708 = vadd.f32 %v4659, %v4707
    %v4709 = vpop.f32.mrf.mxu0
    %v4710 = vadd.f32 %v4661, %v4709
    %4711 = vmatmul.bf16.gmra.mxu0 %v1165
    %v4712 = vpop.f32.mrf.mxu0
    %v4713 = vadd.f32 %v4664, %v4712
    %v4714 = vpop.f32.mrf.mxu0
    %v4715 = vadd.f32 %v4666, %v4714
    %4716 = vmatmul.bf16.gmra.mxu0 %v1187
    %v4717 = vpop.f32.mrf.mxu0
    %v4718 = vadd.f32 %v4669, %v4717
    %v4719 = vpop.f32.mrf.mxu0
    %v4720 = vadd.f32 %v4671, %v4719
    %4721 = vmatmul.bf16.gmra.mxu0 %v1209
    %v4722 = vpop.f32.mrf.mxu0
    %v4723 = vadd.f32 %v4674, %v4722
    %v4724 = vpop.f32.mrf.mxu0
    %v4725 = vadd.f32 %v4676, %v4724
    %4726 = vmatmul.bf16.gmra.mxu0 %v1231
    %v4727 = vpop.f32.mrf.mxu0
    %v4728 = vadd.f32 %v4679, %v4727
    %v4729 = vpop.f32.mrf.mxu0
    %v4730 = vadd.f32 %v4681, %v4729
    %4731 = vmatmul.bf16.gmra.mxu0 %v1253
    %v4732 = vpop.f32.mrf.mxu0
    %v4733 = vadd.f32 %v4684, %v4732
    %v4734 = vpop.f32.mrf.mxu0
    %v4735 = vadd.f32 %v4686, %v4734
    %4736 = vdwg.mxu0
    %4737 = vmatpush.bf16.msra.mxu0 %v2635
    %4738 = vmatpush.bf16.msra.mxu0 %v2633
    %4739 = vmatpush.bf16.msra.mxu0 %v2631
    %4740 = vmatpush.bf16.msra.mxu0 %v2629
    %4741 = vmatpush.bf16.msra.mxu0 %v2627
    %4742 = vmatpush.bf16.msra.mxu0 %v2625
    %4743 = vmatpush.bf16.msra.mxu0 %v2623
    %4744 = vmatpush.bf16.msra.mxu0 %v2621
    %4745 = vmatmul.bf16.gmra.mxu0 %v1100
    %v4746 = vpop.f32.mrf.mxu0
    %v4747 = vadd.f32 %v4698, %v4746
    %v4748 = vpop.f32.mrf.mxu0
    %v4749 = vadd.f32 %v4700, %v4748
    %4750 = vmatmul.bf16.gmra.mxu0 %v1122
    %v4751 = vpop.f32.mrf.mxu0
    %v4752 = vadd.f32 %v4703, %v4751
    %v4753 = vpop.f32.mrf.mxu0
    %v4754 = vadd.f32 %v4705, %v4753
    %4755 = vmatmul.bf16.gmra.mxu0 %v1144
    %v4756 = vpop.f32.mrf.mxu0
    %v4757 = vadd.f32 %v4708, %v4756
    %v4758 = vpop.f32.mrf.mxu0
    %v4759 = vadd.f32 %v4710, %v4758
    %4760 = vmatmul.bf16.gmra.mxu0 %v1166
    %v4761 = vpop.f32.mrf.mxu0
    %v4762 = vadd.f32 %v4713, %v4761
    %v4763 = vpop.f32.mrf.mxu0
    %v4764 = vadd.f32 %v4715, %v4763
    %4765 = vmatmul.bf16.gmra.mxu0 %v1188
    %v4766 = vpop.f32.mrf.mxu0
    %v4767 = vadd.f32 %v4718, %v4766
    %v4768 = vpop.f32.mrf.mxu0
    %v4769 = vadd.f32 %v4720, %v4768
    %4770 = vmatmul.bf16.gmra.mxu0 %v1210
    %v4771 = vpop.f32.mrf.mxu0
    %v4772 = vadd.f32 %v4723, %v4771
    %v4773 = vpop.f32.mrf.mxu0
    %v4774 = vadd.f32 %v4725, %v4773
    %4775 = vmatmul.bf16.gmra.mxu0 %v1232
    %v4776 = vpop.f32.mrf.mxu0
    %v4777 = vadd.f32 %v4728, %v4776
    %v4778 = vpop.f32.mrf.mxu0
    %v4779 = vadd.f32 %v4730, %v4778
    %4780 = vmatmul.bf16.gmra.mxu0 %v1254
    %v4781 = vpop.f32.mrf.mxu0
    %v4782 = vadd.f32 %v4733, %v4781
    %v4783 = vpop.f32.mrf.mxu0
    %v4784 = vadd.f32 %v4735, %v4783
    %4785 = vdwg.mxu0
    %4786 = vmatpush.bf16.msra.mxu0 %v2651
    %4787 = vmatpush.bf16.msra.mxu0 %v2649
    %4788 = vmatpush.bf16.msra.mxu0 %v2647
    %4789 = vmatpush.bf16.msra.mxu0 %v2645
    %4790 = vmatpush.bf16.msra.mxu0 %v2643
    %4791 = vmatpush.bf16.msra.mxu0 %v2641
    %4792 = vmatpush.bf16.msra.mxu0 %v2639
    %4793 = vmatpush.bf16.msra.mxu0 %v2637
    %4794 = vmatmul.bf16.gmra.mxu0 %v1101
    %v4795 = vpop.f32.mrf.mxu0
    %v4796 = vadd.f32 %v4747, %v4795
    %v4797 = vpop.f32.mrf.mxu0
    %v4798 = vadd.f32 %v4749, %v4797
    %4799 = vmatmul.bf16.gmra.mxu0 %v1123
    %v4800 = vpop.f32.mrf.mxu0
    %v4801 = vadd.f32 %v4752, %v4800
    %v4802 = vpop.f32.mrf.mxu0
    %v4803 = vadd.f32 %v4754, %v4802
    %4804 = vmatmul.bf16.gmra.mxu0 %v1145
    %v4805 = vpop.f32.mrf.mxu0
    %v4806 = vadd.f32 %v4757, %v4805
    %v4807 = vpop.f32.mrf.mxu0
    %v4808 = vadd.f32 %v4759, %v4807
    %4809 = vmatmul.bf16.gmra.mxu0 %v1167
    %v4810 = vpop.f32.mrf.mxu0
    %v4811 = vadd.f32 %v4762, %v4810
    %v4812 = vpop.f32.mrf.mxu0
    %v4813 = vadd.f32 %v4764, %v4812
    %4814 = vmatmul.bf16.gmra.mxu0 %v1189
    %v4815 = vpop.f32.mrf.mxu0
    %v4816 = vadd.f32 %v4767, %v4815
    %v4817 = vpop.f32.mrf.mxu0
    %v4818 = vadd.f32 %v4769, %v4817
    %4819 = vmatmul.bf16.gmra.mxu0 %v1211
    %v4820 = vpop.f32.mrf.mxu0
    %v4821 = vadd.f32 %v4772, %v4820
    %v4822 = vpop.f32.mrf.mxu0
    %v4823 = vadd.f32 %v4774, %v4822
    %4824 = vmatmul.bf16.gmra.mxu0 %v1233
    %v4825 = vpop.f32.mrf.mxu0
    %v4826 = vadd.f32 %v4777, %v4825
    %v4827 = vpop.f32.mrf.mxu0
    %v4828 = vadd.f32 %v4779, %v4827
    %4829 = vmatmul.bf16.gmra.mxu0 %v1255
    %v4830 = vpop.f32.mrf.mxu0
    %v4831 = vadd.f32 %v4782, %v4830
    %v4832 = vpop.f32.mrf.mxu0
    %v4833 = vadd.f32 %v4784, %v4832
    %4834 = vdwg.mxu0
    %4835 = vmatpush.bf16.msra.mxu0 %v2667
    %4836 = vmatpush.bf16.msra.mxu0 %v2665
    %4837 = vmatpush.bf16.msra.mxu0 %v2663
    %4838 = vmatpush.bf16.msra.mxu0 %v2661
    %4839 = vmatpush.bf16.msra.mxu0 %v2659
    %4840 = vmatpush.bf16.msra.mxu0 %v2657
    %4841 = vmatpush.bf16.msra.mxu0 %v2655
    %4842 = vmatpush.bf16.msra.mxu0 %v2653
    %4843 = vmatmul.bf16.gmra.mxu0 %v1102
    %v4844 = vpop.f32.mrf.mxu0
    %v4845 = vadd.f32 %v4796, %v4844
    %v4846 = vpop.f32.mrf.mxu0
    %v4847 = vadd.f32 %v4798, %v4846
    %4848 = vmatmul.bf16.gmra.mxu0 %v1124
    %v4849 = vpop.f32.mrf.mxu0
    %v4850 = vadd.f32 %v4801, %v4849
    %v4851 = vpop.f32.mrf.mxu0
    %v4852 = vadd.f32 %v4803, %v4851
    %4853 = vmatmul.bf16.gmra.mxu0 %v1146
    %v4854 = vpop.f32.mrf.mxu0
    %v4855 = vadd.f32 %v4806, %v4854
    %v4856 = vpop.f32.mrf.mxu0
    %v4857 = vadd.f32 %v4808, %v4856
    %4858 = vmatmul.bf16.gmra.mxu0 %v1168
    %v4859 = vpop.f32.mrf.mxu0
    %v4860 = vadd.f32 %v4811, %v4859
    %v4861 = vpop.f32.mrf.mxu0
    %v4862 = vadd.f32 %v4813, %v4861
    %4863 = vmatmul.bf16.gmra.mxu0 %v1190
    %v4864 = vpop.f32.mrf.mxu0
    %v4865 = vadd.f32 %v4816, %v4864
    %v4866 = vpop.f32.mrf.mxu0
    %v4867 = vadd.f32 %v4818, %v4866
    %4868 = vmatmul.bf16.gmra.mxu0 %v1212
    %v4869 = vpop.f32.mrf.mxu0
    %v4870 = vadd.f32 %v4821, %v4869
    %v4871 = vpop.f32.mrf.mxu0
    %v4872 = vadd.f32 %v4823, %v4871
    %4873 = vmatmul.bf16.gmra.mxu0 %v1234
    %v4874 = vpop.f32.mrf.mxu0
    %v4875 = vadd.f32 %v4826, %v4874
    %v4876 = vpop.f32.mrf.mxu0
    %v4877 = vadd.f32 %v4828, %v4876
    %4878 = vmatmul.bf16.gmra.mxu0 %v1256
    %v4879 = vpop.f32.mrf.mxu0
    %v4880 = vadd.f32 %v4831, %v4879
    %v4881 = vpop.f32.mrf.mxu0
    %v4882 = vadd.f32 %v4833, %v4881
    %4883 = vdwg.mxu0
    %4884 = vmatpush.bf16.msra.mxu0 %v2683
    %4885 = vmatpush.bf16.msra.mxu0 %v2681
    %4886 = vmatpush.bf16.msra.mxu0 %v2679
    %4887 = vmatpush.bf16.msra.mxu0 %v2677
    %4888 = vmatpush.bf16.msra.mxu0 %v2675
    %4889 = vmatpush.bf16.msra.mxu0 %v2673
    %4890 = vmatpush.bf16.msra.mxu0 %v2671
    %4891 = vmatpush.bf16.msra.mxu0 %v2669
    %4892 = vmatmul.bf16.gmra.mxu0 %v1103
    %v4893 = vpop.f32.mrf.mxu0
    %v4894 = vadd.f32 %v4845, %v4893
    %v4895 = vpop.f32.mrf.mxu0
    %v4896 = vadd.f32 %v4847, %v4895
    %4897 = vmatmul.bf16.gmra.mxu0 %v1125
    %v4898 = vpop.f32.mrf.mxu0
    %v4899 = vadd.f32 %v4850, %v4898
    %v4900 = vpop.f32.mrf.mxu0
    %v4901 = vadd.f32 %v4852, %v4900
    %4902 = vmatmul.bf16.gmra.mxu0 %v1147
    %v4903 = vpop.f32.mrf.mxu0
    %v4904 = vadd.f32 %v4855, %v4903
    %v4905 = vpop.f32.mrf.mxu0
    %v4906 = vadd.f32 %v4857, %v4905
    %4907 = vmatmul.bf16.gmra.mxu0 %v1169
    %v4908 = vpop.f32.mrf.mxu0
    %v4909 = vadd.f32 %v4860, %v4908
    %v4910 = vpop.f32.mrf.mxu0
    %v4911 = vadd.f32 %v4862, %v4910
    %4912 = vmatmul.bf16.gmra.mxu0 %v1191
    %v4913 = vpop.f32.mrf.mxu0
    %v4914 = vadd.f32 %v4865, %v4913
    %v4915 = vpop.f32.mrf.mxu0
    %v4916 = vadd.f32 %v4867, %v4915
    %4917 = vmatmul.bf16.gmra.mxu0 %v1213
    %v4918 = vpop.f32.mrf.mxu0
    %v4919 = vadd.f32 %v4870, %v4918
    %v4920 = vpop.f32.mrf.mxu0
    %v4921 = vadd.f32 %v4872, %v4920
    %4922 = vmatmul.bf16.gmra.mxu0 %v1235
    %v4923 = vpop.f32.mrf.mxu0
    %v4924 = vadd.f32 %v4875, %v4923
    %v4925 = vpop.f32.mrf.mxu0
    %v4926 = vadd.f32 %v4877, %v4925
    %4927 = vmatmul.bf16.gmra.mxu0 %v1257
    %v4928 = vpop.f32.mrf.mxu0
    %v4929 = vadd.f32 %v4880, %v4928
    %v4930 = vpop.f32.mrf.mxu0
    %v4931 = vadd.f32 %v4882, %v4930
    %4932 = vdwg.mxu0
    %4933 = vmatpush.bf16.msra.mxu0 %v2699
    %4934 = vmatpush.bf16.msra.mxu0 %v2697
    %4935 = vmatpush.bf16.msra.mxu0 %v2695
    %4936 = vmatpush.bf16.msra.mxu0 %v2693
    %4937 = vmatpush.bf16.msra.mxu0 %v2691
    %4938 = vmatpush.bf16.msra.mxu0 %v2689
    %4939 = vmatpush.bf16.msra.mxu0 %v2687
    %4940 = vmatpush.bf16.msra.mxu0 %v2685
    %4941 = vmatmul.bf16.gmra.mxu0 %v1104
    %v4942 = vpop.f32.mrf.mxu0
    %v4943 = vadd.f32 %v4894, %v4942
    %v4944 = vpop.f32.mrf.mxu0
    %v4945 = vadd.f32 %v4896, %v4944
    %4946 = vmatmul.bf16.gmra.mxu0 %v1126
    %v4947 = vpop.f32.mrf.mxu0
    %v4948 = vadd.f32 %v4899, %v4947
    %v4949 = vpop.f32.mrf.mxu0
    %v4950 = vadd.f32 %v4901, %v4949
    %4951 = vmatmul.bf16.gmra.mxu0 %v1148
    %v4952 = vpop.f32.mrf.mxu0
    %v4953 = vadd.f32 %v4904, %v4952
    %v4954 = vpop.f32.mrf.mxu0
    %v4955 = vadd.f32 %v4906, %v4954
    %4956 = vmatmul.bf16.gmra.mxu0 %v1170
    %v4957 = vpop.f32.mrf.mxu0
    %v4958 = vadd.f32 %v4909, %v4957
    %v4959 = vpop.f32.mrf.mxu0
    %v4960 = vadd.f32 %v4911, %v4959
    %4961 = vmatmul.bf16.gmra.mxu0 %v1192
    %v4962 = vpop.f32.mrf.mxu0
    %v4963 = vadd.f32 %v4914, %v4962
    %v4964 = vpop.f32.mrf.mxu0
    %v4965 = vadd.f32 %v4916, %v4964
    %4966 = vmatmul.bf16.gmra.mxu0 %v1214
    %v4967 = vpop.f32.mrf.mxu0
    %v4968 = vadd.f32 %v4919, %v4967
    %v4969 = vpop.f32.mrf.mxu0
    %v4970 = vadd.f32 %v4921, %v4969
    %4971 = vmatmul.bf16.gmra.mxu0 %v1236
    %v4972 = vpop.f32.mrf.mxu0
    %v4973 = vadd.f32 %v4924, %v4972
    %v4974 = vpop.f32.mrf.mxu0
    %v4975 = vadd.f32 %v4926, %v4974
    %4976 = vmatmul.bf16.gmra.mxu0 %v1258
    %v4977 = vpop.f32.mrf.mxu0
    %v4978 = vadd.f32 %v4929, %v4977
    %v4979 = vpop.f32.mrf.mxu0
    %v4980 = vadd.f32 %v4931, %v4979
    %4981 = vdwg.mxu0
    %4982 = vmatpush.bf16.msra.mxu0 %v2715
    %4983 = vmatpush.bf16.msra.mxu0 %v2713
    %4984 = vmatpush.bf16.msra.mxu0 %v2711
    %4985 = vmatpush.bf16.msra.mxu0 %v2709
    %4986 = vmatpush.bf16.msra.mxu0 %v2707
    %4987 = vmatpush.bf16.msra.mxu0 %v2705
    %4988 = vmatpush.bf16.msra.mxu0 %v2703
    %4989 = vmatpush.bf16.msra.mxu0 %v2701
    %4990 = vmatmul.bf16.gmra.mxu0 %v1105
    %v4991 = vpop.f32.mrf.mxu0
    %v4992 = vadd.f32 %v4943, %v4991
    %v4993 = vpop.f32.mrf.mxu0
    %v4994 = vadd.f32 %v4945, %v4993
    %4995 = vmatmul.bf16.gmra.mxu0 %v1127
    %v4996 = vpop.f32.mrf.mxu0
    %v4997 = vadd.f32 %v4948, %v4996
    %v4998 = vpop.f32.mrf.mxu0
    %v4999 = vadd.f32 %v4950, %v4998
    %5000 = vmatmul.bf16.gmra.mxu0 %v1149
    %v5001 = vpop.f32.mrf.mxu0
    %v5002 = vadd.f32 %v4953, %v5001
    %v5003 = vpop.f32.mrf.mxu0
    %v5004 = vadd.f32 %v4955, %v5003
    %5005 = vmatmul.bf16.gmra.mxu0 %v1171
    %v5006 = vpop.f32.mrf.mxu0
    %v5007 = vadd.f32 %v4958, %v5006
    %v5008 = vpop.f32.mrf.mxu0
    %v5009 = vadd.f32 %v4960, %v5008
    %5010 = vmatmul.bf16.gmra.mxu0 %v1193
    %v5011 = vpop.f32.mrf.mxu0
    %v5012 = vadd.f32 %v4963, %v5011
    %v5013 = vpop.f32.mrf.mxu0
    %v5014 = vadd.f32 %v4965, %v5013
    %5015 = vmatmul.bf16.gmra.mxu0 %v1215
    %v5016 = vpop.f32.mrf.mxu0
    %v5017 = vadd.f32 %v4968, %v5016
    %v5018 = vpop.f32.mrf.mxu0
    %v5019 = vadd.f32 %v4970, %v5018
    %5020 = vmatmul.bf16.gmra.mxu0 %v1237
    %v5021 = vpop.f32.mrf.mxu0
    %v5022 = vadd.f32 %v4973, %v5021
    %v5023 = vpop.f32.mrf.mxu0
    %v5024 = vadd.f32 %v4975, %v5023
    %5025 = vmatmul.bf16.gmra.mxu0 %v1259
    %v5026 = vpop.f32.mrf.mxu0
    %v5027 = vadd.f32 %v4978, %v5026
    %v5028 = vpop.f32.mrf.mxu0
    %v5029 = vadd.f32 %v4980, %v5028
    %5030 = vdwg.mxu0
    %5031 = vmatpush.bf16.msra.mxu0 %v2731
    %5032 = vmatpush.bf16.msra.mxu0 %v2729
    %5033 = vmatpush.bf16.msra.mxu0 %v2727
    %5034 = vmatpush.bf16.msra.mxu0 %v2725
    %5035 = vmatpush.bf16.msra.mxu0 %v2723
    %5036 = vmatpush.bf16.msra.mxu0 %v2721
    %5037 = vmatpush.bf16.msra.mxu0 %v2719
    %5038 = vmatpush.bf16.msra.mxu0 %v2717
    %5039 = vmatmul.bf16.gmra.mxu0 %v1106
    %v5040 = vpop.f32.mrf.mxu0
    %v5041 = vadd.f32 %v4992, %v5040
    %v5042 = vpop.f32.mrf.mxu0
    %v5043 = vadd.f32 %v4994, %v5042
    %5044 = vmatmul.bf16.gmra.mxu0 %v1128
    %v5045 = vpop.f32.mrf.mxu0
    %v5046 = vadd.f32 %v4997, %v5045
    %v5047 = vpop.f32.mrf.mxu0
    %v5048 = vadd.f32 %v4999, %v5047
    %5049 = vmatmul.bf16.gmra.mxu0 %v1150
    %v5050 = vpop.f32.mrf.mxu0
    %v5051 = vadd.f32 %v5002, %v5050
    %v5052 = vpop.f32.mrf.mxu0
    %v5053 = vadd.f32 %v5004, %v5052
    %5054 = vmatmul.bf16.gmra.mxu0 %v1172
    %v5055 = vpop.f32.mrf.mxu0
    %v5056 = vadd.f32 %v5007, %v5055
    %v5057 = vpop.f32.mrf.mxu0
    %v5058 = vadd.f32 %v5009, %v5057
    %5059 = vmatmul.bf16.gmra.mxu0 %v1194
    %v5060 = vpop.f32.mrf.mxu0
    %v5061 = vadd.f32 %v5012, %v5060
    %v5062 = vpop.f32.mrf.mxu0
    %v5063 = vadd.f32 %v5014, %v5062
    %5064 = vmatmul.bf16.gmra.mxu0 %v1216
    %v5065 = vpop.f32.mrf.mxu0
    %v5066 = vadd.f32 %v5017, %v5065
    %v5067 = vpop.f32.mrf.mxu0
    %v5068 = vadd.f32 %v5019, %v5067
    %5069 = vmatmul.bf16.gmra.mxu0 %v1238
    %v5070 = vpop.f32.mrf.mxu0
    %v5071 = vadd.f32 %v5022, %v5070
    %v5072 = vpop.f32.mrf.mxu0
    %v5073 = vadd.f32 %v5024, %v5072
    %5074 = vmatmul.bf16.gmra.mxu0 %v1260
    %v5075 = vpop.f32.mrf.mxu0
    %v5076 = vadd.f32 %v5027, %v5075
    %v5077 = vpop.f32.mrf.mxu0
    %v5078 = vadd.f32 %v5029, %v5077
    %5079 = vdwg.mxu0
    %5080 = vmatpush.bf16.msra.mxu0 %v2747
    %5081 = vmatpush.bf16.msra.mxu0 %v2745
    %5082 = vmatpush.bf16.msra.mxu0 %v2743
    %5083 = vmatpush.bf16.msra.mxu0 %v2741
    %5084 = vmatpush.bf16.msra.mxu0 %v2739
    %5085 = vmatpush.bf16.msra.mxu0 %v2737
    %5086 = vmatpush.bf16.msra.mxu0 %v2735
    %5087 = vmatpush.bf16.msra.mxu0 %v2733
    %5088 = vmatmul.bf16.gmra.mxu0 %v1107
    %v5089 = vpop.f32.mrf.mxu0
    %v5090 = vadd.f32 %v5041, %v5089
    %v5091 = vpop.f32.mrf.mxu0
    %v5092 = vadd.f32 %v5043, %v5091
    %5093 = vmatmul.bf16.gmra.mxu0 %v1129
    %v5094 = vpop.f32.mrf.mxu0
    %v5095 = vadd.f32 %v5046, %v5094
    %v5096 = vpop.f32.mrf.mxu0
    %v5097 = vadd.f32 %v5048, %v5096
    %5098 = vmatmul.bf16.gmra.mxu0 %v1151
    %v5099 = vpop.f32.mrf.mxu0
    %v5100 = vadd.f32 %v5051, %v5099
    %v5101 = vpop.f32.mrf.mxu0
    %v5102 = vadd.f32 %v5053, %v5101
    %5103 = vmatmul.bf16.gmra.mxu0 %v1173
    %v5104 = vpop.f32.mrf.mxu0
    %v5105 = vadd.f32 %v5056, %v5104
    %v5106 = vpop.f32.mrf.mxu0
    %v5107 = vadd.f32 %v5058, %v5106
    %5108 = vmatmul.bf16.gmra.mxu0 %v1195
    %v5109 = vpop.f32.mrf.mxu0
    %v5110 = vadd.f32 %v5061, %v5109
    %v5111 = vpop.f32.mrf.mxu0
    %v5112 = vadd.f32 %v5063, %v5111
    %5113 = vmatmul.bf16.gmra.mxu0 %v1217
    %v5114 = vpop.f32.mrf.mxu0
    %v5115 = vadd.f32 %v5066, %v5114
    %v5116 = vpop.f32.mrf.mxu0
    %v5117 = vadd.f32 %v5068, %v5116
    %5118 = vmatmul.bf16.gmra.mxu0 %v1239
    %v5119 = vpop.f32.mrf.mxu0
    %v5120 = vadd.f32 %v5071, %v5119
    %v5121 = vpop.f32.mrf.mxu0
    %v5122 = vadd.f32 %v5073, %v5121
    %5123 = vmatmul.bf16.gmra.mxu0 %v1261
    %v5124 = vpop.f32.mrf.mxu0
    %v5125 = vadd.f32 %v5076, %v5124
    %v5126 = vpop.f32.mrf.mxu0
    %v5127 = vadd.f32 %v5078, %v5126
    %5128 = vdwg.mxu0
    %5129 = vmatpush.bf16.msra.mxu0 %v2763
    %5130 = vmatpush.bf16.msra.mxu0 %v2761
    %5131 = vmatpush.bf16.msra.mxu0 %v2759
    %5132 = vmatpush.bf16.msra.mxu0 %v2757
    %5133 = vmatpush.bf16.msra.mxu0 %v2755
    %5134 = vmatpush.bf16.msra.mxu0 %v2753
    %5135 = vmatpush.bf16.msra.mxu0 %v2751
    %5136 = vmatpush.bf16.msra.mxu0 %v2749
    %5137 = vmatmul.bf16.gmra.mxu0 %v1108
    %v5138 = vpop.f32.mrf.mxu0
    %v5139 = vadd.f32 %v5090, %v5138
    %v5140 = vpop.f32.mrf.mxu0
    %v5141 = vadd.f32 %v5092, %v5140
    %5142 = vmatmul.bf16.gmra.mxu0 %v1130
    %v5143 = vpop.f32.mrf.mxu0
    %v5144 = vadd.f32 %v5095, %v5143
    %v5145 = vpop.f32.mrf.mxu0
    %v5146 = vadd.f32 %v5097, %v5145
    %5147 = vmatmul.bf16.gmra.mxu0 %v1152
    %v5148 = vpop.f32.mrf.mxu0
    %v5149 = vadd.f32 %v5100, %v5148
    %v5150 = vpop.f32.mrf.mxu0
    %v5151 = vadd.f32 %v5102, %v5150
    %5152 = vmatmul.bf16.gmra.mxu0 %v1174
    %v5153 = vpop.f32.mrf.mxu0
    %v5154 = vadd.f32 %v5105, %v5153
    %v5155 = vpop.f32.mrf.mxu0
    %v5156 = vadd.f32 %v5107, %v5155
    %5157 = vmatmul.bf16.gmra.mxu0 %v1196
    %v5158 = vpop.f32.mrf.mxu0
    %v5159 = vadd.f32 %v5110, %v5158
    %v5160 = vpop.f32.mrf.mxu0
    %v5161 = vadd.f32 %v5112, %v5160
    %5162 = vmatmul.bf16.gmra.mxu0 %v1218
    %v5163 = vpop.f32.mrf.mxu0
    %v5164 = vadd.f32 %v5115, %v5163
    %v5165 = vpop.f32.mrf.mxu0
    %v5166 = vadd.f32 %v5117, %v5165
    %5167 = vmatmul.bf16.gmra.mxu0 %v1240
    %v5168 = vpop.f32.mrf.mxu0
    %v5169 = vadd.f32 %v5120, %v5168
    %v5170 = vpop.f32.mrf.mxu0
    %v5171 = vadd.f32 %v5122, %v5170
    %5172 = vmatmul.bf16.gmra.mxu0 %v1262
    %v5173 = vpop.f32.mrf.mxu0
    %v5174 = vadd.f32 %v5125, %v5173
    %v5175 = vpop.f32.mrf.mxu0
    %v5176 = vadd.f32 %v5127, %v5175
    %5177 = vdwg.mxu0
    %5178 = vmatpush.bf16.msra.mxu0 %v2779
    %5179 = vmatpush.bf16.msra.mxu0 %v2777
    %5180 = vmatpush.bf16.msra.mxu0 %v2775
    %5181 = vmatpush.bf16.msra.mxu0 %v2773
    %5182 = vmatpush.bf16.msra.mxu0 %v2771
    %5183 = vmatpush.bf16.msra.mxu0 %v2769
    %5184 = vmatpush.bf16.msra.mxu0 %v2767
    %5185 = vmatpush.bf16.msra.mxu0 %v2765
    %5186 = vmatmul.bf16.gmra.mxu0 %v1109
    %v5187 = vpop.f32.mrf.mxu0
    %v5188 = vadd.f32 %v5139, %v5187
    %v5189 = vpop.f32.mrf.mxu0
    %v5190 = vadd.f32 %v5141, %v5189
    %5191 = vmatmul.bf16.gmra.mxu0 %v1131
    %v5192 = vpop.f32.mrf.mxu0
    %v5193 = vadd.f32 %v5144, %v5192
    %v5194 = vpop.f32.mrf.mxu0
    %v5195 = vadd.f32 %v5146, %v5194
    %5196 = vmatmul.bf16.gmra.mxu0 %v1153
    %v5197 = vpop.f32.mrf.mxu0
    %v5198 = vadd.f32 %v5149, %v5197
    %v5199 = vpop.f32.mrf.mxu0
    %v5200 = vadd.f32 %v5151, %v5199
    %5201 = vmatmul.bf16.gmra.mxu0 %v1175
    %v5202 = vpop.f32.mrf.mxu0
    %v5203 = vadd.f32 %v5154, %v5202
    %v5204 = vpop.f32.mrf.mxu0
    %v5205 = vadd.f32 %v5156, %v5204
    %5206 = vmatmul.bf16.gmra.mxu0 %v1197
    %v5207 = vpop.f32.mrf.mxu0
    %v5208 = vadd.f32 %v5159, %v5207
    %v5209 = vpop.f32.mrf.mxu0
    %v5210 = vadd.f32 %v5161, %v5209
    %5211 = vmatmul.bf16.gmra.mxu0 %v1219
    %v5212 = vpop.f32.mrf.mxu0
    %v5213 = vadd.f32 %v5164, %v5212
    %v5214 = vpop.f32.mrf.mxu0
    %v5215 = vadd.f32 %v5166, %v5214
    %5216 = vmatmul.bf16.gmra.mxu0 %v1241
    %v5217 = vpop.f32.mrf.mxu0
    %v5218 = vadd.f32 %v5169, %v5217
    %v5219 = vpop.f32.mrf.mxu0
    %v5220 = vadd.f32 %v5171, %v5219
    %5221 = vmatmul.bf16.gmra.mxu0 %v1263
    %v5222 = vpop.f32.mrf.mxu0
    %v5223 = vadd.f32 %v5174, %v5222
    %v5224 = vpop.f32.mrf.mxu0
    %v5225 = vadd.f32 %v5176, %v5224
    %5226 = vdwg.mxu0
    %5227 = vmatpush.bf16.msra.mxu0 %v2795
    %5228 = vmatpush.bf16.msra.mxu0 %v2793
    %5229 = vmatpush.bf16.msra.mxu0 %v2791
    %5230 = vmatpush.bf16.msra.mxu0 %v2789
    %5231 = vmatpush.bf16.msra.mxu0 %v2787
    %5232 = vmatpush.bf16.msra.mxu0 %v2785
    %5233 = vmatpush.bf16.msra.mxu0 %v2783
    %5234 = vmatpush.bf16.msra.mxu0 %v2781
    %5235 = vmatmul.bf16.gmra.mxu0 %v1110
    %v5236 = vpop.f32.mrf.mxu0
    %v5237 = vadd.f32 %v5188, %v5236
    %v5238 = vpop.f32.mrf.mxu0
    %v5239 = vadd.f32 %v5190, %v5238
    %5240 = vmatmul.bf16.gmra.mxu0 %v1132
    %v5241 = vpop.f32.mrf.mxu0
    %v5242 = vadd.f32 %v5193, %v5241
    %v5243 = vpop.f32.mrf.mxu0
    %v5244 = vadd.f32 %v5195, %v5243
    %5245 = vmatmul.bf16.gmra.mxu0 %v1154
    %v5246 = vpop.f32.mrf.mxu0
    %v5247 = vadd.f32 %v5198, %v5246
    %v5248 = vpop.f32.mrf.mxu0
    %v5249 = vadd.f32 %v5200, %v5248
    %5250 = vmatmul.bf16.gmra.mxu0 %v1176
    %v5251 = vpop.f32.mrf.mxu0
    %v5252 = vadd.f32 %v5203, %v5251
    %v5253 = vpop.f32.mrf.mxu0
    %v5254 = vadd.f32 %v5205, %v5253
    %5255 = vmatmul.bf16.gmra.mxu0 %v1198
    %v5256 = vpop.f32.mrf.mxu0
    %v5257 = vadd.f32 %v5208, %v5256
    %v5258 = vpop.f32.mrf.mxu0
    %v5259 = vadd.f32 %v5210, %v5258
    %5260 = vmatmul.bf16.gmra.mxu0 %v1220
    %v5261 = vpop.f32.mrf.mxu0
    %v5262 = vadd.f32 %v5213, %v5261
    %v5263 = vpop.f32.mrf.mxu0
    %v5264 = vadd.f32 %v5215, %v5263
    %5265 = vmatmul.bf16.gmra.mxu0 %v1242
    %v5266 = vpop.f32.mrf.mxu0
    %v5267 = vadd.f32 %v5218, %v5266
    %v5268 = vpop.f32.mrf.mxu0
    %v5269 = vadd.f32 %v5220, %v5268
    %5270 = vmatmul.bf16.gmra.mxu0 %v1264
    %v5271 = vpop.f32.mrf.mxu0
    %v5272 = vadd.f32 %v5223, %v5271
    %v5273 = vpop.f32.mrf.mxu0
    %v5274 = vadd.f32 %v5225, %v5273
    %5275 = vdwg.mxu0
    %5276 = vmatpush.bf16.msra.mxu0 0
    %5277 = vmatpush.bf16.msra.mxu0 0
    %5278 = vmatpush.bf16.msra.mxu0 0
    %5279 = vmatpush.bf16.msra.mxu0 0
    %5280 = vmatpush.bf16.msra.mxu0 0
    %5281 = vmatpush.bf16.msra.mxu0 %v2801
    %5282 = vmatpush.bf16.msra.mxu0 %v2799
    %5283 = vmatpush.bf16.msra.mxu0 %v2797
    %5284 = vmatmul.bf16.gmra.mxu0 %v3146
    %v5285 = vpop.f32.mrf.mxu0
    %v5286 = vadd.f32 %v5237, %v5285
    %v5287 = vpop.f32.mrf.mxu0
    %v5288 = vadd.f32 %v5239, %v5287
    %5289 = vmatmul.bf16.gmra.mxu0 %v3149
    %v5290 = vpop.f32.mrf.mxu0
    %v5291 = vadd.f32 %v5242, %v5290
    %v5292 = vpop.f32.mrf.mxu0
    %v5293 = vadd.f32 %v5244, %v5292
    %5294 = vmatmul.bf16.gmra.mxu0 %v3152
    %v5295 = vpop.f32.mrf.mxu0
    %v5296 = vadd.f32 %v5247, %v5295
    %v5297 = vpop.f32.mrf.mxu0
    %v5298 = vadd.f32 %v5249, %v5297
    %5299 = vmatmul.bf16.gmra.mxu0 %v3155
    %v5300 = vpop.f32.mrf.mxu0
    %v5301 = vadd.f32 %v5252, %v5300
    %v5302 = vpop.f32.mrf.mxu0
    %v5303 = vadd.f32 %v5254, %v5302
    %5304 = vmatmul.bf16.gmra.mxu0 %v3158
    %v5305 = vpop.f32.mrf.mxu0
    %v5306 = vadd.f32 %v5257, %v5305
    %v5307 = vpop.f32.mrf.mxu0
    %v5308 = vadd.f32 %v5259, %v5307
    %5309 = vmatmul.bf16.gmra.mxu0 %v3161
    %v5310 = vpop.f32.mrf.mxu0
    %v5311 = vadd.f32 %v5262, %v5310
    %v5312 = vpop.f32.mrf.mxu0
    %v5313 = vadd.f32 %v5264, %v5312
    %5314 = vmatmul.bf16.gmra.mxu0 %v3164
    %v5315 = vpop.f32.mrf.mxu0
    %v5316 = vadd.f32 %v5267, %v5315
    %v5317 = vpop.f32.mrf.mxu0
    %v5318 = vadd.f32 %v5269, %v5317
    %5319 = vmatmul.bf16.gmra.mxu0 %v3167
    %v5320 = vpop.f32.mrf.mxu0
    %v5321 = vadd.f32 %v5272, %v5320
    %v5322 = vpop.f32.mrf.mxu0
    %v5323 = vadd.f32 %v5274, %v5322
    %5324 = vdwg.mxu0
    %v5325 = vmax.f32 %v4208, 0.0
    %v5326 = vmax.f32 %v5286, 0.0
    %v5327 = vmax.f32 %v4210, 0.0
    %v5328 = vmax.f32 %v5288, 0.0
    %v5329 = vmax.f32 %v4213, 0.0
    %v5330 = vmax.f32 %v5291, 0.0
    %v5331 = vmax.f32 %v4215, 0.0
    %v5332 = vmax.f32 %v5293, 0.0
    %v5333 = vmax.f32 %v4218, 0.0
    %v5334 = vmax.f32 %v5296, 0.0
    %v5335 = vmax.f32 %v4220, 0.0
    %v5336 = vmax.f32 %v5298, 0.0
    %v5337 = vmax.f32 %v4223, 0.0
    %v5338 = vmax.f32 %v5301, 0.0
    %v5339 = vmax.f32 %v4225, 0.0
    %v5340 = vmax.f32 %v5303, 0.0
    %v5341 = vmax.f32 %v4228, 0.0
    %v5342 = vmax.f32 %v5306, 0.0
    %v5343 = vmax.f32 %v4230, 0.0
    %v5344 = vmax.f32 %v5308, 0.0
    %v5345 = vmax.f32 %v4233, 0.0
    %v5346 = vmax.f32 %v5311, 0.0
    %v5347 = vmax.f32 %v4235, 0.0
    %v5348 = vmax.f32 %v5313, 0.0
    %v5349 = vmax.f32 %v4238, 0.0
    %v5350 = vmax.f32 %v5316, 0.0
    %v5351 = vmax.f32 %v4240, 0.0
    %v5352 = vmax.f32 %v5318, 0.0
    %v5353 = vmax.f32 %v4243, 0.0
    %v5354 = vmax.f32 %v5321, 0.0
    %v5355 = vmax.f32 %v4245, 0.0
    %v5356 = vmax.f32 %v5323, 0.0
    %v5357 = vld [vmem:[#allocation2] sm:$0xff]
    %v5358 = vld [vmem:[#allocation2 + $0x8] sm:$0xff]
    %v5359 = vld [vmem:[#allocation2 + $0x10] sm:$0xff]
    %v5360 = vld [vmem:[#allocation2 + $0x18] sm:$0xff]
    %v5361 = vld [vmem:[#allocation2 + $0x20] sm:$0xff]
    %v5362 = vld [vmem:[#allocation2 + $0x28] sm:$0xff]
    %v5363 = vld [vmem:[#allocation2 + $0x30] sm:$0xff]
    %v5364 = vld [vmem:[#allocation2 + $0x38] sm:$0xff]
    %v5365 = vld [vmem:[#allocation2 + $0x40] sm:$0xff]
    %v5366 = vld [vmem:[#allocation2 + $0x48] sm:$0xff]
    %v5367 = vld [vmem:[#allocation2 + $0x50] sm:$0xff]
    %v5368 = vld [vmem:[#allocation2 + $0x58] sm:$0xff]
    %v5369 = vld [vmem:[#allocation2 + $0x60] sm:$0xff]
    %v5370 = vld [vmem:[#allocation2 + $0x68] sm:$0xff]
    %v5371 = vld [vmem:[#allocation2 + $0x70] sm:$0xff]
    %v5372 = vld [vmem:[#allocation2 + $0x78] sm:$0xff]
    %v5373 = vld [vmem:[#allocation2 + $0x80] sm:$0xff]
    %v5374 = vld [vmem:[#allocation2 + $0x88] sm:$0xff]
    %v5375 = vld [vmem:[#allocation2 + $0x90] sm:$0xff]
    %v5376 = vld [vmem:[#allocation2 + $0x98] sm:$0xff]
    %v5377 = vld [vmem:[#allocation2 + $0xa0] sm:$0xff]
    %v5378 = vld [vmem:[#allocation2 + $0xa8] sm:$0xff]
    %v5379 = vld [vmem:[#allocation2 + $0xb0] sm:$0xff]
    %v5380 = vld [vmem:[#allocation2 + $0xb8] sm:$0xff]
    %v5381 = vld [vmem:[#allocation2 + $0xc0] sm:$0xff]
    %v5382 = vld [vmem:[#allocation2 + $0xc8] sm:$0xff]
    %v5383 = vld [vmem:[#allocation2 + $0xd0] sm:$0xff]
    %v5384 = vld [vmem:[#allocation2 + $0xd8] sm:$0xff]
    %v5385 = vld [vmem:[#allocation2 + $0xe0] sm:$0xff]
    %v5386 = vld [vmem:[#allocation2 + $0xe8] sm:$0xff]
    %v5387 = vld [vmem:[#allocation2 + $0xf0] sm:$0xff]
    %v5388 = vld [vmem:[#allocation2 + $0xf8] sm:$0xff]
    %v5389 = vld [vmem:[%s4] sm:$0x1]
    %v5391 = vperm.slane %v5389, 0
    %5393 = vmatpush.msra.mxu0 %v5372
    %5394 = vmatpush.msra.mxu0 %v5371
    %5395 = vmatpush.msra.mxu0 %v5370
    %5396 = vmatpush.msra.mxu0 %v5369
    %5397 = vmatpush.msra.mxu0 %v5368
    %5398 = vmatpush.msra.mxu0 %v5367
    %5399 = vmatpush.msra.mxu0 %v5366
    %5400 = vmatpush.msra.mxu0 %v5365
    %5401 = vmatpush.msra.mxu0 %v5364
    %5402 = vmatpush.msra.mxu0 %v5363
    %5403 = vmatpush.msra.mxu0 %v5362
    %5404 = vmatpush.msra.mxu0 %v5361
    %5405 = vmatpush.msra.mxu0 %v5360
    %5406 = vmatpush.msra.mxu0 %v5359
    %5407 = vmatpush.msra.mxu0 %v5358
    %5408 = vmatpush.msra.mxu0 %v5357
    %5409 = vmatmul.f32.gmra.mxu0 %v5325
    %v5410 = vpop.f32.mrf.mxu0
    %v5411 = vadd.f32 %v5391, %v5410
    %5412 = vmatmul.f32.gmra.mxu0 %v5327
    %v5413 = vpop.f32.mrf.mxu0
    %v5414 = vadd.f32 %v5391, %v5413
    %5415 = vmatmul.f32.gmra.mxu0 %v5329
    %v5416 = vpop.f32.mrf.mxu0
    %v5417 = vadd.f32 %v5391, %v5416
    %5418 = vmatmul.f32.gmra.mxu0 %v5331
    %v5419 = vpop.f32.mrf.mxu0
    %v5420 = vadd.f32 %v5391, %v5419
    %5421 = vmatmul.f32.gmra.mxu0 %v5333
    %v5422 = vpop.f32.mrf.mxu0
    %v5423 = vadd.f32 %v5391, %v5422
    %5424 = vmatmul.f32.gmra.mxu0 %v5335
    %v5425 = vpop.f32.mrf.mxu0
    %v5426 = vadd.f32 %v5391, %v5425
    %5427 = vmatmul.f32.gmra.mxu0 %v5337
    %v5428 = vpop.f32.mrf.mxu0
    %v5429 = vadd.f32 %v5391, %v5428
    %5430 = vmatmul.f32.gmra.mxu0 %v5339
    %v5431 = vpop.f32.mrf.mxu0
    %v5432 = vadd.f32 %v5391, %v5431
    %5433 = vmatmul.f32.gmra.mxu0 %v5341
    %v5434 = vpop.f32.mrf.mxu0
    %v5435 = vadd.f32 %v5391, %v5434
    %5436 = vmatmul.f32.gmra.mxu0 %v5343
    %v5437 = vpop.f32.mrf.mxu0
    %v5438 = vadd.f32 %v5391, %v5437
    %5439 = vmatmul.f32.gmra.mxu0 %v5345
    %v5440 = vpop.f32.mrf.mxu0
    %v5441 = vadd.f32 %v5391, %v5440
    %5442 = vmatmul.f32.gmra.mxu0 %v5347
    %v5443 = vpop.f32.mrf.mxu0
    %v5444 = vadd.f32 %v5391, %v5443
    %5445 = vmatmul.f32.gmra.mxu0 %v5349
    %v5446 = vpop.f32.mrf.mxu0
    %v5447 = vadd.f32 %v5391, %v5446
    %5448 = vmatmul.f32.gmra.mxu0 %v5351
    %v5449 = vpop.f32.mrf.mxu0
    %v5450 = vadd.f32 %v5391, %v5449
    %5451 = vmatmul.f32.gmra.mxu0 %v5353
    %v5452 = vpop.f32.mrf.mxu0
    %v5453 = vadd.f32 %v5391, %v5452
    %5454 = vmatmul.f32.gmra.mxu0 %v5355
    %v5455 = vpop.f32.mrf.mxu0
    %v5456 = vadd.f32 %v5391, %v5455
    %5457 = vdwg.mxu0
    %5458 = vmatpush.msra.mxu0 %v5388
    %5459 = vmatpush.msra.mxu0 %v5387
    %5460 = vmatpush.msra.mxu0 %v5386
    %5461 = vmatpush.msra.mxu0 %v5385
    %5462 = vmatpush.msra.mxu0 %v5384
    %5463 = vmatpush.msra.mxu0 %v5383
    %5464 = vmatpush.msra.mxu0 %v5382
    %5465 = vmatpush.msra.mxu0 %v5381
    %5466 = vmatpush.msra.mxu0 %v5380
    %5467 = vmatpush.msra.mxu0 %v5379
    %5468 = vmatpush.msra.mxu0 %v5378
    %5469 = vmatpush.msra.mxu0 %v5377
    %5470 = vmatpush.msra.mxu0 %v5376
    %5471 = vmatpush.msra.mxu0 %v5375
    %5472 = vmatpush.msra.mxu0 %v5374
    %5473 = vmatpush.msra.mxu0 %v5373
    %5474 = vmatmul.f32.gmra.mxu0 %v5326
    %v5475 = vpop.f32.mrf.mxu0
    %v5476 = vadd.f32 %v5411, %v5475
    %5477 = vmatmul.f32.gmra.mxu0 %v5328
    %v5478 = vpop.f32.mrf.mxu0
    %v5479 = vadd.f32 %v5414, %v5478
    %5480 = vmatmul.f32.gmra.mxu0 %v5330
    %v5481 = vpop.f32.mrf.mxu0
    %v5482 = vadd.f32 %v5417, %v5481
    %5483 = vmatmul.f32.gmra.mxu0 %v5332
    %v5484 = vpop.f32.mrf.mxu0
    %v5485 = vadd.f32 %v5420, %v5484
    %5486 = vmatmul.f32.gmra.mxu0 %v5334
    %v5487 = vpop.f32.mrf.mxu0
    %v5488 = vadd.f32 %v5423, %v5487
    %5489 = vmatmul.f32.gmra.mxu0 %v5336
    %v5490 = vpop.f32.mrf.mxu0
    %v5491 = vadd.f32 %v5426, %v5490
    %5492 = vmatmul.f32.gmra.mxu0 %v5338
    %v5493 = vpop.f32.mrf.mxu0
    %v5494 = vadd.f32 %v5429, %v5493
    %5495 = vmatmul.f32.gmra.mxu0 %v5340
    %v5496 = vpop.f32.mrf.mxu0
    %v5497 = vadd.f32 %v5432, %v5496
    %5498 = vmatmul.f32.gmra.mxu0 %v5342
    %v5499 = vpop.f32.mrf.mxu0
    %v5500 = vadd.f32 %v5435, %v5499
    %5501 = vmatmul.f32.gmra.mxu0 %v5344
    %v5502 = vpop.f32.mrf.mxu0
    %v5503 = vadd.f32 %v5438, %v5502
    %5504 = vmatmul.f32.gmra.mxu0 %v5346
    %v5505 = vpop.f32.mrf.mxu0
    %v5506 = vadd.f32 %v5441, %v5505
    %5507 = vmatmul.f32.gmra.mxu0 %v5348
    %v5508 = vpop.f32.mrf.mxu0
    %v5509 = vadd.f32 %v5444, %v5508
    %5510 = vmatmul.f32.gmra.mxu0 %v5350
    %v5511 = vpop.f32.mrf.mxu0
    %v5512 = vadd.f32 %v5447, %v5511
    %5513 = vmatmul.f32.gmra.mxu0 %v5352
    %v5514 = vpop.f32.mrf.mxu0
    %v5515 = vadd.f32 %v5450, %v5514
    %5516 = vmatmul.f32.gmra.mxu0 %v5354
    %v5517 = vpop.f32.mrf.mxu0
    %v5518 = vadd.f32 %v5453, %v5517
    %5519 = vmatmul.f32.gmra.mxu0 %v5356
    %v5520 = vpop.f32.mrf.mxu0
    %v5521 = vadd.f32 %v5456, %v5520
    %5522 = vdwg.mxu0
    %5523 = vst [vmem:[#allocation5] sm:$0xff] %v5476
    %5524 = vst [vmem:[#allocation5 + $0x8] sm:$0xff] %v5479
    %5525 = vst [vmem:[#allocation5 + $0x10] sm:$0xff] %v5482
    %5526 = vst [vmem:[#allocation5 + $0x18] sm:$0xff] %v5485
    %5527 = vst [vmem:[#allocation5 + $0x20] sm:$0xff] %v5488
    %5528 = vst [vmem:[#allocation5 + $0x28] sm:$0xff] %v5491
    %5529 = vst [vmem:[#allocation5 + $0x30] sm:$0xff] %v5494
    %5530 = vst [vmem:[#allocation5 + $0x38] sm:$0xff] %v5497
    %5531 = vst [vmem:[#allocation5 + $0x40] sm:$0xff] %v5500
    %5532 = vst [vmem:[#allocation5 + $0x48] sm:$0xff] %v5503
    %5533 = vst [vmem:[#allocation5 + $0x50] sm:$0xff] %v5506
    %5534 = vst [vmem:[#allocation5 + $0x58] sm:$0xff] %v5509
    %5535 = vst [vmem:[#allocation5 + $0x60] sm:$0xff] %v5512
    %5536 = vst [vmem:[#allocation5 + $0x68] sm:$0xff] %v5515
    %5537 = vst [vmem:[#allocation5 + $0x70] sm:$0xff] %v5518
    %5538 = vst [vmem:[#allocation5 + $0x78] sm:$0xff] %v5521
    // Predicated region
    $region26: #{tpu_custom_call.1} parent=1 // pred_check
      _
    $region27: #{tpu_custom_call.1} parent=1 // pred_check_branch
      %5540 = sbr.rel (0) target = $region29
    $region28: #{tpu_custom_call.1} parent=1 // pred_region
      %5542 = vsyncadd [#allocation4], 0
      %s5543 = sshll.u32 [#allocation5], 4
      %s5544 = int_to_ptr.vmem [resolvable:$true] %s5543
      %s5545 = sshll.u32 %s5, 4
      %s5546 = int_to_ptr.hbm [resolvable:$true] %s5545
      %5551 = dma.vmem_to_hbm [thread:$0]  %s5544, 2048, %s5546, [#allocation4], 128, 128, 8
    $region29: #{tpu_custom_call.1} parent=1 // pred_fallthru
      _
    // Predicated region
    $region30: #{tpu_custom_call.1} parent=1 // pred_check
      _
    $region31: #{tpu_custom_call.1} parent=1 // pred_check_branch
      %5553 = sbr.rel (0) target = $region33
    $region32: #{tpu_custom_call.1} parent=1 // pred_region
      %5555 = dma.done [#allocation4], 2048
    $region33: #{tpu_custom_call.1} parent=1 // pred_fallthru
      _
    %5556 = vsyncpa [#allocation3], 1
    %5557 = vsyncpa [#allocation4], 1

</llo_original>
